<compile_context>
chip_gen: v6e
topology: v6e:2x2x1
jax: 0.10.0
libtpu: 0.0.40
codegen_flags: <defaults>
</compile_context>

<pallas_src>
import functools

import jax
import jax.numpy as jnp
from jax.experimental import pallas as pl
from jax.experimental.pallas import tpu as pltpu


CONFIG = dict(
    vocab_size=128,
    hidden_size=128,
    intermediate_size=256,
    num_hidden_layers=2,
    num_attention_heads=4,
    rms_norm_eps=1e-5,
    rope_theta=10000.0,
    classification_out_size=8,
    eos_token_id=2,
)


def _rotate_half_matrix(num_heads, head_dim):
    """Signed permutation P (H,H) such that (q @ P) == rotate_half(q) applied per head."""
    half = head_dim // 2
    zero = jnp.zeros((half, half), jnp.float32)
    eye = jnp.eye(half, dtype=jnp.float32)
    p = jnp.block([[zero, eye], [-eye, zero]])       # row-vector q: q @ p = [-q2, q1]
    return jnp.kron(jnp.eye(num_heads, dtype=jnp.float32), p)


# ---------------------------------------------------------------------------
# Fused transformer-stack kernel: grid over layers, residual resident in VMEM.
# ---------------------------------------------------------------------------

def _stack_kernel(h0_ref, cos_ref, sin_ref, mask_ref,
                  ln1_ref, ln2_ref, wqkv_ref, wo_ref, wgu_ref, wd_ref,
                  o_ref, *, num_heads, head_dim, inter, eps):
    M, H = o_ref.shape
    D = head_dim

    @pl.when(pl.program_id(0) == 0)
    def _init():
        o_ref[...] = h0_ref[...]

    h = o_ref[...]                                    # f32 residual stream (M, H)

    # ---------------- attention block ----------------
    var = jnp.mean(h * h, axis=-1, keepdims=True)
    x = (h * jax.lax.rsqrt(var + eps) * ln1_ref[0]).astype(jnp.bfloat16)

    # Fused [Wq*s | Wk | Wv | (Wq P)*s | (Wk P)] projection: RoPE with no lane shuffles,
    # attention scale already folded into the Q columns.
    proj = jnp.dot(x, wqkv_ref[0], preferred_element_type=jnp.float32)   # (M, 5H)
    cos = cos_ref[...]
    sin = sin_ref[...]
    q = proj[:, 0 * H:1 * H] * cos + proj[:, 3 * H:4 * H] * sin
    k = proj[:, 1 * H:2 * H] * cos + proj[:, 4 * H:5 * H] * sin
    v = proj[:, 2 * H:3 * H]

    # Per-head score tiles stacked along sublanes -> one batched masked softmax.
    parts = []
    for hh in range(num_heads):
        qh = q[:, hh * D:(hh + 1) * D].astype(jnp.bfloat16)
        kh = k[:, hh * D:(hh + 1) * D].astype(jnp.bfloat16)
        parts.append(jax.lax.dot_general(qh, kh, (((1,), (1,)), ((), ())),
                                         preferred_element_type=jnp.float32))
    s = jnp.concatenate(parts, axis=0) + mask_ref[...]        # (nH*M, M) + causal mask
    s = s - jnp.max(s, axis=-1, keepdims=True)
    p = jnp.exp(s)
    p = p * pl.reciprocal(jnp.sum(p, axis=-1, keepdims=True), approx=True)

    # Accumulate each head straight into the residual through a sublane-sliced o-proj
    # (no lane concat of head outputs).
    wo = wo_ref[0]
    new_h = h
    for hh in range(num_heads):
        ph = p[hh * M:(hh + 1) * M, :].astype(jnp.bfloat16)    # sublane slice, cheap
        vh = v[:, hh * D:(hh + 1) * D].astype(jnp.bfloat16)
        oh = jnp.dot(ph, vh, preferred_element_type=jnp.float32)          # (M, D)
        new_h = new_h + jnp.dot(oh.astype(jnp.bfloat16), wo[hh * D:(hh + 1) * D, :],
                                preferred_element_type=jnp.float32)
    h = new_h

    # ---------------- MLP block ----------------
    var = jnp.mean(h * h, axis=-1, keepdims=True)
    x = (h * jax.lax.rsqrt(var + eps) * ln2_ref[0]).astype(jnp.bfloat16)
    gu = jnp.dot(x, wgu_ref[0], preferred_element_type=jnp.float32)       # (M, 2I)
    g = gu[:, :inter]
    u = gu[:, inter:]
    act = (g * jax.nn.sigmoid(g) * u).astype(jnp.bfloat16)                # SiLU(g) * u
    h = h + jnp.dot(act, wd_ref[0], preferred_element_type=jnp.float32)

    o_ref[...] = h


def llama_stack(h0, cos, sin, mask, ln1, ln2, wqkv, wo, wgu, wd, *,
                num_heads, head_dim, eps):
    M, H = h0.shape
    L = wqkv.shape[0]
    inter = wd.shape[1]
    kernel = functools.partial(_stack_kernel, num_heads=num_heads, head_dim=head_dim,
                               inter=inter, eps=eps)
    const2 = lambda l: (0, 0)
    per_layer = lambda l: (l, 0, 0)
    return pl.pallas_call(
        kernel,
        out_shape=jax.ShapeDtypeStruct((M, H), jnp.float32),
        grid=(L,),
        in_specs=[
            pl.BlockSpec((M, H), const2),                       # embedded hidden states
            pl.BlockSpec((M, H), const2),                       # cos (tiled per head)
            pl.BlockSpec((M, H), const2),                       # sin
            pl.BlockSpec(mask.shape, const2),                   # additive causal mask
            pl.BlockSpec((1, 1, H), per_layer),                 # input layernorm
            pl.BlockSpec((1, 1, H), per_layer),                 # post-attn layernorm
            pl.BlockSpec((1,) + wqkv.shape[1:], per_layer),     # fused QKV(+rot) weights
            pl.BlockSpec((1,) + wo.shape[1:], per_layer),       # o-proj
            pl.BlockSpec((1,) + wgu.shape[1:], per_layer),      # gate|up
            pl.BlockSpec((1,) + wd.shape[1:], per_layer),       # down
        ],
        out_specs=pl.BlockSpec((M, H), const2),                 # residual stream, resident
        compiler_params=pltpu.CompilerParams(
            dimension_semantics=("arbitrary",)),                # layers are sequential
    )(h0, cos, sin, mask, ln1, ln2, wqkv, wo, wgu, wd)


# ---------------------------------------------------------------------------
# Parameters
# ---------------------------------------------------------------------------

def init_params(key, cfg):
    H = cfg["hidden_size"]
    I = cfg["intermediate_size"]
    V = cfg["vocab_size"]
    C = cfg["classification_out_size"]
    nH = cfg["num_attention_heads"]
    L = cfg["num_hidden_layers"]
    D = H // nH
    P = _rotate_half_matrix(nH, D)
    scale = 1.0 / (D ** 0.5)

    def nrm(k, shape):
        return 0.02 * jax.random.normal(k, shape, dtype=jnp.float32)

    keys = jax.random.split(key, 2 + L)
    wqkv_l, wo_l, wgu_l, wd_l = [], [], [], []
    for li in range(L):
        lk = jax.random.split(keys[2 + li], 7)
        wq, wk, wv = nrm(lk[0], (H, H)), nrm(lk[1], (H, H)), nrm(lk[2], (H, H))
        wo = nrm(lk[3], (H, H))
        wg, wu, wd = nrm(lk[4], (H, I)), nrm(lk[5], (H, I)), nrm(lk[6], (I, H))
        # [Wq*s | Wk | Wv | (Wq@P)*s | (Wk@P)]: one (H,5H) bf16 matmul yields Q, K, V and
        # rotate_half(Q/K) for RoPE; attention scale folded into the Q columns.
        # TODO(synk): at real Llama sizes keep this at 3H and rotate with a per-head XLU
        #             roll instead of the extra 2H pre-rotated columns (HBM/VMEM cost).
        wqkv_l.append(jnp.concatenate(
            [wq * scale, wk, wv, (wq @ P) * scale, wk @ P], axis=1))
        wo_l.append(wo)
        wgu_l.append(jnp.concatenate([wg, wu], axis=1))
        wd_l.append(wd)

    return {
        "embed": nrm(keys[0], (V, H)),
        "final_norm": jnp.ones((H,), jnp.float32),
        "cls_head": nrm(keys[1], (H, C)),                # transpose of nn.Linear(H,C).weight
        "ln1": jnp.ones((L, 1, H), jnp.float32),
        "ln2": jnp.ones((L, 1, H), jnp.float32),
        "wqkv": jnp.stack(wqkv_l).astype(jnp.bfloat16),  # (L, H, 5H)
        "wo": jnp.stack(wo_l).astype(jnp.bfloat16),      # (L, H, H)
        "wgu": jnp.stack(wgu_l).astype(jnp.bfloat16),    # (L, H, 2I)
        "wd": jnp.stack(wd_l).astype(jnp.bfloat16),      # (L, I, H)
    }


# ---------------------------------------------------------------------------
# Forward: embedding + fused stack kernel + EOS gather + final norm + cls head
# ---------------------------------------------------------------------------

def make_forward(cfg):
    H = cfg["hidden_size"]
    nH = cfg["num_attention_heads"]
    D = H // nH
    eps = cfg["rms_norm_eps"]
    eos_id = cfg["eos_token_id"]

    @jax.jit
    def _forward_jit(params, input_ids, positions):
        B, S = input_ids.shape
        M = B * S
        ids_flat = input_ids.reshape(-1)
        h0 = jnp.take(params["embed"], ids_flat, axis=0)             # (M, H)

        # Per-token RoPE tables (handles per-sequence position offsets), tiled per head.
        inv_freq = 1.0 / (cfg["rope_theta"] **
                          (jnp.arange(0, D, 2, dtype=jnp.float32) / D))
        pos = positions.reshape(-1).astype(jnp.float32)
        freqs = pos[:, None] * inv_freq[None, :]
        emb = jnp.concatenate([freqs, freqs], axis=-1)                # (M, D)
        cos = jnp.tile(jnp.cos(emb), (1, nH))                         # (M, H)
        sin = jnp.tile(jnp.sin(emb), (1, nH))

        # Block-diagonal causal additive mask for all heads (constant-folded by XLA).
        r = jnp.arange(M, dtype=jnp.int32)
        same_seq = (r[:, None] // S) == (r[None, :] // S)
        causal = r[:, None] >= r[None, :]
        mask = jnp.where(same_seq & causal, 0.0, -1e30).astype(jnp.float32)   # (M, M)
        mask = jnp.tile(mask, (nH, 1))                                # (nH*M, M)

        h = llama_stack(h0, cos, sin, mask,
                        params["ln1"], params["ln2"], params["wqkv"],
                        params["wo"], params["wgu"], params["wd"],
                        num_heads=nH, head_dim=D, eps=eps)            # (M, H) f32

        # EOS selection first, then final RMSNorm + classification head on (B, H) only.
        # TODO(synk): torch's boolean-mask gather has a dynamic shape; this per-row index
        # only differs when a sequence has zero or multiple EOS tokens.
        is_eos = input_ids == eos_id                                  # (B, S)
        eos_idx = jnp.argmax(is_eos, axis=1).astype(jnp.int32)
        flat_idx = jnp.arange(B, dtype=jnp.int32) * S + eos_idx
        eos_h = jnp.take(h, flat_idx, axis=0)                         # (B, H)

        var = jnp.mean(eos_h * eos_h, axis=-1, keepdims=True)
        eos_h = eos_h * jax.lax.rsqrt(var + eps) * params["final_norm"]

        # Tiny (B,H)@(H,C) head: lane dim C=8 < 128, leave it to XLA.
        scores = eos_h @ params["cls_head"]
        valid = jnp.sum(is_eos) == B
        scores = jnp.where(valid, scores, jnp.ones_like(scores))
        return scores, valid

    def forward(params, input_ids, positions):
        scores, valid = _forward_jit(params, input_ids, positions)
        if not bool(valid):                                           # host-side warning
            print("Warning: the EOS tokens are missing in some sentences.")
        # Mimics LogitsProcessorOutput
        return dict(
            next_token_logits=scores,
            next_token_logprobs=scores,
            normalized_prompt_logprobs=scores,
            input_token_logprobs=jnp.ones_like(input_ids),
            input_top_logprobs=None,
            output_top_logprobs=None,
        )

    return forward


# ---------------------------------------------------------------------------
# Main
# ---------------------------------------------------------------------------

if __name__ == "__main__":
    cfg = CONFIG
    B, S = 2, 16

    root = jax.random.PRNGKey(0)
    pkey, ikey = jax.random.split(root)
    params = init_params(pkey, cfg)

    # Random token ids avoiding EOS, then force EOS as the last token of each sequence
    # (so the EOS gather yields exactly batch_size rows, as the module expects).
    input_ids = jax.random.randint(ikey, (B, S), 3, cfg["vocab_size"], dtype=jnp.int32)
    input_ids = input_ids.at[:, -1].set(cfg["eos_token_id"])
    positions = jnp.broadcast_to(jnp.arange(S, dtype=jnp.int32), (B, S))

    forward = make_forward(cfg)
    out = forward(params, input_ids, positions)
    jax.block_until_ready(out["next_token_logits"])

    assert out["next_token_logits"].shape == (B, cfg["classification_out_size"])
    print("KERNEL_OK")
</pallas_src>

<mosaic_0001>
module attributes {stable_mosaic.version = 11 : i64} {
  func.func @_stack_kernel(%arg0: i32, %arg1: memref<32x128xf32, #tpu.memory_space<vmem>>, %arg2: memref<32x128xf32, #tpu.memory_space<vmem>>, %arg3: memref<32x128xf32, #tpu.memory_space<vmem>>, %arg4: memref<128x32xf32, #tpu.memory_space<vmem>>, %arg5: memref<1x1x128xf32, #tpu.memory_space<vmem>>, %arg6: memref<1x1x128xf32, #tpu.memory_space<vmem>>, %arg7: memref<1x128x640xbf16, #tpu.memory_space<vmem>>, %arg8: memref<1x128x128xbf16, #tpu.memory_space<vmem>>, %arg9: memref<1x128x512xbf16, #tpu.memory_space<vmem>>, %arg10: memref<1x256x128xbf16, #tpu.memory_space<vmem>>, %arg11: memref<32x128xf32, #tpu.memory_space<vmem>>) attributes {dimension_semantics = [#tpu.dimension_semantics<arbitrary>], iteration_bounds = array<i64: 2>, scalar_prefetch = 0 : i64, scratch_operands = 0 : i64, tpu.core_type = #tpu.core_type<tc>, window_params = [{pipeline_mode = #tpu.pipeline_mode<synchronous>, transform_indices = @transform_0, window_bounds = array<i64: 32, 128>}, {pipeline_mode = #tpu.pipeline_mode<synchronous>, transform_indices = @transform_1, window_bounds = array<i64: 32, 128>}, {pipeline_mode = #tpu.pipeline_mode<synchronous>, transform_indices = @transform_2, window_bounds = array<i64: 32, 128>}, {pipeline_mode = #tpu.pipeline_mode<synchronous>, transform_indices = @transform_3, window_bounds = array<i64: 128, 32>}, {transform_indices = @transform_4, window_bounds = array<i64: 1, 1, 128>}, {transform_indices = @transform_5, window_bounds = array<i64: 1, 1, 128>}, {transform_indices = @transform_6, window_bounds = array<i64: 1, 128, 640>}, {transform_indices = @transform_7, window_bounds = array<i64: 1, 128, 128>}, {transform_indices = @transform_8, window_bounds = array<i64: 1, 128, 512>}, {transform_indices = @transform_9, window_bounds = array<i64: 1, 256, 128>}, {pipeline_mode = #tpu.pipeline_mode<synchronous>, transform_indices = @transform_10, window_bounds = array<i64: 32, 128>}]} {
    %c0_i32 = arith.constant 0 : i32
    %0 = arith.cmpi eq, %arg0, %c0_i32 : i32
    %1 = arith.extui %0 : i1 to i32
    %c0_i32_0 = arith.constant 0 : i32
    %2 = arith.cmpi ne, %1, %c0_i32_0 : i32
    scf.if %2 {
      %c0_51 = arith.constant 0 : index
      %c0_52 = arith.constant 0 : index
      %139 = vector.load %arg1[%c0_51, %c0_52] : memref<32x128xf32, #tpu.memory_space<vmem>>, vector<32x128xf32>
      %c0_53 = arith.constant 0 : index
      %c0_54 = arith.constant 0 : index
      %140 = vector.load %arg11[%c0_53, %c0_54] : memref<32x128xf32, #tpu.memory_space<vmem>>, vector<32x128xf32>
      tpu.vector_store %arg11[%c0_53, %c0_54], %139 {strides = array<i32>} : memref<32x128xf32, #tpu.memory_space<vmem>>, vector<32x128xf32>,
    } else {
    }
    %c0 = arith.constant 0 : index
    %c0_1 = arith.constant 0 : index
    %3 = vector.load %arg11[%c0, %c0_1] : memref<32x128xf32, #tpu.memory_space<vmem>>, vector<32x128xf32>
    %4 = arith.mulf %3, %3 : vector<32x128xf32>
    %cst = arith.constant dense<0.000000e+00> : vector<32xf32>
    %5 = vector.multi_reduction <add>, %4, %cst [1] : vector<32x128xf32> to vector<32xf32>
    %6 = vector.shape_cast %5 : vector<32xf32> to vector<32x1xf32>
    %cst_2 = arith.constant 1.280000e+02 : f32
    %7 = vector.broadcast %cst_2 : f32 to vector<32x1xf32>
    %8 = arith.divf %6, %7 : vector<32x1xf32>
    %cst_3 = arith.constant 9.99999974E-6 : f32
    %9 = vector.broadcast %cst_3 : f32 to vector<32x1xf32>
    %10 = arith.addf %8, %9 : vector<32x1xf32>
    %11 = math.rsqrt %10 : vector<32x1xf32>
    %12 = vector.broadcast %11 : vector<32x1xf32> to vector<32x128xf32>
    %13 = arith.mulf %3, %12 : vector<32x128xf32>
    %c0_4 = arith.constant 0 : index
    %c0_5 = arith.constant 0 : index
    %c0_6 = arith.constant 0 : index
    %14 = vector.load %arg5[%c0_4, %c0_5, %c0_6] : memref<1x1x128xf32, #tpu.memory_space<vmem>>, vector<1x1x128xf32>
    %15 = vector.shape_cast %14 : vector<1x1x128xf32> to vector<1x128xf32>
    %16 = vector.broadcast %15 : vector<1x128xf32> to vector<32x128xf32>
    %17 = arith.mulf %13, %16 : vector<32x128xf32>
    %18 = arith.truncf %17 : vector<32x128xf32> to vector<32x128xbf16>
    %c0_7 = arith.constant 0 : index
    %c0_8 = arith.constant 0 : index
    %c0_9 = arith.constant 0 : index
    %19 = vector.load %arg7[%c0_7, %c0_8, %c0_9] : memref<1x128x640xbf16, #tpu.memory_space<vmem>>, vector<1x128x640xbf16>
    %20 = vector.shape_cast %19 : vector<1x128x640xbf16> to vector<128x640xbf16>
    %cst_10 = arith.constant dense<0.000000e+00> : vector<32x640xf32>
    %21 = tpu.matmul %18, %20, %cst_10 {dimension_numbers = #tpu.dot_dimension_numbers<[1], [0], [0], [1], [0, 0, 1, 1], [], []>} : vector<32x128xbf16>, vector<128x640xbf16>, vector<32x640xf32> -> vector<32x640xf32>
    %c0_11 = arith.constant 0 : index
    %c0_12 = arith.constant 0 : index
    %22 = vector.load %arg2[%c0_11, %c0_12] : memref<32x128xf32, #tpu.memory_space<vmem>>, vector<32x128xf32>
    %c0_13 = arith.constant 0 : index
    %c0_14 = arith.constant 0 : index
    %23 = vector.load %arg3[%c0_13, %c0_14] : memref<32x128xf32, #tpu.memory_space<vmem>>, vector<32x128xf32>
    %24 = vector.extract_strided_slice %21 {offsets = [0, 0], sizes = [32, 128], strides = [1, 1]} : vector<32x640xf32> to vector<32x128xf32>
    %25 = arith.mulf %24, %22 : vector<32x128xf32>
    %26 = vector.extract_strided_slice %21 {offsets = [0, 384], sizes = [32, 128], strides = [1, 1]} : vector<32x640xf32> to vector<32x128xf32>
    %27 = arith.mulf %26, %23 : vector<32x128xf32>
    %28 = arith.addf %25, %27 : vector<32x128xf32>
    %29 = vector.extract_strided_slice %21 {offsets = [0, 128], sizes = [32, 128], strides = [1, 1]} : vector<32x640xf32> to vector<32x128xf32>
    %30 = arith.mulf %29, %22 : vector<32x128xf32>
    %31 = vector.extract_strided_slice %21 {offsets = [0, 512], sizes = [32, 128], strides = [1, 1]} : vector<32x640xf32> to vector<32x128xf32>
    %32 = arith.mulf %31, %23 : vector<32x128xf32>
    %33 = arith.addf %30, %32 : vector<32x128xf32>
    %34 = vector.extract_strided_slice %21 {offsets = [0, 256], sizes = [32, 128], strides = [1, 1]} : vector<32x640xf32> to vector<32x128xf32>
    %35 = vector.extract_strided_slice %28 {offsets = [0, 0], sizes = [32, 32], strides = [1, 1]} : vector<32x128xf32> to vector<32x32xf32>
    %36 = arith.truncf %35 : vector<32x32xf32> to vector<32x32xbf16>
    %37 = vector.extract_strided_slice %33 {offsets = [0, 0], sizes = [32, 32], strides = [1, 1]} : vector<32x128xf32> to vector<32x32xf32>
    %38 = arith.truncf %37 : vector<32x32xf32> to vector<32x32xbf16>
    %cst_15 = arith.constant dense<0.000000e+00> : vector<32x32xf32>
    %39 = tpu.matmul %36, %38, %cst_15 {dimension_numbers = #tpu.dot_dimension_numbers<[1], [1], [0], [0], [0, 0, 1, 0], [], []>} : vector<32x32xbf16>, vector<32x32xbf16>, vector<32x32xf32> -> vector<32x32xf32>
    %40 = vector.extract_strided_slice %28 {offsets = [0, 32], sizes = [32, 32], strides = [1, 1]} : vector<32x128xf32> to vector<32x32xf32>
    %41 = arith.truncf %40 : vector<32x32xf32> to vector<32x32xbf16>
    %42 = vector.extract_strided_slice %33 {offsets = [0, 32], sizes = [32, 32], strides = [1, 1]} : vector<32x128xf32> to vector<32x32xf32>
    %43 = arith.truncf %42 : vector<32x32xf32> to vector<32x32xbf16>
    %cst_16 = arith.constant dense<0.000000e+00> : vector<32x32xf32>
    %44 = tpu.matmul %41, %43, %cst_16 {dimension_numbers = #tpu.dot_dimension_numbers<[1], [1], [0], [0], [0, 0, 1, 0], [], []>} : vector<32x32xbf16>, vector<32x32xbf16>, vector<32x32xf32> -> vector<32x32xf32>
    %45 = vector.extract_strided_slice %28 {offsets = [0, 64], sizes = [32, 32], strides = [1, 1]} : vector<32x128xf32> to vector<32x32xf32>
    %46 = arith.truncf %45 : vector<32x32xf32> to vector<32x32xbf16>
    %47 = vector.extract_strided_slice %33 {offsets = [0, 64], sizes = [32, 32], strides = [1, 1]} : vector<32x128xf32> to vector<32x32xf32>
    %48 = arith.truncf %47 : vector<32x32xf32> to vector<32x32xbf16>
    %cst_17 = arith.constant dense<0.000000e+00> : vector<32x32xf32>
    %49 = tpu.matmul %46, %48, %cst_17 {dimension_numbers = #tpu.dot_dimension_numbers<[1], [1], [0], [0], [0, 0, 1, 0], [], []>} : vector<32x32xbf16>, vector<32x32xbf16>, vector<32x32xf32> -> vector<32x32xf32>
    %50 = vector.extract_strided_slice %28 {offsets = [0, 96], sizes = [32, 32], strides = [1, 1]} : vector<32x128xf32> to vector<32x32xf32>
    %51 = arith.truncf %50 : vector<32x32xf32> to vector<32x32xbf16>
    %52 = vector.extract_strided_slice %33 {offsets = [0, 96], sizes = [32, 32], strides = [1, 1]} : vector<32x128xf32> to vector<32x32xf32>
    %53 = arith.truncf %52 : vector<32x32xf32> to vector<32x32xbf16>
    %cst_18 = arith.constant dense<0.000000e+00> : vector<32x32xf32>
    %54 = tpu.matmul %51, %53, %cst_18 {dimension_numbers = #tpu.dot_dimension_numbers<[1], [1], [0], [0], [0, 0, 1, 0], [], []>} : vector<32x32xbf16>, vector<32x32xbf16>, vector<32x32xf32> -> vector<32x32xf32>
    %55 = tpu.concatenate %39, %44, %49, %54 in 0 : vector<32x32xf32>, vector<32x32xf32>, vector<32x32xf32>, vector<32x32xf32> -> vector<128x32xf32>
    %c0_19 = arith.constant 0 : index
    %c0_20 = arith.constant 0 : index
    %56 = vector.load %arg4[%c0_19, %c0_20] : memref<128x32xf32, #tpu.memory_space<vmem>>, vector<128x32xf32>
    %57 = arith.addf %55, %56 : vector<128x32xf32>
    %cst_21 = arith.constant dense<0xFF800000> : vector<128xf32>
    %58 = vector.multi_reduction <maximumf>, %57, %cst_21 [1] : vector<128x32xf32> to vector<128xf32>
    %59 = vector.shape_cast %58 : vector<128xf32> to vector<128x1xf32>
    %60 = vector.broadcast %59 : vector<128x1xf32> to vector<128x32xf32>
    %61 = arith.subf %57, %60 : vector<128x32xf32>
    %62 = math.exp %61 : vector<128x32xf32>
    %cst_22 = arith.constant dense<0.000000e+00> : vector<128xf32>
    %63 = vector.multi_reduction <add>, %62, %cst_22 [1] : vector<128x32xf32> to vector<128xf32>
    %64 = vector.shape_cast %63 : vector<128xf32> to vector<128x1xf32>
    %65 = tpu.reciprocal %64 {approx = true} : vector<128x1xf32> -> vector<128x1xf32>
    %66 = vector.broadcast %65 : vector<128x1xf32> to vector<128x32xf32>
    %67 = arith.mulf %62, %66 : vector<128x32xf32>
    %c0_23 = arith.constant 0 : index
    %c0_24 = arith.constant 0 : index
    %c0_25 = arith.constant 0 : index
    %68 = vector.load %arg8[%c0_23, %c0_24, %c0_25] : memref<1x128x128xbf16, #tpu.memory_space<vmem>>, vector<1x128x128xbf16>
    %69 = vector.shape_cast %68 : vector<1x128x128xbf16> to vector<128x128xbf16>
    %70 = vector.extract_strided_slice %67 {offsets = [0, 0], sizes = [32, 32], strides = [1, 1]} : vector<128x32xf32> to vector<32x32xf32>
    %71 = arith.truncf %70 : vector<32x32xf32> to vector<32x32xbf16>
    %72 = vector.extract_strided_slice %34 {offsets = [0, 0], sizes = [32, 32], strides = [1, 1]} : vector<32x128xf32> to vector<32x32xf32>
    %73 = arith.truncf %72 : vector<32x32xf32> to vector<32x32xbf16>
    %cst_26 = arith.constant dense<0.000000e+00> : vector<32x32xf32>
    %74 = tpu.matmul %71, %73, %cst_26 {dimension_numbers = #tpu.dot_dimension_numbers<[1], [0], [0], [1], [0, 0, 1, 1], [], []>} : vector<32x32xbf16>, vector<32x32xbf16>, vector<32x32xf32> -> vector<32x32xf32>
    %75 = arith.truncf %74 : vector<32x32xf32> to vector<32x32xbf16>
    %76 = vector.extract_strided_slice %69 {offsets = [0, 0], sizes = [32, 128], strides = [1, 1]} : vector<128x128xbf16> to vector<32x128xbf16>
    %cst_27 = arith.constant dense<0.000000e+00> : vector<32x128xf32>
    %77 = tpu.matmul %75, %76, %cst_27 {dimension_numbers = #tpu.dot_dimension_numbers<[1], [0], [0], [1], [0, 0, 1, 1], [], []>} : vector<32x32xbf16>, vector<32x128xbf16>, vector<32x128xf32> -> vector<32x128xf32>
    %78 = arith.addf %3, %77 : vector<32x128xf32>
    %79 = vector.extract_strided_slice %67 {offsets = [32, 0], sizes = [32, 32], strides = [1, 1]} : vector<128x32xf32> to vector<32x32xf32>
    %80 = arith.truncf %79 : vector<32x32xf32> to vector<32x32xbf16>
    %81 = vector.extract_strided_slice %34 {offsets = [0, 32], sizes = [32, 32], strides = [1, 1]} : vector<32x128xf32> to vector<32x32xf32>
    %82 = arith.truncf %81 : vector<32x32xf32> to vector<32x32xbf16>
    %cst_28 = arith.constant dense<0.000000e+00> : vector<32x32xf32>
    %83 = tpu.matmul %80, %82, %cst_28 {dimension_numbers = #tpu.dot_dimension_numbers<[1], [0], [0], [1], [0, 0, 1, 1], [], []>} : vector<32x32xbf16>, vector<32x32xbf16>, vector<32x32xf32> -> vector<32x32xf32>
    %84 = arith.truncf %83 : vector<32x32xf32> to vector<32x32xbf16>
    %85 = vector.extract_strided_slice %69 {offsets = [32, 0], sizes = [32, 128], strides = [1, 1]} : vector<128x128xbf16> to vector<32x128xbf16>
    %cst_29 = arith.constant dense<0.000000e+00> : vector<32x128xf32>
    %86 = tpu.matmul %84, %85, %cst_29 {dimension_numbers = #tpu.dot_dimension_numbers<[1], [0], [0], [1], [0, 0, 1, 1], [], []>} : vector<32x32xbf16>, vector<32x128xbf16>, vector<32x128xf32> -> vector<32x128xf32>
    %87 = arith.addf %78, %86 : vector<32x128xf32>
    %88 = vector.extract_strided_slice %67 {offsets = [64, 0], sizes = [32, 32], strides = [1, 1]} : vector<128x32xf32> to vector<32x32xf32>
    %89 = arith.truncf %88 : vector<32x32xf32> to vector<32x32xbf16>
    %90 = vector.extract_strided_slice %34 {offsets = [0, 64], sizes = [32, 32], strides = [1, 1]} : vector<32x128xf32> to vector<32x32xf32>
    %91 = arith.truncf %90 : vector<32x32xf32> to vector<32x32xbf16>
    %cst_30 = arith.constant dense<0.000000e+00> : vector<32x32xf32>
    %92 = tpu.matmul %89, %91, %cst_30 {dimension_numbers = #tpu.dot_dimension_numbers<[1], [0], [0], [1], [0, 0, 1, 1], [], []>} : vector<32x32xbf16>, vector<32x32xbf16>, vector<32x32xf32> -> vector<32x32xf32>
    %93 = arith.truncf %92 : vector<32x32xf32> to vector<32x32xbf16>
    %94 = vector.extract_strided_slice %69 {offsets = [64, 0], sizes = [32, 128], strides = [1, 1]} : vector<128x128xbf16> to vector<32x128xbf16>
    %cst_31 = arith.constant dense<0.000000e+00> : vector<32x128xf32>
    %95 = tpu.matmul %93, %94, %cst_31 {dimension_numbers = #tpu.dot_dimension_numbers<[1], [0], [0], [1], [0, 0, 1, 1], [], []>} : vector<32x32xbf16>, vector<32x128xbf16>, vector<32x128xf32> -> vector<32x128xf32>
    %96 = arith.addf %87, %95 : vector<32x128xf32>
    %97 = vector.extract_strided_slice %67 {offsets = [96, 0], sizes = [32, 32], strides = [1, 1]} : vector<128x32xf32> to vector<32x32xf32>
    %98 = arith.truncf %97 : vector<32x32xf32> to vector<32x32xbf16>
    %99 = vector.extract_strided_slice %34 {offsets = [0, 96], sizes = [32, 32], strides = [1, 1]} : vector<32x128xf32> to vector<32x32xf32>
    %100 = arith.truncf %99 : vector<32x32xf32> to vector<32x32xbf16>
    %cst_32 = arith.constant dense<0.000000e+00> : vector<32x32xf32>
    %101 = tpu.matmul %98, %100, %cst_32 {dimension_numbers = #tpu.dot_dimension_numbers<[1], [0], [0], [1], [0, 0, 1, 1], [], []>} : vector<32x32xbf16>, vector<32x32xbf16>, vector<32x32xf32> -> vector<32x32xf32>
    %102 = arith.truncf %101 : vector<32x32xf32> to vector<32x32xbf16>
    %103 = vector.extract_strided_slice %69 {offsets = [96, 0], sizes = [32, 128], strides = [1, 1]} : vector<128x128xbf16> to vector<32x128xbf16>
    %cst_33 = arith.constant dense<0.000000e+00> : vector<32x128xf32>
    %104 = tpu.matmul %102, %103, %cst_33 {dimension_numbers = #tpu.dot_dimension_numbers<[1], [0], [0], [1], [0, 0, 1, 1], [], []>} : vector<32x32xbf16>, vector<32x128xbf16>, vector<32x128xf32> -> vector<32x128xf32>
    %105 = arith.addf %96, %104 : vector<32x128xf32>
    %106 = arith.mulf %105, %105 : vector<32x128xf32>
    %cst_34 = arith.constant dense<0.000000e+00> : vector<32xf32>
    %107 = vector.multi_reduction <add>, %106, %cst_34 [1] : vector<32x128xf32> to vector<32xf32>
    %108 = vector.shape_cast %107 : vector<32xf32> to vector<32x1xf32>
    %cst_35 = arith.constant 1.280000e+02 : f32
    %109 = vector.broadcast %cst_35 : f32 to vector<32x1xf32>
    %110 = arith.divf %108, %109 : vector<32x1xf32>
    %cst_36 = arith.constant 9.99999974E-6 : f32
    %111 = vector.broadcast %cst_36 : f32 to vector<32x1xf32>
    %112 = arith.addf %110, %111 : vector<32x1xf32>
    %113 = math.rsqrt %112 : vector<32x1xf32>
    %114 = vector.broadcast %113 : vector<32x1xf32> to vector<32x128xf32>
    %115 = arith.mulf %105, %114 : vector<32x128xf32>
    %c0_37 = arith.constant 0 : index
    %c0_38 = arith.constant 0 : index
    %c0_39 = arith.constant 0 : index
    %116 = vector.load %arg6[%c0_37, %c0_38, %c0_39] : memref<1x1x128xf32, #tpu.memory_space<vmem>>, vector<1x1x128xf32>
    %117 = vector.shape_cast %116 : vector<1x1x128xf32> to vector<1x128xf32>
    %118 = vector.broadcast %117 : vector<1x128xf32> to vector<32x128xf32>
    %119 = arith.mulf %115, %118 : vector<32x128xf32>
    %120 = arith.truncf %119 : vector<32x128xf32> to vector<32x128xbf16>
    %c0_40 = arith.constant 0 : index
    %c0_41 = arith.constant 0 : index
    %c0_42 = arith.constant 0 : index
    %121 = vector.load %arg9[%c0_40, %c0_41, %c0_42] : memref<1x128x512xbf16, #tpu.memory_space<vmem>>, vector<1x128x512xbf16>
    %122 = vector.shape_cast %121 : vector<1x128x512xbf16> to vector<128x512xbf16>
    %cst_43 = arith.constant dense<0.000000e+00> : vector<32x512xf32>
    %123 = tpu.matmul %120, %122, %cst_43 {dimension_numbers = #tpu.dot_dimension_numbers<[1], [0], [0], [1], [0, 0, 1, 1], [], []>} : vector<32x128xbf16>, vector<128x512xbf16>, vector<32x512xf32> -> vector<32x512xf32>
    %124 = vector.extract_strided_slice %123 {offsets = [0, 0], sizes = [32, 256], strides = [1, 1]} : vector<32x512xf32> to vector<32x256xf32>
    %125 = vector.extract_strided_slice %123 {offsets = [0, 256], sizes = [32, 256], strides = [1, 1]} : vector<32x512xf32> to vector<32x256xf32>
    %126 = arith.negf %124 : vector<32x256xf32>
    %127 = math.exp %126 : vector<32x256xf32>
    %cst_44 = arith.constant 1.000000e+00 : f32
    %128 = vector.broadcast %cst_44 : f32 to vector<32x256xf32>
    %129 = arith.addf %128, %127 : vector<32x256xf32>
    %130 = arith.divf %128, %129 : vector<32x256xf32>
    %131 = arith.mulf %124, %130 : vector<32x256xf32>
    %132 = arith.mulf %131, %125 : vector<32x256xf32>
    %133 = arith.truncf %132 : vector<32x256xf32> to vector<32x256xbf16>
    %c0_45 = arith.constant 0 : index
    %c0_46 = arith.constant 0 : index
    %c0_47 = arith.constant 0 : index
    %134 = vector.load %arg10[%c0_45, %c0_46, %c0_47] : memref<1x256x128xbf16, #tpu.memory_space<vmem>>, vector<1x256x128xbf16>
    %135 = vector.shape_cast %134 : vector<1x256x128xbf16> to vector<256x128xbf16>
    %cst_48 = arith.constant dense<0.000000e+00> : vector<32x128xf32>
    %136 = tpu.matmul %133, %135, %cst_48 {dimension_numbers = #tpu.dot_dimension_numbers<[1], [0], [0], [1], [0, 0, 1, 1], [], []>} : vector<32x256xbf16>, vector<256x128xbf16>, vector<32x128xf32> -> vector<32x128xf32>
    %137 = arith.addf %105, %136 : vector<32x128xf32>
    %c0_49 = arith.constant 0 : index
    %c0_50 = arith.constant 0 : index
    %138 = vector.load %arg11[%c0_49, %c0_50] : memref<32x128xf32, #tpu.memory_space<vmem>>, vector<32x128xf32>
    tpu.vector_store %arg11[%c0_49, %c0_50], %137 {strides = array<i32>} : memref<32x128xf32, #tpu.memory_space<vmem>>, vector<32x128xf32>,
    return
  }
  func.func @transform_0(%arg0: i32) -> (i32, i32) {
    %c0_i32 = arith.constant 0 : i32
    %c0_i32_0 = arith.constant 0 : i32
    %c0_i32_1 = arith.constant 0 : i32
    return %c0_i32, %c0_i32_0 : i32, i32
  }
  func.func @transform_1(%arg0: i32) -> (i32, i32) {
    %c0_i32 = arith.constant 0 : i32
    %c0_i32_0 = arith.constant 0 : i32
    %c0_i32_1 = arith.constant 0 : i32
    return %c0_i32, %c0_i32_0 : i32, i32
  }
  func.func @transform_2(%arg0: i32) -> (i32, i32) {
    %c0_i32 = arith.constant 0 : i32
    %c0_i32_0 = arith.constant 0 : i32
    %c0_i32_1 = arith.constant 0 : i32
    return %c0_i32, %c0_i32_0 : i32, i32
  }
  func.func @transform_3(%arg0: i32) -> (i32, i32) {
    %c0_i32 = arith.constant 0 : i32
    %c0_i32_0 = arith.constant 0 : i32
    %c0_i32_1 = arith.constant 0 : i32
    return %c0_i32, %c0_i32_0 : i32, i32
  }
  func.func @transform_4(%arg0: i32) -> (i32, i32, i32) {
    %c0_i32 = arith.constant 0 : i32
    %c0_i32_0 = arith.constant 0 : i32
    %c0_i32_1 = arith.constant 0 : i32
    return %arg0, %c0_i32, %c0_i32_0 : i32, i32, i32
  }
  func.func @transform_5(%arg0: i32) -> (i32, i32, i32) {
    %c0_i32 = arith.constant 0 : i32
    %c0_i32_0 = arith.constant 0 : i32
    %c0_i32_1 = arith.constant 0 : i32
    return %arg0, %c0_i32, %c0_i32_0 : i32, i32, i32
  }
  func.func @transform_6(%arg0: i32) -> (i32, i32, i32) {
    %c0_i32 = arith.constant 0 : i32
    %c0_i32_0 = arith.constant 0 : i32
    %c0_i32_1 = arith.constant 0 : i32
    return %arg0, %c0_i32, %c0_i32_0 : i32, i32, i32
  }
  func.func @transform_7(%arg0: i32) -> (i32, i32, i32) {
    %c0_i32 = arith.constant 0 : i32
    %c0_i32_0 = arith.constant 0 : i32
    %c0_i32_1 = arith.constant 0 : i32
    return %arg0, %c0_i32, %c0_i32_0 : i32, i32, i32
  }
  func.func @transform_8(%arg0: i32) -> (i32, i32, i32) {
    %c0_i32 = arith.constant 0 : i32
    %c0_i32_0 = arith.constant 0 : i32
    %c0_i32_1 = arith.constant 0 : i32
    return %arg0, %c0_i32, %c0_i32_0 : i32, i32, i32
  }
  func.func @transform_9(%arg0: i32) -> (i32, i32, i32) {
    %c0_i32 = arith.constant 0 : i32
    %c0_i32_0 = arith.constant 0 : i32
    %c0_i32_1 = arith.constant 0 : i32
    return %arg0, %c0_i32, %c0_i32_0 : i32, i32, i32
  }
  func.func @transform_10(%arg0: i32) -> (i32, i32) {
    %c0_i32 = arith.constant 0 : i32
    %c0_i32_0 = arith.constant 0 : i32
    %c0_i32_1 = arith.constant 0 : i32
    return %c0_i32, %c0_i32_0 : i32, i32
  }
}

</mosaic_0001>

<llo_original>
// kernel: tile.19
$region0: #{tile.19}
  %s0 = inlined_call_operand.vmem [shape: f32[32,4,32], index: 0, kind: input, shape index: {}]
  %s1 = inlined_call_operand.vmem [shape: f32[32,128], index: 1, kind: output, shape index: {}]
  $region1: #{tile.19} parent=0
    #allocation0 [shape = 'u8[131072]{0}', space=vmem, size = 0x20000, scoped, tag = 'scoped mem for input reshape']
    %s3 = sshll.u32 1, 4
    %s4 = ssub.s32 %s3, 1
    %s5 = smul.addr 4, 31
    %s6 = scalar_lea.vmem %s0, %s5
    %v7 = vld [vmem:[%s6] sm:%s4]
    %s8 = scalar_lea.vmem [#allocation0], 248
    %9 = vst [vmem:[%s8] sm:%s4] %v7
    %s10 = smul.addr 4, 30
    %s11 = scalar_lea.vmem %s0, %s10
    %v12 = vld [vmem:[%s11] sm:%s4]
    %s13 = scalar_lea.vmem [#allocation0], 240
    %14 = vst [vmem:[%s13] sm:%s4] %v12
    %s15 = smul.addr 4, 29
    %s16 = scalar_lea.vmem %s0, %s15
    %v17 = vld [vmem:[%s16] sm:%s4]
    %s18 = scalar_lea.vmem [#allocation0], 232
    %19 = vst [vmem:[%s18] sm:%s4] %v17
    %s20 = smul.addr 4, 28
    %s21 = scalar_lea.vmem %s0, %s20
    %v22 = vld [vmem:[%s21] sm:%s4]
    %s23 = scalar_lea.vmem [#allocation0], 224
    %24 = vst [vmem:[%s23] sm:%s4] %v22
    %s25 = smul.addr 4, 27
    %s26 = scalar_lea.vmem %s0, %s25
    %v27 = vld [vmem:[%s26] sm:%s4]
    %s28 = scalar_lea.vmem [#allocation0], 216
    %29 = vst [vmem:[%s28] sm:%s4] %v27
    %s30 = smul.addr 4, 26
    %s31 = scalar_lea.vmem %s0, %s30
    %v32 = vld [vmem:[%s31] sm:%s4]
    %s33 = scalar_lea.vmem [#allocation0], 208
    %34 = vst [vmem:[%s33] sm:%s4] %v32
    %s35 = smul.addr 4, 25
    %s36 = scalar_lea.vmem %s0, %s35
    %v37 = vld [vmem:[%s36] sm:%s4]
    %s38 = scalar_lea.vmem [#allocation0], 200
    %39 = vst [vmem:[%s38] sm:%s4] %v37
    %s40 = smul.addr 4, 24
    %s41 = scalar_lea.vmem %s0, %s40
    %v42 = vld [vmem:[%s41] sm:%s4]
    %s43 = scalar_lea.vmem [#allocation0], 192
    %44 = vst [vmem:[%s43] sm:%s4] %v42
    %s45 = smul.addr 4, 23
    %s46 = scalar_lea.vmem %s0, %s45
    %v47 = vld [vmem:[%s46] sm:%s4]
    %s48 = scalar_lea.vmem [#allocation0], 184
    %49 = vst [vmem:[%s48] sm:%s4] %v47
    %s50 = smul.addr 4, 22
    %s51 = scalar_lea.vmem %s0, %s50
    %v52 = vld [vmem:[%s51] sm:%s4]
    %s53 = scalar_lea.vmem [#allocation0], 176
    %54 = vst [vmem:[%s53] sm:%s4] %v52
    %s55 = smul.addr 4, 21
    %s56 = scalar_lea.vmem %s0, %s55
    %v57 = vld [vmem:[%s56] sm:%s4]
    %s58 = scalar_lea.vmem [#allocation0], 168
    %59 = vst [vmem:[%s58] sm:%s4] %v57
    %s60 = smul.addr 4, 20
    %s61 = scalar_lea.vmem %s0, %s60
    %v62 = vld [vmem:[%s61] sm:%s4]
    %s63 = scalar_lea.vmem [#allocation0], 160
    %64 = vst [vmem:[%s63] sm:%s4] %v62
    %s65 = smul.addr 4, 19
    %s66 = scalar_lea.vmem %s0, %s65
    %v67 = vld [vmem:[%s66] sm:%s4]
    %s68 = scalar_lea.vmem [#allocation0], 152
    %69 = vst [vmem:[%s68] sm:%s4] %v67
    %s70 = smul.addr 4, 18
    %s71 = scalar_lea.vmem %s0, %s70
    %v72 = vld [vmem:[%s71] sm:%s4]
    %s73 = scalar_lea.vmem [#allocation0], 144
    %74 = vst [vmem:[%s73] sm:%s4] %v72
    %s75 = smul.addr 4, 17
    %s76 = scalar_lea.vmem %s0, %s75
    %v77 = vld [vmem:[%s76] sm:%s4]
    %s78 = scalar_lea.vmem [#allocation0], 136
    %79 = vst [vmem:[%s78] sm:%s4] %v77
    %s80 = smul.addr 4, 16
    %s81 = scalar_lea.vmem %s0, %s80
    %v82 = vld [vmem:[%s81] sm:%s4]
    %s83 = scalar_lea.vmem [#allocation0], 128
    %84 = vst [vmem:[%s83] sm:%s4] %v82
    %s85 = smul.addr 4, 15
    %s86 = scalar_lea.vmem %s0, %s85
    %v87 = vld [vmem:[%s86] sm:%s4]
    %s88 = scalar_lea.vmem [#allocation0], 120
    %89 = vst [vmem:[%s88] sm:%s4] %v87
    %s90 = smul.addr 4, 14
    %s91 = scalar_lea.vmem %s0, %s90
    %v92 = vld [vmem:[%s91] sm:%s4]
    %s93 = scalar_lea.vmem [#allocation0], 112
    %94 = vst [vmem:[%s93] sm:%s4] %v92
    %s95 = smul.addr 4, 13
    %s96 = scalar_lea.vmem %s0, %s95
    %v97 = vld [vmem:[%s96] sm:%s4]
    %s98 = scalar_lea.vmem [#allocation0], 104
    %99 = vst [vmem:[%s98] sm:%s4] %v97
    %s100 = smul.addr 4, 12
    %s101 = scalar_lea.vmem %s0, %s100
    %v102 = vld [vmem:[%s101] sm:%s4]
    %s103 = scalar_lea.vmem [#allocation0], 96
    %104 = vst [vmem:[%s103] sm:%s4] %v102
    %s105 = smul.addr 4, 11
    %s106 = scalar_lea.vmem %s0, %s105
    %v107 = vld [vmem:[%s106] sm:%s4]
    %s108 = scalar_lea.vmem [#allocation0], 88
    %109 = vst [vmem:[%s108] sm:%s4] %v107
    %s110 = smul.addr 4, 10
    %s111 = scalar_lea.vmem %s0, %s110
    %v112 = vld [vmem:[%s111] sm:%s4]
    %s113 = scalar_lea.vmem [#allocation0], 80
    %114 = vst [vmem:[%s113] sm:%s4] %v112
    %s115 = smul.addr 4, 9
    %s116 = scalar_lea.vmem %s0, %s115
    %v117 = vld [vmem:[%s116] sm:%s4]
    %s118 = scalar_lea.vmem [#allocation0], 72
    %119 = vst [vmem:[%s118] sm:%s4] %v117
    %s120 = smul.addr 4, 8
    %s121 = scalar_lea.vmem %s0, %s120
    %v122 = vld [vmem:[%s121] sm:%s4]
    %s123 = scalar_lea.vmem [#allocation0], 64
    %124 = vst [vmem:[%s123] sm:%s4] %v122
    %s125 = smul.addr 4, 7
    %s126 = scalar_lea.vmem %s0, %s125
    %v127 = vld [vmem:[%s126] sm:%s4]
    %s128 = scalar_lea.vmem [#allocation0], 56
    %129 = vst [vmem:[%s128] sm:%s4] %v127
    %s130 = smul.addr 4, 6
    %s131 = scalar_lea.vmem %s0, %s130
    %v132 = vld [vmem:[%s131] sm:%s4]
    %s133 = scalar_lea.vmem [#allocation0], 48
    %134 = vst [vmem:[%s133] sm:%s4] %v132
    %s135 = smul.addr 4, 5
    %s136 = scalar_lea.vmem %s0, %s135
    %v137 = vld [vmem:[%s136] sm:%s4]
    %s138 = scalar_lea.vmem [#allocation0], 40
    %139 = vst [vmem:[%s138] sm:%s4] %v137
    %s140 = smul.addr 4, 4
    %s141 = scalar_lea.vmem %s0, %s140
    %v142 = vld [vmem:[%s141] sm:%s4]
    %s143 = scalar_lea.vmem [#allocation0], 32
    %144 = vst [vmem:[%s143] sm:%s4] %v142
    %s145 = smul.addr 4, 3
    %s146 = scalar_lea.vmem %s0, %s145
    %v147 = vld [vmem:[%s146] sm:%s4]
    %s148 = scalar_lea.vmem [#allocation0], 24
    %149 = vst [vmem:[%s148] sm:%s4] %v147
    %s150 = smul.addr 4, 2
    %s151 = scalar_lea.vmem %s0, %s150
    %v152 = vld [vmem:[%s151] sm:%s4]
    %s153 = scalar_lea.vmem [#allocation0], 16
    %154 = vst [vmem:[%s153] sm:%s4] %v152
    %s155 = scalar_lea.vmem %s0, 4
    %v156 = vld [vmem:[%s155] sm:%s4]
    %s157 = scalar_lea.vmem [#allocation0], 8
    %158 = vst [vmem:[%s157] sm:%s4] %v156
    %v159 = vld [vmem:[%s0] sm:%s4]
    %160 = vst [vmem:[#allocation0] sm:%s4] %v159
    %v161 = vld [vmem:[#allocation0] ss:$8 sm:$0xf]
    %v162 = vld [vmem:[#allocation0] ss:$8 sm:$0xf0]
    %vm163 = vcmask 1047556
    %v164 = vsel %vm163, %v162, %v161
    %vm165 = vcmask 261120
    %166 = vst.msk [vmem:[%s1] sm:$0xff] %vm165, %v164
    %s167 = scalar_lea.vmem [#allocation0], 64
    %v168 = vld [vmem:[%s167] ss:$8 sm:$0xf]
    %s169 = scalar_lea.vmem [#allocation0], 64
    %v170 = vld [vmem:[%s169] ss:$8 sm:$0xf0]
    %vm171 = vcmask 1047556
    %v172 = vsel %vm171, %v170, %v168
    %vm173 = vcmask 261120
    %s174 = scalar_lea.vmem %s1, 8
    %175 = vst.msk [vmem:[%s174] sm:$0xff] %vm173, %v172
    %s176 = scalar_lea.vmem [#allocation0], 128
    %v177 = vld [vmem:[%s176] ss:$8 sm:$0xf]
    %s178 = scalar_lea.vmem [#allocation0], 128
    %v179 = vld [vmem:[%s178] ss:$8 sm:$0xf0]
    %vm180 = vcmask 1047556
    %v181 = vsel %vm180, %v179, %v177
    %vm182 = vcmask 261120
    %s183 = scalar_lea.vmem %s1, 16
    %184 = vst.msk [vmem:[%s183] sm:$0xff] %vm182, %v181
    %s185 = scalar_lea.vmem [#allocation0], 192
    %v186 = vld [vmem:[%s185] ss:$8 sm:$0xf]
    %s187 = scalar_lea.vmem [#allocation0], 192
    %v188 = vld [vmem:[%s187] ss:$8 sm:$0xf0]
    %vm189 = vcmask 1047556
    %v190 = vsel %vm189, %v188, %v186
    %vm191 = vcmask 261120
    %s192 = scalar_lea.vmem %s1, 24
    %193 = vst.msk [vmem:[%s192] sm:$0xff] %vm191, %v190
    %s194 = scalar_lea.vmem [#allocation0], 3
    %v195 = vld [vmem:[%s194] ss:$8 sm:$0xf]
    %s196 = scalar_lea.vmem [#allocation0], 3
    %v197 = vld [vmem:[%s196] ss:$8 sm:$0xf0]
    %vm198 = vcmask 1047556
    %v199 = vsel %vm198, %v197, %v195
    %200 = vrot.lane.b32.xlu0 %v199, 96
    %v201 = vpop.permute.xlu0 %200
    %vm202 = vcmask 1048320
    %203 = vst.msk [vmem:[%s1] sm:$0xff] %vm202, %v201
    %s204 = scalar_lea.vmem [#allocation0], 67
    %v205 = vld [vmem:[%s204] ss:$8 sm:$0xf]
    %s206 = scalar_lea.vmem [#allocation0], 67
    %v207 = vld [vmem:[%s206] ss:$8 sm:$0xf0]
    %vm208 = vcmask 1047556
    %v209 = vsel %vm208, %v207, %v205
    %210 = vrot.lane.b32.xlu0 %v209, 96
    %v211 = vpop.permute.xlu0 %210
    %vm212 = vcmask 1048320
    %s213 = scalar_lea.vmem %s1, 8
    %214 = vst.msk [vmem:[%s213] sm:$0xff] %vm212, %v211
    %s215 = scalar_lea.vmem [#allocation0], 131
    %v216 = vld [vmem:[%s215] ss:$8 sm:$0xf]
    %s217 = scalar_lea.vmem [#allocation0], 131
    %v218 = vld [vmem:[%s217] ss:$8 sm:$0xf0]
    %vm219 = vcmask 1047556
    %v220 = vsel %vm219, %v218, %v216
    %221 = vrot.lane.b32.xlu0 %v220, 96
    %v222 = vpop.permute.xlu0 %221
    %vm223 = vcmask 1048320
    %s224 = scalar_lea.vmem %s1, 16
    %225 = vst.msk [vmem:[%s224] sm:$0xff] %vm223, %v222
    %s226 = scalar_lea.vmem [#allocation0], 195
    %v227 = vld [vmem:[%s226] ss:$8 sm:$0xf]
    %s228 = scalar_lea.vmem [#allocation0], 195
    %v229 = vld [vmem:[%s228] ss:$8 sm:$0xf0]
    %vm230 = vcmask 1047556
    %v231 = vsel %vm230, %v229, %v227
    %232 = vrot.lane.b32.xlu0 %v231, 96
    %v233 = vpop.permute.xlu0 %232
    %vm234 = vcmask 1048320
    %s235 = scalar_lea.vmem %s1, 24
    %236 = vst.msk [vmem:[%s235] sm:$0xff] %vm234, %v233
    %s237 = scalar_lea.vmem [#allocation0], 2
    %v238 = vld [vmem:[%s237] ss:$8 sm:$0xf]
    %s239 = scalar_lea.vmem [#allocation0], 2
    %v240 = vld [vmem:[%s239] ss:$8 sm:$0xf0]
    %vm241 = vcmask 1047556
    %v242 = vsel %vm241, %v240, %v238
    %243 = vrot.lane.b32.xlu0 %v242, 64
    %v244 = vpop.permute.xlu0 %243
    %vm245 = vcmask 785920
    %246 = vst.msk [vmem:[%s1] sm:$0xff] %vm245, %v244
    %s247 = scalar_lea.vmem [#allocation0], 66
    %v248 = vld [vmem:[%s247] ss:$8 sm:$0xf]
    %s249 = scalar_lea.vmem [#allocation0], 66
    %v250 = vld [vmem:[%s249] ss:$8 sm:$0xf0]
    %vm251 = vcmask 1047556
    %v252 = vsel %vm251, %v250, %v248
    %253 = vrot.lane.b32.xlu0 %v252, 64
    %v254 = vpop.permute.xlu0 %253
    %vm255 = vcmask 785920
    %s256 = scalar_lea.vmem %s1, 8
    %257 = vst.msk [vmem:[%s256] sm:$0xff] %vm255, %v254
    %s258 = scalar_lea.vmem [#allocation0], 130
    %v259 = vld [vmem:[%s258] ss:$8 sm:$0xf]
    %s260 = scalar_lea.vmem [#allocation0], 130
    %v261 = vld [vmem:[%s260] ss:$8 sm:$0xf0]
    %vm262 = vcmask 1047556
    %v263 = vsel %vm262, %v261, %v259
    %264 = vrot.lane.b32.xlu0 %v263, 64
    %v265 = vpop.permute.xlu0 %264
    %vm266 = vcmask 785920
    %s267 = scalar_lea.vmem %s1, 16
    %268 = vst.msk [vmem:[%s267] sm:$0xff] %vm266, %v265
    %s269 = scalar_lea.vmem [#allocation0], 194
    %v270 = vld [vmem:[%s269] ss:$8 sm:$0xf]
    %s271 = scalar_lea.vmem [#allocation0], 194
    %v272 = vld [vmem:[%s271] ss:$8 sm:$0xf0]
    %vm273 = vcmask 1047556
    %v274 = vsel %vm273, %v272, %v270
    %275 = vrot.lane.b32.xlu0 %v274, 64
    %v276 = vpop.permute.xlu0 %275
    %vm277 = vcmask 785920
    %s278 = scalar_lea.vmem %s1, 24
    %279 = vst.msk [vmem:[%s278] sm:$0xff] %vm277, %v276
    %s280 = scalar_lea.vmem [#allocation0], 1
    %v281 = vld [vmem:[%s280] ss:$8 sm:$0xf]
    %s282 = scalar_lea.vmem [#allocation0], 1
    %v283 = vld [vmem:[%s282] ss:$8 sm:$0xf0]
    %vm284 = vcmask 1047556
    %v285 = vsel %vm284, %v283, %v281
    %286 = vrot.lane.b32.xlu0 %v285, 32
    %v287 = vpop.permute.xlu0 %286
    %vm288 = vcmask 523520
    %289 = vst.msk [vmem:[%s1] sm:$0xff] %vm288, %v287
    %s290 = scalar_lea.vmem [#allocation0], 65
    %v291 = vld [vmem:[%s290] ss:$8 sm:$0xf]
    %s292 = scalar_lea.vmem [#allocation0], 65
    %v293 = vld [vmem:[%s292] ss:$8 sm:$0xf0]
    %vm294 = vcmask 1047556
    %v295 = vsel %vm294, %v293, %v291
    %296 = vrot.lane.b32.xlu0 %v295, 32
    %v297 = vpop.permute.xlu0 %296
    %vm298 = vcmask 523520
    %s299 = scalar_lea.vmem %s1, 8
    %300 = vst.msk [vmem:[%s299] sm:$0xff] %vm298, %v297
    %s301 = scalar_lea.vmem [#allocation0], 129
    %v302 = vld [vmem:[%s301] ss:$8 sm:$0xf]
    %s303 = scalar_lea.vmem [#allocation0], 129
    %v304 = vld [vmem:[%s303] ss:$8 sm:$0xf0]
    %vm305 = vcmask 1047556
    %v306 = vsel %vm305, %v304, %v302
    %307 = vrot.lane.b32.xlu0 %v306, 32
    %v308 = vpop.permute.xlu0 %307
    %vm309 = vcmask 523520
    %s310 = scalar_lea.vmem %s1, 16
    %311 = vst.msk [vmem:[%s310] sm:$0xff] %vm309, %v308
    %s312 = scalar_lea.vmem [#allocation0], 193
    %v313 = vld [vmem:[%s312] ss:$8 sm:$0xf]
    %s314 = scalar_lea.vmem [#allocation0], 193
    %v315 = vld [vmem:[%s314] ss:$8 sm:$0xf0]
    %vm316 = vcmask 1047556
    %v317 = vsel %vm316, %v315, %v313
    %318 = vrot.lane.b32.xlu0 %v317, 32
    %v319 = vpop.permute.xlu0 %318
    %vm320 = vcmask 523520
    %s321 = scalar_lea.vmem %s1, 24
    %322 = vst.msk [vmem:[%s321] sm:$0xff] %vm320, %v319

// kernel: _forward_jit.1
$region0: #{_forward_jit.1}
  #allocation0 [shape = 'u32[]', space=smem, size = 0x4, offset = 0x4, fixed_abs, tag = 'smem constant byte address 0x4 - core index']
  #allocation1 [shape = 'u32[144,128]{1,0:T(1,128)}', space=vmem, size = 0x12000, scoped, tag = 'internal scratch']
  %s0 = inlined_call_operand.vmem [shape: f32[32,128], index: 0, kind: input, shape index: {}]
  %s1 = inlined_call_operand.vmem [shape: f32[32,128], index: 1, kind: input, shape index: {}]
  %s2 = inlined_call_operand.vmem [shape: f32[32,128], index: 2, kind: input, shape index: {}]
  %s3 = inlined_call_operand.vmem [shape: f32[128,32], index: 3, kind: input, shape index: {}]
  %s4 = inlined_call_operand.vmem [shape: f32[2,1,128], index: 4, kind: input, shape index: {}]
  %s5 = inlined_call_operand.vmem [shape: f32[2,1,128], index: 5, kind: input, shape index: {}]
  %s6 = inlined_call_operand.vmem [shape: bf16[2,128,640], index: 6, kind: input, shape index: {}]
  %s7 = inlined_call_operand.vmem [shape: bf16[2,128,128], index: 7, kind: input, shape index: {}]
  %s8 = inlined_call_operand.vmem [shape: bf16[2,128,512], index: 8, kind: input, shape index: {}]
  %s9 = inlined_call_operand.hbm [shape: bf16[2,256,128], index: 9, kind: input, shape index: {}]
  %s10 = inlined_call_operand.vmem [shape: f32[32,128], index: 10, kind: output, shape index: {}]
  %s11 = sld [smem:[#allocation0]]
  $region81: #{_forward_jit.1} parent=0
    _
  %s13 = ssub.s32 1, %s11
  %s14 = scalar_select 0, %s13, %s11
  $region1: #{_forward_jit.1} parent=0
    #allocation2 [shape = 'u8[131072]{0}', space=vmem, size = 0x20000, scoped, tag = 'input window, operand 9']
    #allocation3 [shape = 's32[2]{0}', space=sflag, size = 0x8, scoped, tag = 'scoped memory for _forward_jit.1']
    %15 = vsyncpa [#allocation3], 0
    %s16 = scalar_lea.sflag [#allocation3], 1
    %17 = vsyncpa %s16, 0
    loop: start=0, step=1, limit=4
    $region2: #{_forward_jit.1} parent=1 // loop_pre_header
      _
    $region3: #{_forward_jit.1} parent=1 // loop_header
      %s19 = sphi 0, %s23
      %p20 = scmp.ge.s32.totalorder %s19, 4
      %s27 = sphi 0, %s27
      %s29 = sphi 0, %s27
      %s30 = sphi 0, %s29
      %s44 = sphi 0, %s30
      %s48 = sphi 0, %s48
      %s50 = sphi 0, %s48
      %s51 = sphi 0, %s50
      %s65 = sphi 0, %s51
      %s69 = sphi 0, %s69
      %s71 = sphi 0, %s69
      %s72 = sphi 0, %s71
      %s86 = sphi 0, %s72
      %s90 = sphi 0, %s90
      %s92 = sphi 0, %s90
      %s93 = sphi 0, %s92
      %s107 = sphi 0, %s93
      %s113 = sphi 0, %s115
      %s116 = sphi 0, %s113
      %s117 = sphi 0, %s116
      %s133 = sphi 0, %s117
      %s139 = sphi 0, %s141
      %s142 = sphi 0, %s139
      %s143 = sphi 0, %s142
      %s159 = sphi 0, %s143
      %s165 = sphi 0, %s167
      %s168 = sphi 0, %s165
      %s169 = sphi 0, %s168
      %s185 = sphi 0, %s169
      %s191 = sphi 0, %s193
      %s194 = sphi 0, %s191
      %s195 = sphi 0, %s194
      %s211 = sphi 0, %s195
      %s217 = sphi 0, %s219
      %s220 = sphi 0, %s217
      %s221 = sphi 0, %s220
      %s237 = sphi 0, %s221
      %s243 = sphi 0, %s245
      %s246 = sphi 0, %s243
      %s247 = sphi 0, %s246
      %s263 = sphi 0, %s247
      %s267 = sphi 0, %s267
      %s269 = sphi 0, %s267
      %s270 = sphi 0, %s269
      %s284 = sphi 0, %s270
    $region4: #{_forward_jit.1} parent=1 // loop_header_branch
      %22 = sbr.rel (%p20) target = $region8
    $region5: #{_forward_jit.1} parent=1 // loop_body
      %s24 = ssub.s32 %s19, 1
      %s25 = ssub.s32 %s19, 2
      %s26 = sadd.s32 %s19, 1
      %s28 = sadd.s32 %s27, 1
      %p31 = scmp.eq.s32.totalorder %s19, 1
      %p32 = scmp.ne.s32.totalorder %s27, %s29
      %p33 = scmp.eq.s32.totalorder %s19, 0
      %p34 = por %p32, %p33
      %p35 = scmp.ne.s32.totalorder %s27, %s29
      %p36 = scmp.eq.s32.totalorder %s24, 1
      %p37 = por %p35, %p36
      %p38 = scmp.ne.s32.totalorder %s29, %s30
      %p39 = scmp.eq.s32.totalorder %s24, 0
      %p40 = por %p38, %p39
      %p41 = scmp.ne.s32.totalorder %s29, %s30
      %p42 = scmp.eq.s32.totalorder %s25, 1
      %p43 = por %p41, %p42
      %p45 = scmp.ne.s32.totalorder %s30, %s44
      %p46 = scmp.eq.s32.totalorder %s25, 0
      %p47 = por %p45, %p46
      %s49 = sadd.s32 %s48, 1
      %p52 = scmp.eq.s32.totalorder %s19, 1
      %p53 = scmp.ne.s32.totalorder %s48, %s50
      %p54 = scmp.eq.s32.totalorder %s19, 0
      %p55 = por %p53, %p54
      %p56 = scmp.ne.s32.totalorder %s48, %s50
      %p57 = scmp.eq.s32.totalorder %s24, 1
      %p58 = por %p56, %p57
      %p59 = scmp.ne.s32.totalorder %s50, %s51
      %p60 = scmp.eq.s32.totalorder %s24, 0
      %p61 = por %p59, %p60
      %p62 = scmp.ne.s32.totalorder %s50, %s51
      %p63 = scmp.eq.s32.totalorder %s25, 1
      %p64 = por %p62, %p63
      %p66 = scmp.ne.s32.totalorder %s51, %s65
      %p67 = scmp.eq.s32.totalorder %s25, 0
      %p68 = por %p66, %p67
      %s70 = sadd.s32 %s69, 1
      %p73 = scmp.eq.s32.totalorder %s19, 1
      %p74 = scmp.ne.s32.totalorder %s69, %s71
      %p75 = scmp.eq.s32.totalorder %s19, 0
      %p76 = por %p74, %p75
      %p77 = scmp.ne.s32.totalorder %s69, %s71
      %p78 = scmp.eq.s32.totalorder %s24, 1
      %p79 = por %p77, %p78
      %p80 = scmp.ne.s32.totalorder %s71, %s72
      %p81 = scmp.eq.s32.totalorder %s24, 0
      %p82 = por %p80, %p81
      %p83 = scmp.ne.s32.totalorder %s71, %s72
      %p84 = scmp.eq.s32.totalorder %s25, 1
      %p85 = por %p83, %p84
      %p87 = scmp.ne.s32.totalorder %s72, %s86
      %p88 = scmp.eq.s32.totalorder %s25, 0
      %p89 = por %p87, %p88
      %s91 = sadd.s32 %s90, 1
      %p94 = scmp.eq.s32.totalorder %s19, 1
      %p95 = scmp.ne.s32.totalorder %s90, %s92
      %p96 = scmp.eq.s32.totalorder %s19, 0
      %p97 = por %p95, %p96
      %p98 = scmp.ne.s32.totalorder %s90, %s92
      %p99 = scmp.eq.s32.totalorder %s24, 1
      %p100 = por %p98, %p99
      %p101 = scmp.ne.s32.totalorder %s92, %s93
      %p102 = scmp.eq.s32.totalorder %s24, 0
      %p103 = por %p101, %p102
      %p104 = scmp.ne.s32.totalorder %s92, %s93
      %p105 = scmp.eq.s32.totalorder %s25, 1
      %p106 = por %p104, %p105
      %p108 = scmp.ne.s32.totalorder %s93, %s107
      %p109 = scmp.eq.s32.totalorder %s25, 0
      %p110 = por %p108, %p109
      %s111 = ssub.s32 %s19, %s26
      %p112 = scmp.eq.s32.totalorder %s111, 0
      %s114 = sadd.s32 %s113, 1
      %s115 = scalar_select %p112, %s113, %s114
      %p118 = pneg %p112
      %p119 = scmp.eq.s32.totalorder %s19, 1
      %p120 = por %p118, %p119
      %p121 = scmp.ne.s32.totalorder %s113, %s116
      %p122 = scmp.eq.s32.totalorder %s19, 0
      %p123 = por %p121, %p122
      %p124 = scmp.ne.s32.totalorder %s113, %s116
      %p125 = scmp.eq.s32.totalorder %s24, 1
      %p126 = por %p124, %p125
      %p127 = scmp.ne.s32.totalorder %s116, %s117
      %p128 = scmp.eq.s32.totalorder %s24, 0
      %p129 = por %p127, %p128
      %p130 = scmp.ne.s32.totalorder %s116, %s117
      %p131 = scmp.eq.s32.totalorder %s25, 1
      %p132 = por %p130, %p131
      %p134 = scmp.ne.s32.totalorder %s117, %s133
      %p135 = scmp.eq.s32.totalorder %s25, 0
      %p136 = por %p134, %p135
      %s137 = ssub.s32 %s19, %s26
      %p138 = scmp.eq.s32.totalorder %s137, 0
      %s140 = sadd.s32 %s139, 1
      %s141 = scalar_select %p138, %s139, %s140
      %p144 = pneg %p138
      %p145 = scmp.eq.s32.totalorder %s19, 1
      %p146 = por %p144, %p145
      %p147 = scmp.ne.s32.totalorder %s139, %s142
      %p148 = scmp.eq.s32.totalorder %s19, 0
      %p149 = por %p147, %p148
      %p150 = scmp.ne.s32.totalorder %s139, %s142
      %p151 = scmp.eq.s32.totalorder %s24, 1
      %p152 = por %p150, %p151
      %p153 = scmp.ne.s32.totalorder %s142, %s143
      %p154 = scmp.eq.s32.totalorder %s24, 0
      %p155 = por %p153, %p154
      %p156 = scmp.ne.s32.totalorder %s142, %s143
      %p157 = scmp.eq.s32.totalorder %s25, 1
      %p158 = por %p156, %p157
      %p160 = scmp.ne.s32.totalorder %s143, %s159
      %p161 = scmp.eq.s32.totalorder %s25, 0
      %p162 = por %p160, %p161
      %s163 = ssub.s32 %s19, %s26
      %p164 = scmp.eq.s32.totalorder %s163, 0
      %s166 = sadd.s32 %s165, 1
      %s167 = scalar_select %p164, %s165, %s166
      %p170 = pneg %p164
      %p171 = scmp.eq.s32.totalorder %s19, 1
      %p172 = por %p170, %p171
      %p173 = scmp.ne.s32.totalorder %s165, %s168
      %p174 = scmp.eq.s32.totalorder %s19, 0
      %p175 = por %p173, %p174
      %p176 = scmp.ne.s32.totalorder %s165, %s168
      %p177 = scmp.eq.s32.totalorder %s24, 1
      %p178 = por %p176, %p177
      %p179 = scmp.ne.s32.totalorder %s168, %s169
      %p180 = scmp.eq.s32.totalorder %s24, 0
      %p181 = por %p179, %p180
      %p182 = scmp.ne.s32.totalorder %s168, %s169
      %p183 = scmp.eq.s32.totalorder %s25, 1
      %p184 = por %p182, %p183
      %p186 = scmp.ne.s32.totalorder %s169, %s185
      %p187 = scmp.eq.s32.totalorder %s25, 0
      %p188 = por %p186, %p187
      %s189 = ssub.s32 %s19, %s26
      %p190 = scmp.eq.s32.totalorder %s189, 0
      %s192 = sadd.s32 %s191, 1
      %s193 = scalar_select %p190, %s191, %s192
      %p196 = pneg %p190
      %p197 = scmp.eq.s32.totalorder %s19, 1
      %p198 = por %p196, %p197
      %p199 = scmp.ne.s32.totalorder %s191, %s194
      %p200 = scmp.eq.s32.totalorder %s19, 0
      %p201 = por %p199, %p200
      %p202 = scmp.ne.s32.totalorder %s191, %s194
      %p203 = scmp.eq.s32.totalorder %s24, 1
      %p204 = por %p202, %p203
      %p205 = scmp.ne.s32.totalorder %s194, %s195
      %p206 = scmp.eq.s32.totalorder %s24, 0
      %p207 = por %p205, %p206
      %p208 = scmp.ne.s32.totalorder %s194, %s195
      %p209 = scmp.eq.s32.totalorder %s25, 1
      %p210 = por %p208, %p209
      %p212 = scmp.ne.s32.totalorder %s195, %s211
      %p213 = scmp.eq.s32.totalorder %s25, 0
      %p214 = por %p212, %p213
      %s215 = ssub.s32 %s19, %s26
      %p216 = scmp.eq.s32.totalorder %s215, 0
      %s218 = sadd.s32 %s217, 1
      %s219 = scalar_select %p216, %s217, %s218
      %p222 = pneg %p216
      %p223 = scmp.eq.s32.totalorder %s19, 1
      %p224 = por %p222, %p223
      %p225 = scmp.ne.s32.totalorder %s217, %s220
      %p226 = scmp.eq.s32.totalorder %s19, 0
      %p227 = por %p225, %p226
      %p228 = scmp.ne.s32.totalorder %s217, %s220
      %p229 = scmp.eq.s32.totalorder %s24, 1
      %p230 = por %p228, %p229
      %p231 = scmp.ne.s32.totalorder %s220, %s221
      %p232 = scmp.eq.s32.totalorder %s24, 0
      %p233 = por %p231, %p232
      %p234 = scmp.ne.s32.totalorder %s220, %s221
      %p235 = scmp.eq.s32.totalorder %s25, 1
      %p236 = por %p234, %p235
      %p238 = scmp.ne.s32.totalorder %s221, %s237
      %p239 = scmp.eq.s32.totalorder %s25, 0
      %p240 = por %p238, %p239
      %s241 = ssub.s32 %s19, %s26
      %p242 = scmp.eq.s32.totalorder %s241, 0
      %s244 = sadd.s32 %s243, 1
      %s245 = scalar_select %p242, %s243, %s244
      %p248 = pneg %p242
      %p249 = scmp.eq.s32.totalorder %s19, 1
      %p250 = por %p248, %p249
      %p251 = scmp.ne.s32.totalorder %s243, %s246
      %p252 = scmp.eq.s32.totalorder %s19, 0
      %p253 = por %p251, %p252
      %p254 = scmp.ne.s32.totalorder %s243, %s246
      %p255 = scmp.eq.s32.totalorder %s24, 1
      %p256 = por %p254, %p255
      %p257 = scmp.ne.s32.totalorder %s246, %s247
      %p258 = scmp.eq.s32.totalorder %s24, 0
      %p259 = por %p257, %p258
      %p260 = scmp.ne.s32.totalorder %s246, %s247
      %p261 = scmp.eq.s32.totalorder %s25, 1
      %p262 = por %p260, %p261
      %p264 = scmp.ne.s32.totalorder %s247, %s263
      %p265 = scmp.eq.s32.totalorder %s25, 0
      %p266 = por %p264, %p265
      %s268 = sadd.s32 %s267, 1
      %p271 = scmp.eq.s32.totalorder %s19, 1
      %p272 = scmp.ne.s32.totalorder %s267, %s269
      %p273 = scmp.eq.s32.totalorder %s19, 0
      %p274 = por %p272, %p273
      %p275 = scmp.ne.s32.totalorder %s267, %s269
      %p276 = scmp.eq.s32.totalorder %s24, 1
      %p277 = por %p275, %p276
      %p278 = scmp.ne.s32.totalorder %s269, %s270
      %p279 = scmp.eq.s32.totalorder %s24, 0
      %p280 = por %p278, %p279
      %p281 = scmp.ne.s32.totalorder %s269, %s270
      %p282 = scmp.eq.s32.totalorder %s25, 1
      %p283 = por %p281, %p282
      %p285 = scmp.ne.s32.totalorder %s270, %s284
      %p286 = scmp.eq.s32.totalorder %s25, 0
      %p287 = por %p285, %p286
      %p288 = scmp.le.s32.totalorder 1, %s19
      %p289 = scmp.lt.s32.totalorder %s19, 3
      %p290 = pnand %p288, %p289
      %p291 = pneg %p290
      // Predicated region
      $region9: #{_forward_jit.1} parent=5 // pred_check
        _
      $region10: #{_forward_jit.1} parent=5 // pred_check_branch
        %293 = sbr.rel (%p290) target = $region12
      $region11: #{_forward_jit.1} parent=5 // pred_region
        %s294 = ssub.s32 %s19, 1
        // Predicated region
        $region13: #{_forward_jit.1} parent=11 // pred_check
          %p295 = pneg %p40
        $region14: #{_forward_jit.1} parent=11 // pred_check_branch
          %297 = sbr.rel (%p295) target = $region16
        $region15: #{_forward_jit.1} parent=11 // pred_region
          _
        $region16: #{_forward_jit.1} parent=11 // pred_fallthru
          _
        // Predicated region
        $region17: #{_forward_jit.1} parent=11 // pred_check
          %p298 = pneg %p61
        $region18: #{_forward_jit.1} parent=11 // pred_check_branch
          %300 = sbr.rel (%p298) target = $region20
        $region19: #{_forward_jit.1} parent=11 // pred_region
          _
        $region20: #{_forward_jit.1} parent=11 // pred_fallthru
          _
        // Predicated region
        $region21: #{_forward_jit.1} parent=11 // pred_check
          %p301 = pneg %p82
        $region22: #{_forward_jit.1} parent=11 // pred_check_branch
          %303 = sbr.rel (%p301) target = $region24
        $region23: #{_forward_jit.1} parent=11 // pred_region
          _
        $region24: #{_forward_jit.1} parent=11 // pred_fallthru
          _
        // Predicated region
        $region25: #{_forward_jit.1} parent=11 // pred_check
          %p304 = pneg %p103
        $region26: #{_forward_jit.1} parent=11 // pred_check_branch
          %306 = sbr.rel (%p304) target = $region28
        $region27: #{_forward_jit.1} parent=11 // pred_region
          _
        $region28: #{_forward_jit.1} parent=11 // pred_fallthru
          _
      $region12: #{_forward_jit.1} parent=5 // pred_fallthru
        _
      %p307 = scmp.lt.s32.totalorder %s19, 2
      // Predicated region
      $region29: #{_forward_jit.1} parent=5 // pred_check
        %p308 = pneg %p307
      $region30: #{_forward_jit.1} parent=5 // pred_check_branch
        %310 = sbr.rel (%p308) target = $region32
      $region31: #{_forward_jit.1} parent=5 // pred_region
        // Predicated region
        $region33: #{_forward_jit.1} parent=31 // pred_check
          %p311 = pneg %p123
        $region34: #{_forward_jit.1} parent=31 // pred_check_branch
          %313 = sbr.rel (%p311) target = $region36
        $region35: #{_forward_jit.1} parent=31 // pred_region
          %p314 = scmp.lt.s32.totalorder %s19, 1
          %s315 = scalar_select %p314, %s19, 1
          %s316 = scalar_lea.vmem %s4, %s315
        $region36: #{_forward_jit.1} parent=31 // pred_fallthru
          _
        // Predicated region
        $region37: #{_forward_jit.1} parent=31 // pred_check
          %p317 = pneg %p149
        $region38: #{_forward_jit.1} parent=31 // pred_check_branch
          %319 = sbr.rel (%p317) target = $region40
        $region39: #{_forward_jit.1} parent=31 // pred_region
          %p320 = scmp.lt.s32.totalorder %s19, 1
          %s321 = scalar_select %p320, %s19, 1
          %s322 = scalar_lea.vmem %s5, %s321
        $region40: #{_forward_jit.1} parent=31 // pred_fallthru
          _
        // Predicated region
        $region41: #{_forward_jit.1} parent=31 // pred_check
          %p323 = pneg %p175
        $region42: #{_forward_jit.1} parent=31 // pred_check_branch
          %325 = sbr.rel (%p323) target = $region44
        $region43: #{_forward_jit.1} parent=31 // pred_region
          %p326 = scmp.lt.s32.totalorder %s19, 1
          %s327 = scalar_select %p326, %s19, 1
          %s328 = smul.addr %s327, 80
          %s329 = smul.addr %s328, 4
          %s330 = scalar_lea.vmem %s6, %s329
        $region44: #{_forward_jit.1} parent=31 // pred_fallthru
          _
        // Predicated region
        $region45: #{_forward_jit.1} parent=31 // pred_check
          %p331 = pneg %p201
        $region46: #{_forward_jit.1} parent=31 // pred_check_branch
          %333 = sbr.rel (%p331) target = $region48
        $region47: #{_forward_jit.1} parent=31 // pred_region
          %p334 = scmp.lt.s32.totalorder %s19, 1
          %s335 = scalar_select %p334, %s19, 1
          %s336 = smul.addr %s335, 16
          %s337 = smul.addr %s336, 4
          %s338 = scalar_lea.vmem %s7, %s337
        $region48: #{_forward_jit.1} parent=31 // pred_fallthru
          _
        // Predicated region
        $region49: #{_forward_jit.1} parent=31 // pred_check
          %p339 = pneg %p227
        $region50: #{_forward_jit.1} parent=31 // pred_check_branch
          %341 = sbr.rel (%p339) target = $region52
        $region51: #{_forward_jit.1} parent=31 // pred_region
          %p342 = scmp.lt.s32.totalorder %s19, 1
          %s343 = scalar_select %p342, %s19, 1
          %s344 = smul.addr %s343, 64
          %s345 = smul.addr %s344, 4
          %s346 = scalar_lea.vmem %s8, %s345
        $region52: #{_forward_jit.1} parent=31 // pred_fallthru
          _
        // Predicated region
        $region53: #{_forward_jit.1} parent=31 // pred_check
          %p347 = pneg %p253
        $region54: #{_forward_jit.1} parent=31 // pred_check_branch
          %349 = sbr.rel (%p347) target = $region56
        $region55: #{_forward_jit.1} parent=31 // pred_region
          %s350 = sand.u32 %s243, 1
          %s351 = scalar_lea.sflag [#allocation3], %s350
          %s352 = sand.u32 %s243, 1
          %s353 = smul.addr %s352, 128
          %s354 = scalar_lea.vmem [#allocation2], %s353
          %s356 = ssub.s32 2048, 2048
          %357 = vsyncadd %s351, %s356
          %s358 = smul.addr %s19, 32
          %s359 = smul.addr %s358, 64
          %s360 = scalar_lea.hbm %s9, %s359
          %s361 = sshll.u32 %s354, 4
          %s362 = int_to_ptr.vmem [resolvable:$true] %s361
          %367 = dma.hbm_to_vmem [thread:$0]  %s360, 2048, %s362, %s351, 64, 64, 4
        $region56: #{_forward_jit.1} parent=31 // pred_fallthru
          _
      $region32: #{_forward_jit.1} parent=5 // pred_fallthru
        _
      %p368 = scmp.le.s32.totalorder 1, %s19
      %p369 = scmp.lt.s32.totalorder %s19, 3
      %p370 = pnand %p368, %p369
      %p371 = pneg %p370
      // Predicated region
      $region57: #{_forward_jit.1} parent=5 // pred_check
        _
      $region58: #{_forward_jit.1} parent=5 // pred_check_branch
        %373 = sbr.rel (%p370) target = $region60
      $region59: #{_forward_jit.1} parent=5 // pred_region
        %s374 = ssub.s32 %s19, 1
        %s375 = sand.u32 %s246, 1
        %s376 = scalar_lea.sflag [#allocation3], %s375
        %s377 = sand.u32 %s246, 1
        %s378 = smul.addr %s377, 128
        %s379 = scalar_lea.vmem [#allocation2], %s378
        // Predicated region
        $region61: #{_forward_jit.1} parent=59 // pred_check
          %p380 = pneg %p259
        $region62: #{_forward_jit.1} parent=59 // pred_check_branch
          %382 = sbr.rel (%p380) target = $region64
        $region63: #{_forward_jit.1} parent=59 // pred_region
          %383 = dma.done %s376, 2048
        $region64: #{_forward_jit.1} parent=59 // pred_fallthru
          _
        %p384 = pneg %p40
        %p385 = pneg %p37
        %p386 = pneg %p61
        %p387 = pneg %p58
        %p388 = pneg %p82
        %p389 = pneg %p79
        %p390 = pneg %p103
        %p391 = pneg %p100
        %p392 = scmp.lt.s32.totalorder %s24, 1
        %s393 = scalar_select %p392, %s24, 1
        %s394 = scalar_lea.vmem %s4, %s393
        %p395 = pneg %p129
        %p396 = pneg %p126
        %p397 = scmp.lt.s32.totalorder %s24, 1
        %s398 = scalar_select %p397, %s24, 1
        %s399 = scalar_lea.vmem %s5, %s398
        %p400 = pneg %p155
        %p401 = pneg %p152
        %p402 = scmp.lt.s32.totalorder %s24, 1
        %s403 = scalar_select %p402, %s24, 1
        %s404 = smul.addr %s403, 80
        %s405 = smul.addr %s404, 4
        %s406 = scalar_lea.vmem %s6, %s405
        %p407 = pneg %p181
        %p408 = pneg %p178
        %p409 = scmp.lt.s32.totalorder %s24, 1
        %s410 = scalar_select %p409, %s24, 1
        %s411 = smul.addr %s410, 16
        %s412 = smul.addr %s411, 4
        %s413 = scalar_lea.vmem %s7, %s412
        %p414 = pneg %p207
        %p415 = pneg %p204
        %p416 = scmp.lt.s32.totalorder %s24, 1
        %s417 = scalar_select %p416, %s24, 1
        %s418 = smul.addr %s417, 64
        %s419 = smul.addr %s418, 4
        %s420 = scalar_lea.vmem %s8, %s419
        %p421 = pneg %p233
        %p422 = pneg %p230
        %s423 = sand.u32 %s246, 1
        %s424 = scalar_lea.sflag [#allocation3], %s423
        %s425 = sand.u32 %s246, 1
        %s426 = smul.addr %s425, 128
        %s427 = scalar_lea.vmem [#allocation2], %s426
        %p428 = pneg %p259
        %p429 = pneg %p256
        %p430 = pneg %p280
        %p431 = pneg %p277
        %p432 = scmp.lt.s32.totalorder %s24, 1
        %s433 = scalar_select %p432, %s24, 1
        %s434 = scalar_lea.vmem %s4, %s433
        %p435 = scmp.lt.s32.totalorder %s24, 1
        %s436 = scalar_select %p435, %s24, 1
        %s437 = scalar_lea.vmem %s5, %s436
        %p438 = scmp.lt.s32.totalorder %s24, 1
        %s439 = scalar_select %p438, %s24, 1
        %s440 = smul.addr %s439, 80
        %s441 = smul.addr %s440, 4
        %s442 = scalar_lea.vmem %s6, %s441
        %p443 = scmp.lt.s32.totalorder %s24, 1
        %s444 = scalar_select %p443, %s24, 1
        %s445 = smul.addr %s444, 16
        %s446 = smul.addr %s445, 4
        %s447 = scalar_lea.vmem %s7, %s446
        %p448 = scmp.lt.s32.totalorder %s24, 1
        %s449 = scalar_select %p448, %s24, 1
        %s450 = smul.addr %s449, 64
        %s451 = smul.addr %s450, 4
        %s452 = scalar_lea.vmem %s8, %s451
        %p454 = scmp.eq.s32.totalorder %s24, 0
        // Predicated region
        $region65: #{_forward_jit.1} parent=59 // pred_check
          %p455 = pneg %p454
        $region66: #{_forward_jit.1} parent=59 // pred_check_branch
          %457 = sbr.rel (%p455) target = $region68
        $region67: #{_forward_jit.1} parent=59 // pred_region
          %v458 = vld [vmem:[%s0] sm:$0xff]
          %v459 = vld [vmem:[%s0 + $0x8] sm:$0xff]
          %v460 = vld [vmem:[%s0 + $0x10] sm:$0xff]
          %v461 = vld [vmem:[%s0 + $0x18] sm:$0xff]
          %462 = vst [vmem:[%s10] sm:$0xff] %v458
          %463 = vst [vmem:[%s10 + $0x8] sm:$0xff] %v459
          %464 = vst [vmem:[%s10 + $0x10] sm:$0xff] %v460
          %465 = vst [vmem:[%s10 + $0x18] sm:$0xff] %v461
        $region68: #{_forward_jit.1} parent=59 // pred_fallthru
          _
        %v466 = vld [vmem:[%s10] sm:$0xff]
        %v467 = vld [vmem:[%s10 + $0x8] sm:$0xff]
        %v468 = vld [vmem:[%s10 + $0x10] sm:$0xff]
        %v469 = vld [vmem:[%s10 + $0x18] sm:$0xff]
        %v470 = vmul.f32 %v466, %v466
        %v471 = vmul.f32 %v467, %v467
        %v472 = vmul.f32 %v468, %v468
        %v473 = vmul.f32 %v469, %v469
        %474 = vadd.xlane.f32.xlu0 %v470
        %v475 = vpop.xlane.xlu0 %474
        %476 = vadd.xlane.f32.xlu0 %v471
        %v477 = vpop.xlane.xlu0 %476
        %478 = vadd.xlane.f32.xlu0 %v472
        %v479 = vpop.xlane.xlu0 %478
        %480 = vadd.xlane.f32.xlu0 %v473
        %v481 = vpop.xlane.xlu0 %480
        %v482 = vrcp.pop 128.0
        %v483 = vmul.f32 %v475, %v482
        %v484 = vmul.f32 %v477, %v482
        %v485 = vmul.f32 %v479, %v482
        %v486 = vmul.f32 %v481, %v482
        %v487 = vadd.f32 %v483, 1e-05
        %v488 = vadd.f32 %v484, 1e-05
        %v489 = vadd.f32 %v485, 1e-05
        %v490 = vadd.f32 %v486, 1e-05
        %v491 = vrsqrt.pop %v487
        %v492 = vrsqrt.pop %v488
        %v493 = vrsqrt.pop %v489
        %v494 = vrsqrt.pop %v490
        %v495 = vmul.f32 %v466, %v491
        %v496 = vmul.f32 %v467, %v492
        %v497 = vmul.f32 %v468, %v493
        %v498 = vmul.f32 %v469, %v494
        %v499 = vld [vmem:[%s434] sm:$0x1]
        %v501 = vlaneseq
        %v502 = vshrl.u32 %v501, 7
        %v503 = vsub.s32 0, %v502
        %v504 = vrot.slane %v499, %v503
        %v506 = vmul.f32 %v495, %v504
        %v507 = vmul.f32 %v496, %v504
        %v508 = vmul.f32 %v497, %v504
        %v509 = vmul.f32 %v498, %v504
        %v510 = vpack.c.bf16 %v507, %v506
        %v511 = vpack.c.bf16 %v509, %v508
        %v512 = vld [vmem:[%s442] sm:$0xff]
        %v513 = vld [vmem:[%s442 + $0x8] sm:$0xff]
        %v514 = vld [vmem:[%s442 + $0x10] sm:$0xf]
        %v515 = vld [vmem:[%s442 + $0x14] sm:$0xff]
        %v516 = vld [vmem:[%s442 + $0x1c] sm:$0xff]
        %v517 = vld [vmem:[%s442 + $0x24] sm:$0xf]
        %v518 = vld [vmem:[%s442 + $0x28] sm:$0xff]
        %v519 = vld [vmem:[%s442 + $0x30] sm:$0xff]
        %v520 = vld [vmem:[%s442 + $0x38] sm:$0xf]
        %v521 = vld [vmem:[%s442 + $0x3c] sm:$0xff]
        %v522 = vld [vmem:[%s442 + $0x44] sm:$0xff]
        %v523 = vld [vmem:[%s442 + $0x4c] sm:$0xf]
        %v524 = vld [vmem:[%s442 + $0x50] sm:$0xff]
        %v525 = vld [vmem:[%s442 + $0x58] sm:$0xff]
        %v526 = vld [vmem:[%s442 + $0x60] sm:$0xf]
        %v527 = vld [vmem:[%s442 + $0x64] sm:$0xff]
        %v528 = vld [vmem:[%s442 + $0x6c] sm:$0xff]
        %v529 = vld [vmem:[%s442 + $0x74] sm:$0xf]
        %v530 = vld [vmem:[%s442 + $0x78] sm:$0xff]
        %v531 = vld [vmem:[%s442 + $0x80] sm:$0xff]
        %v532 = vld [vmem:[%s442 + $0x88] sm:$0xf]
        %v533 = vld [vmem:[%s442 + $0x8c] sm:$0xff]
        %v534 = vld [vmem:[%s442 + $0x94] sm:$0xff]
        %v535 = vld [vmem:[%s442 + $0x9c] sm:$0xf]
        %v536 = vld [vmem:[%s442 + $0xa0] sm:$0xff]
        %v537 = vld [vmem:[%s442 + $0xa8] sm:$0xff]
        %v538 = vld [vmem:[%s442 + $0xb0] sm:$0xf]
        %v539 = vld [vmem:[%s442 + $0xb4] sm:$0xff]
        %v540 = vld [vmem:[%s442 + $0xbc] sm:$0xff]
        %v541 = vld [vmem:[%s442 + $0xc4] sm:$0xf]
        %v542 = vld [vmem:[%s442 + $0xc8] sm:$0xff]
        %v543 = vld [vmem:[%s442 + $0xd0] sm:$0xff]
        %v544 = vld [vmem:[%s442 + $0xd8] sm:$0xf]
        %v545 = vld [vmem:[%s442 + $0xdc] sm:$0xff]
        %v546 = vld [vmem:[%s442 + $0xe4] sm:$0xff]
        %v547 = vld [vmem:[%s442 + $0xec] sm:$0xf]
        %v548 = vld [vmem:[%s442 + $0xf0] sm:$0xff]
        %v549 = vld [vmem:[%s442 + $0xf8] sm:$0xff]
        %v550 = vld [vmem:[%s442 + $0x100] sm:$0xf]
        %v551 = vld [vmem:[%s442 + $0x104] sm:$0xff]
        %v552 = vld [vmem:[%s442 + $0x10c] sm:$0xff]
        %v553 = vld [vmem:[%s442 + $0x114] sm:$0xf]
        %v554 = vld [vmem:[%s442 + $0x118] sm:$0xff]
        %v555 = vld [vmem:[%s442 + $0x120] sm:$0xff]
        %v556 = vld [vmem:[%s442 + $0x128] sm:$0xf]
        %v557 = vld [vmem:[%s442 + $0x12c] sm:$0xff]
        %v558 = vld [vmem:[%s442 + $0x134] sm:$0xff]
        %v559 = vld [vmem:[%s442 + $0x13c] sm:$0xf]
        %v608 = vunpack.c.l.b16 %v512
        %v609 = vunpack.c.h.b16 %v512
        %v610 = vunpack.c.l.b16 %v513
        %v611 = vunpack.c.h.b16 %v513
        %v612 = vunpack.c.l.b16 %v514
        %v613 = vunpack.c.l.b16 %v515
        %v614 = vunpack.c.h.b16 %v515
        %v615 = vunpack.c.l.b16 %v516
        %v616 = vunpack.c.h.b16 %v516
        %v617 = vunpack.c.l.b16 %v517
        %v618 = vunpack.c.l.b16 %v518
        %v619 = vunpack.c.h.b16 %v518
        %v620 = vunpack.c.l.b16 %v519
        %v621 = vunpack.c.h.b16 %v519
        %v622 = vunpack.c.l.b16 %v520
        %v623 = vunpack.c.l.b16 %v521
        %v624 = vunpack.c.h.b16 %v521
        %v625 = vunpack.c.l.b16 %v522
        %v626 = vunpack.c.h.b16 %v522
        %v627 = vunpack.c.l.b16 %v523
        %v628 = vunpack.c.l.b16 %v524
        %v629 = vunpack.c.h.b16 %v524
        %v630 = vunpack.c.l.b16 %v525
        %v631 = vunpack.c.h.b16 %v525
        %v632 = vunpack.c.l.b16 %v526
        %v633 = vunpack.c.l.b16 %v527
        %v634 = vunpack.c.h.b16 %v527
        %v635 = vunpack.c.l.b16 %v528
        %v636 = vunpack.c.h.b16 %v528
        %v637 = vunpack.c.l.b16 %v529
        %v638 = vunpack.c.l.b16 %v530
        %v639 = vunpack.c.h.b16 %v530
        %v640 = vunpack.c.l.b16 %v531
        %v641 = vunpack.c.h.b16 %v531
        %v642 = vunpack.c.l.b16 %v532
        %v643 = vunpack.c.l.b16 %v533
        %v644 = vunpack.c.h.b16 %v533
        %v645 = vunpack.c.l.b16 %v534
        %v646 = vunpack.c.h.b16 %v534
        %v647 = vunpack.c.l.b16 %v535
        %v648 = vunpack.c.l.b16 %v536
        %v649 = vunpack.c.h.b16 %v536
        %v650 = vunpack.c.l.b16 %v537
        %v651 = vunpack.c.h.b16 %v537
        %v652 = vunpack.c.l.b16 %v538
        %v653 = vunpack.c.l.b16 %v539
        %v654 = vunpack.c.h.b16 %v539
        %v655 = vunpack.c.l.b16 %v540
        %v656 = vunpack.c.h.b16 %v540
        %v657 = vunpack.c.l.b16 %v541
        %v658 = vunpack.c.l.b16 %v542
        %v659 = vunpack.c.h.b16 %v542
        %v660 = vunpack.c.l.b16 %v543
        %v661 = vunpack.c.h.b16 %v543
        %v662 = vunpack.c.l.b16 %v544
        %v663 = vunpack.c.l.b16 %v545
        %v664 = vunpack.c.h.b16 %v545
        %v665 = vunpack.c.l.b16 %v546
        %v666 = vunpack.c.h.b16 %v546
        %v667 = vunpack.c.l.b16 %v547
        %v668 = vunpack.c.l.b16 %v548
        %v669 = vunpack.c.h.b16 %v548
        %v670 = vunpack.c.l.b16 %v549
        %v671 = vunpack.c.h.b16 %v549
        %v672 = vunpack.c.l.b16 %v550
        %v673 = vunpack.c.l.b16 %v551
        %v674 = vunpack.c.h.b16 %v551
        %v675 = vunpack.c.l.b16 %v552
        %v676 = vunpack.c.h.b16 %v552
        %v677 = vunpack.c.l.b16 %v553
        %v678 = vunpack.c.l.b16 %v554
        %v679 = vunpack.c.h.b16 %v554
        %v680 = vunpack.c.l.b16 %v555
        %v681 = vunpack.c.h.b16 %v555
        %v682 = vunpack.c.l.b16 %v556
        %v683 = vunpack.c.l.b16 %v557
        %v684 = vunpack.c.h.b16 %v557
        %v685 = vunpack.c.l.b16 %v558
        %v686 = vunpack.c.h.b16 %v558
        %v687 = vunpack.c.l.b16 %v559
        %v688 = vpack.c.b16 %v613, %v608
        %v689 = vpack.c.b16 %v614, %v609
        %v690 = vpack.c.b16 %v615, %v610
        %v691 = vpack.c.b16 %v616, %v611
        %v692 = vpack.c.b16 %v617, %v612
        %v693 = vpack.c.b16 %v623, %v618
        %v694 = vpack.c.b16 %v624, %v619
        %v695 = vpack.c.b16 %v625, %v620
        %v696 = vpack.c.b16 %v626, %v621
        %v697 = vpack.c.b16 %v627, %v622
        %v698 = vpack.c.b16 %v633, %v628
        %v699 = vpack.c.b16 %v634, %v629
        %v700 = vpack.c.b16 %v635, %v630
        %v701 = vpack.c.b16 %v636, %v631
        %v702 = vpack.c.b16 %v637, %v632
        %v703 = vpack.c.b16 %v643, %v638
        %v704 = vpack.c.b16 %v644, %v639
        %v705 = vpack.c.b16 %v645, %v640
        %v706 = vpack.c.b16 %v646, %v641
        %v707 = vpack.c.b16 %v647, %v642
        %v708 = vpack.c.b16 %v653, %v648
        %v709 = vpack.c.b16 %v654, %v649
        %v710 = vpack.c.b16 %v655, %v650
        %v711 = vpack.c.b16 %v656, %v651
        %v712 = vpack.c.b16 %v657, %v652
        %v713 = vpack.c.b16 %v663, %v658
        %v714 = vpack.c.b16 %v664, %v659
        %v715 = vpack.c.b16 %v665, %v660
        %v716 = vpack.c.b16 %v666, %v661
        %v717 = vpack.c.b16 %v667, %v662
        %v718 = vpack.c.b16 %v673, %v668
        %v719 = vpack.c.b16 %v674, %v669
        %v720 = vpack.c.b16 %v675, %v670
        %v721 = vpack.c.b16 %v676, %v671
        %v722 = vpack.c.b16 %v677, %v672
        %v723 = vpack.c.b16 %v683, %v678
        %v724 = vpack.c.b16 %v684, %v679
        %v725 = vpack.c.b16 %v685, %v680
        %v726 = vpack.c.b16 %v686, %v681
        %v727 = vpack.c.b16 %v687, %v682
        %768 = vmatprep.subr.bf16.mxu0 %v724
        %769 = vmatpush1.bf16.msra.mxu0 %v723
        %770 = vmatprep.subr.bf16.mxu0 %v719
        %771 = vmatpush1.bf16.msra.mxu0 %v718
        %772 = vmatprep.subr.bf16.mxu0 %v714
        %773 = vmatpush1.bf16.msra.mxu0 %v713
        %774 = vmatprep.subr.bf16.mxu0 %v709
        %775 = vmatpush1.bf16.msra.mxu0 %v708
        %776 = vmatprep.subr.bf16.mxu0 %v704
        %777 = vmatpush1.bf16.msra.mxu0 %v703
        %778 = vmatprep.subr.bf16.mxu0 %v699
        %779 = vmatpush1.bf16.msra.mxu0 %v698
        %780 = vmatprep.subr.bf16.mxu0 %v694
        %781 = vmatpush1.bf16.msra.mxu0 %v693
        %782 = vmatprep.subr.bf16.mxu0 %v689
        %783 = vmatpush1.bf16.msra.mxu0 %v688
        %784 = vmatprep.subr.bf16.mxu0 0
        %785 = vmatpush2.bf16.msra.mxu0 0
        %786 = vmatprep.subr.bf16.mxu0 0
        %787 = vmatpush2.bf16.msra.mxu0 0
        %788 = vmatprep.subr.bf16.mxu0 0
        %789 = vmatpush2.bf16.msra.mxu0 0
        %790 = vmatprep.subr.bf16.mxu0 0
        %791 = vmatpush2.bf16.msra.mxu0 0
        %792 = vmatprep.subr.bf16.mxu0 0
        %793 = vmatpush2.bf16.msra.mxu0 0
        %794 = vmatprep.subr.bf16.mxu0 0
        %795 = vmatpush2.bf16.msra.mxu0 0
        %796 = vmatprep.subr.bf16.mxu0 0
        %797 = vmatpush2.bf16.msra.mxu0 0
        %798 = vmatprep.subr.bf16.mxu0 0
        %799 = vmatpush2.bf16.msra.mxu0 0
        %800 = vmatprep.mubr.bf16.mxu0 0
        %801 = vmatmul.mubr.bf16.gmra.mxu0 %v510
        %v802 = vpop.f32.mrf.mxu0
        %v803 = vadd.f32 0.0, %v802
        %v804 = vpop.f32.mrf.mxu0
        %v805 = vadd.f32 0.0, %v804
        %v806 = vpop.f32.mrf.mxu0
        %v807 = vadd.f32 0.0, %v806
        %v808 = vpop.f32.mrf.mxu0
        %v809 = vadd.f32 0.0, %v808
        %810 = vmatprep.mubr.bf16.mxu0 0
        %811 = vmatmul.mubr.bf16.gmra.mxu0 %v511
        %v812 = vpop.f32.mrf.mxu0
        %v813 = vadd.f32 0.0, %v812
        %v814 = vpop.f32.mrf.mxu0
        %v815 = vadd.f32 0.0, %v814
        %v816 = vpop.f32.mrf.mxu0
        %v817 = vadd.f32 0.0, %v816
        %v818 = vpop.f32.mrf.mxu0
        %v819 = vadd.f32 0.0, %v818
        %820 = vdwg.mxu0
        %821 = vmatprep.subr.bf16.mxu0 %v726
        %822 = vmatpush1.bf16.msra.mxu0 %v725
        %823 = vmatprep.subr.bf16.mxu0 %v721
        %824 = vmatpush1.bf16.msra.mxu0 %v720
        %825 = vmatprep.subr.bf16.mxu0 %v716
        %826 = vmatpush1.bf16.msra.mxu0 %v715
        %827 = vmatprep.subr.bf16.mxu0 %v711
        %828 = vmatpush1.bf16.msra.mxu0 %v710
        %829 = vmatprep.subr.bf16.mxu0 %v706
        %830 = vmatpush1.bf16.msra.mxu0 %v705
        %831 = vmatprep.subr.bf16.mxu0 %v701
        %832 = vmatpush1.bf16.msra.mxu0 %v700
        %833 = vmatprep.subr.bf16.mxu0 %v696
        %834 = vmatpush1.bf16.msra.mxu0 %v695
        %835 = vmatprep.subr.bf16.mxu0 %v691
        %836 = vmatpush1.bf16.msra.mxu0 %v690
        %837 = vmatprep.subr.bf16.mxu0 0
        %838 = vmatpush2.bf16.msra.mxu0 0
        %839 = vmatprep.subr.bf16.mxu0 0
        %840 = vmatpush2.bf16.msra.mxu0 0
        %841 = vmatprep.subr.bf16.mxu0 0
        %842 = vmatpush2.bf16.msra.mxu0 0
        %843 = vmatprep.subr.bf16.mxu0 0
        %844 = vmatpush2.bf16.msra.mxu0 0
        %845 = vmatprep.subr.bf16.mxu0 0
        %846 = vmatpush2.bf16.msra.mxu0 0
        %847 = vmatprep.subr.bf16.mxu0 0
        %848 = vmatpush2.bf16.msra.mxu0 0
        %849 = vmatprep.subr.bf16.mxu0 0
        %850 = vmatpush2.bf16.msra.mxu0 0
        %851 = vmatprep.subr.bf16.mxu0 0
        %852 = vmatpush2.bf16.msra.mxu0 0
        %853 = vmatprep.mubr.bf16.mxu0 0
        %854 = vmatmul.mubr.bf16.gmra.mxu0 %v510
        %v855 = vpop.f32.mrf.mxu0
        %v856 = vadd.f32 0.0, %v855
        %v857 = vpop.f32.mrf.mxu0
        %v858 = vadd.f32 0.0, %v857
        %v859 = vpop.f32.mrf.mxu0
        %v860 = vadd.f32 0.0, %v859
        %v861 = vpop.f32.mrf.mxu0
        %v862 = vadd.f32 0.0, %v861
        %863 = vmatprep.mubr.bf16.mxu0 0
        %864 = vmatmul.mubr.bf16.gmra.mxu0 %v511
        %v865 = vpop.f32.mrf.mxu0
        %v866 = vadd.f32 0.0, %v865
        %v867 = vpop.f32.mrf.mxu0
        %v868 = vadd.f32 0.0, %v867
        %v869 = vpop.f32.mrf.mxu0
        %v870 = vadd.f32 0.0, %v869
        %v871 = vpop.f32.mrf.mxu0
        %v872 = vadd.f32 0.0, %v871
        %873 = vdwg.mxu0
        %874 = vmatprep.subr.bf16.mxu0 0
        %875 = vmatpush1.bf16.msra.mxu0 %v727
        %876 = vmatprep.subr.bf16.mxu0 0
        %877 = vmatpush1.bf16.msra.mxu0 %v722
        %878 = vmatprep.subr.bf16.mxu0 0
        %879 = vmatpush1.bf16.msra.mxu0 %v717
        %880 = vmatprep.subr.bf16.mxu0 0
        %881 = vmatpush1.bf16.msra.mxu0 %v712
        %882 = vmatprep.subr.bf16.mxu0 0
        %883 = vmatpush1.bf16.msra.mxu0 %v707
        %884 = vmatprep.subr.bf16.mxu0 0
        %885 = vmatpush1.bf16.msra.mxu0 %v702
        %886 = vmatprep.subr.bf16.mxu0 0
        %887 = vmatpush1.bf16.msra.mxu0 %v697
        %888 = vmatprep.subr.bf16.mxu0 0
        %889 = vmatpush1.bf16.msra.mxu0 %v692
        %890 = vmatprep.subr.bf16.mxu0 0
        %891 = vmatpush2.bf16.msra.mxu0 0
        %892 = vmatprep.subr.bf16.mxu0 0
        %893 = vmatpush2.bf16.msra.mxu0 0
        %894 = vmatprep.subr.bf16.mxu0 0
        %895 = vmatpush2.bf16.msra.mxu0 0
        %896 = vmatprep.subr.bf16.mxu0 0
        %897 = vmatpush2.bf16.msra.mxu0 0
        %898 = vmatprep.subr.bf16.mxu0 0
        %899 = vmatpush2.bf16.msra.mxu0 0
        %900 = vmatprep.subr.bf16.mxu0 0
        %901 = vmatpush2.bf16.msra.mxu0 0
        %902 = vmatprep.subr.bf16.mxu0 0
        %903 = vmatpush2.bf16.msra.mxu0 0
        %904 = vmatprep.subr.bf16.mxu0 0
        %905 = vmatpush2.bf16.msra.mxu0 0
        %906 = vmatprep.mubr.bf16.mxu0 0
        %907 = vmatmul.mubr.bf16.gmra.mxu0 %v510
        %v908 = vpop.f32.mrf.mxu0
        %v909 = vadd.f32 0.0, %v908
        %v910 = vpop.f32.mrf.mxu0
        %v911 = vpop.f32.mrf.mxu0
        %v912 = vadd.f32 0.0, %v911
        %v913 = vpop.f32.mrf.mxu0
        %914 = vmatprep.mubr.bf16.mxu0 0
        %915 = vmatmul.mubr.bf16.gmra.mxu0 %v511
        %v916 = vpop.f32.mrf.mxu0
        %v917 = vadd.f32 0.0, %v916
        %v918 = vpop.f32.mrf.mxu0
        %v919 = vpop.f32.mrf.mxu0
        %v920 = vadd.f32 0.0, %v919
        %v921 = vpop.f32.mrf.mxu0
        %922 = vdwg.mxu0
        %v923 = vld [vmem:[%s1] sm:$0xff]
        %v924 = vld [vmem:[%s1 + $0x8] sm:$0xff]
        %v925 = vld [vmem:[%s1 + $0x10] sm:$0xff]
        %v926 = vld [vmem:[%s1 + $0x18] sm:$0xff]
        %v927 = vld [vmem:[%s2] sm:$0xff]
        %v928 = vld [vmem:[%s2 + $0x8] sm:$0xff]
        %v929 = vld [vmem:[%s2 + $0x10] sm:$0xff]
        %v930 = vld [vmem:[%s2 + $0x18] sm:$0xff]
        %v931 = vmul.f32 %v803, %v923
        %v932 = vmul.f32 %v807, %v924
        %v933 = vmul.f32 %v813, %v925
        %v934 = vmul.f32 %v817, %v926
        %v935 = vmul.f32 %v858, %v927
        %v936 = vmul.f32 %v862, %v928
        %v937 = vmul.f32 %v868, %v929
        %v938 = vmul.f32 %v872, %v930
        %v939 = vadd.f32 %v931, %v935
        %v940 = vadd.f32 %v932, %v936
        %v941 = vadd.f32 %v933, %v937
        %v942 = vadd.f32 %v934, %v938
        %v943 = vmul.f32 %v805, %v923
        %v944 = vmul.f32 %v809, %v924
        %v945 = vmul.f32 %v815, %v925
        %v946 = vmul.f32 %v819, %v926
        %v947 = vmul.f32 %v909, %v927
        %v948 = vmul.f32 %v912, %v928
        %v949 = vmul.f32 %v917, %v929
        %v950 = vmul.f32 %v920, %v930
        %v951 = vadd.f32 %v943, %v947
        %v952 = vadd.f32 %v944, %v948
        %v953 = vadd.f32 %v945, %v949
        %v954 = vadd.f32 %v946, %v950
        %v955 = vpack.c.bf16 %v940, %v939
        %v956 = vpack.c.bf16 %v942, %v941
        %v957 = vpack.c.bf16 %v952, %v951
        %v958 = vpack.c.bf16 %v954, %v953
        %vm959 = vcmask 261120
        %v961 = vsel %vm959, %v955, 0
        %v964 = vsel %vm959, %v956, 0
        %v967 = vsel %vm959, %v957, 0
        %v970 = vsel %vm959, %v958, 0
        %972 = vmatprep.subr.bf16.mxu0 0
        %973 = vmatpush1.bf16.xpose.msra.mxu0 0
        %974 = vmatprep.subr.bf16.mxu0 0
        %975 = vmatpush1.bf16.xpose.msra.mxu0 0
        %976 = vmatprep.subr.bf16.mxu0 0
        %977 = vmatpush1.bf16.xpose.msra.mxu0 0
        %978 = vmatprep.subr.bf16.mxu0 0
        %979 = vmatpush1.bf16.xpose.msra.mxu0 0
        %980 = vmatprep.subr.bf16.mxu0 0
        %981 = vmatpush1.bf16.xpose.msra.mxu0 0
        %982 = vmatprep.subr.bf16.mxu0 0
        %983 = vmatpush1.bf16.xpose.msra.mxu0 0
        %984 = vmatprep.subr.bf16.mxu0 0
        %985 = vmatpush1.bf16.xpose.msra.mxu0 %v970
        %986 = vmatprep.subr.bf16.mxu0 0
        %987 = vmatpush1.bf16.xpose.msra.mxu0 %v967
        %988 = vmatprep.subr.bf16.mxu0 0
        %989 = vmatpush2.bf16.xpose.msra.mxu0 0
        %990 = vmatprep.subr.bf16.mxu0 0
        %991 = vmatpush2.bf16.xpose.msra.mxu0 0
        %992 = vmatprep.subr.bf16.mxu0 0
        %993 = vmatpush2.bf16.xpose.msra.mxu0 0
        %994 = vmatprep.subr.bf16.mxu0 0
        %995 = vmatpush2.bf16.xpose.msra.mxu0 0
        %996 = vmatprep.subr.bf16.mxu0 0
        %997 = vmatpush2.bf16.xpose.msra.mxu0 0
        %998 = vmatprep.subr.bf16.mxu0 0
        %999 = vmatpush2.bf16.xpose.msra.mxu0 0
        %1000 = vmatprep.subr.bf16.mxu0 0
        %1001 = vmatpush2.bf16.xpose.msra.mxu0 0
        %1002 = vmatprep.subr.bf16.mxu0 0
        %1003 = vmatpush2.bf16.xpose.msra.mxu0 0
        %1004 = vmatprep.mubr.bf16.mxu0 0
        %1005 = vmatmul.mubr.bf16.gmra.mxu0 %v961
        %v1006 = vpop.f32.mrf.mxu0
        %v1007 = vadd.f32 0.0, %v1006
        %v1008 = vpop.f32.mrf.mxu0
        %v1009 = vpop.f32.mrf.mxu0
        %v1010 = vadd.f32 0.0, %v1009
        %v1011 = vpop.f32.mrf.mxu0
        %1012 = vmatprep.mubr.bf16.mxu0 0
        %1013 = vmatmul.mubr.bf16.gmra.mxu0 %v964
        %v1014 = vpop.f32.mrf.mxu0
        %v1015 = vadd.f32 0.0, %v1014
        %v1016 = vpop.f32.mrf.mxu0
        %v1017 = vpop.f32.mrf.mxu0
        %v1018 = vadd.f32 0.0, %v1017
        %v1019 = vpop.f32.mrf.mxu0
        %1020 = vdwg.mxu0
        %1023 = vrot.lane.b32.xlu0 %v955, 96
        %v1024 = vpop.permute.xlu0 %1023
        %1025 = vrot.lane.b32.xlu0 %v956, 96
        %v1026 = vpop.permute.xlu0 %1025
        %1029 = vrot.lane.b32.xlu0 %v957, 96
        %v1030 = vpop.permute.xlu0 %1029
        %1031 = vrot.lane.b32.xlu0 %v958, 96
        %v1032 = vpop.permute.xlu0 %1031
        %v1034 = vsel %vm959, %v1024, 0
        %v1037 = vsel %vm959, %v1026, 0
        %v1040 = vsel %vm959, %v1030, 0
        %v1043 = vsel %vm959, %v1032, 0
        %1045 = vmatprep.subr.bf16.mxu0 0
        %1046 = vmatpush1.bf16.xpose.msra.mxu0 0
        %1047 = vmatprep.subr.bf16.mxu0 0
        %1048 = vmatpush1.bf16.xpose.msra.mxu0 0
        %1049 = vmatprep.subr.bf16.mxu0 0
        %1050 = vmatpush1.bf16.xpose.msra.mxu0 0
        %1051 = vmatprep.subr.bf16.mxu0 0
        %1052 = vmatpush1.bf16.xpose.msra.mxu0 0
        %1053 = vmatprep.subr.bf16.mxu0 0
        %1054 = vmatpush1.bf16.xpose.msra.mxu0 0
        %1055 = vmatprep.subr.bf16.mxu0 0
        %1056 = vmatpush1.bf16.xpose.msra.mxu0 0
        %1057 = vmatprep.subr.bf16.mxu0 0
        %1058 = vmatpush1.bf16.xpose.msra.mxu0 %v1043
        %1059 = vmatprep.subr.bf16.mxu0 0
        %1060 = vmatpush1.bf16.xpose.msra.mxu0 %v1040
        %1061 = vmatprep.subr.bf16.mxu0 0
        %1062 = vmatpush2.bf16.xpose.msra.mxu0 0
        %1063 = vmatprep.subr.bf16.mxu0 0
        %1064 = vmatpush2.bf16.xpose.msra.mxu0 0
        %1065 = vmatprep.subr.bf16.mxu0 0
        %1066 = vmatpush2.bf16.xpose.msra.mxu0 0
        %1067 = vmatprep.subr.bf16.mxu0 0
        %1068 = vmatpush2.bf16.xpose.msra.mxu0 0
        %1069 = vmatprep.subr.bf16.mxu0 0
        %1070 = vmatpush2.bf16.xpose.msra.mxu0 0
        %1071 = vmatprep.subr.bf16.mxu0 0
        %1072 = vmatpush2.bf16.xpose.msra.mxu0 0
        %1073 = vmatprep.subr.bf16.mxu0 0
        %1074 = vmatpush2.bf16.xpose.msra.mxu0 0
        %1075 = vmatprep.subr.bf16.mxu0 0
        %1076 = vmatpush2.bf16.xpose.msra.mxu0 0
        %1077 = vmatprep.mubr.bf16.mxu0 0
        %1078 = vmatmul.mubr.bf16.gmra.mxu0 %v1034
        %v1079 = vpop.f32.mrf.mxu0
        %v1080 = vadd.f32 0.0, %v1079
        %v1081 = vpop.f32.mrf.mxu0
        %v1082 = vpop.f32.mrf.mxu0
        %v1083 = vadd.f32 0.0, %v1082
        %v1084 = vpop.f32.mrf.mxu0
        %1085 = vmatprep.mubr.bf16.mxu0 0
        %1086 = vmatmul.mubr.bf16.gmra.mxu0 %v1037
        %v1087 = vpop.f32.mrf.mxu0
        %v1088 = vadd.f32 0.0, %v1087
        %v1089 = vpop.f32.mrf.mxu0
        %v1090 = vpop.f32.mrf.mxu0
        %v1091 = vadd.f32 0.0, %v1090
        %v1092 = vpop.f32.mrf.mxu0
        %1093 = vdwg.mxu0
        %1094 = vrot.lane.b32.xlu0 %v955, 64
        %v1095 = vpop.permute.xlu0 %1094
        %1096 = vrot.lane.b32.xlu0 %v956, 64
        %v1097 = vpop.permute.xlu0 %1096
        %1098 = vrot.lane.b32.xlu0 %v957, 64
        %v1099 = vpop.permute.xlu0 %1098
        %1100 = vrot.lane.b32.xlu0 %v958, 64
        %v1101 = vpop.permute.xlu0 %1100
        %v1103 = vsel %vm959, %v1095, 0
        %v1106 = vsel %vm959, %v1097, 0
        %v1109 = vsel %vm959, %v1099, 0
        %v1112 = vsel %vm959, %v1101, 0
        %1114 = vmatprep.subr.bf16.mxu0 0
        %1115 = vmatpush1.bf16.xpose.msra.mxu0 0
        %1116 = vmatprep.subr.bf16.mxu0 0
        %1117 = vmatpush1.bf16.xpose.msra.mxu0 0
        %1118 = vmatprep.subr.bf16.mxu0 0
        %1119 = vmatpush1.bf16.xpose.msra.mxu0 0
        %1120 = vmatprep.subr.bf16.mxu0 0
        %1121 = vmatpush1.bf16.xpose.msra.mxu0 0
        %1122 = vmatprep.subr.bf16.mxu0 0
        %1123 = vmatpush1.bf16.xpose.msra.mxu0 0
        %1124 = vmatprep.subr.bf16.mxu0 0
        %1125 = vmatpush1.bf16.xpose.msra.mxu0 0
        %1126 = vmatprep.subr.bf16.mxu0 0
        %1127 = vmatpush1.bf16.xpose.msra.mxu0 %v1112
        %1128 = vmatprep.subr.bf16.mxu0 0
        %1129 = vmatpush1.bf16.xpose.msra.mxu0 %v1109
        %1130 = vmatprep.subr.bf16.mxu0 0
        %1131 = vmatpush2.bf16.xpose.msra.mxu0 0
        %1132 = vmatprep.subr.bf16.mxu0 0
        %1133 = vmatpush2.bf16.xpose.msra.mxu0 0
        %1134 = vmatprep.subr.bf16.mxu0 0
        %1135 = vmatpush2.bf16.xpose.msra.mxu0 0
        %1136 = vmatprep.subr.bf16.mxu0 0
        %1137 = vmatpush2.bf16.xpose.msra.mxu0 0
        %1138 = vmatprep.subr.bf16.mxu0 0
        %1139 = vmatpush2.bf16.xpose.msra.mxu0 0
        %1140 = vmatprep.subr.bf16.mxu0 0
        %1141 = vmatpush2.bf16.xpose.msra.mxu0 0
        %1142 = vmatprep.subr.bf16.mxu0 0
        %1143 = vmatpush2.bf16.xpose.msra.mxu0 0
        %1144 = vmatprep.subr.bf16.mxu0 0
        %1145 = vmatpush2.bf16.xpose.msra.mxu0 0
        %1146 = vmatprep.mubr.bf16.mxu0 0
        %1147 = vmatmul.mubr.bf16.gmra.mxu0 %v1103
        %v1148 = vpop.f32.mrf.mxu0
        %v1149 = vadd.f32 0.0, %v1148
        %v1150 = vpop.f32.mrf.mxu0
        %v1151 = vpop.f32.mrf.mxu0
        %v1152 = vadd.f32 0.0, %v1151
        %v1153 = vpop.f32.mrf.mxu0
        %1154 = vmatprep.mubr.bf16.mxu0 0
        %1155 = vmatmul.mubr.bf16.gmra.mxu0 %v1106
        %v1156 = vpop.f32.mrf.mxu0
        %v1157 = vadd.f32 0.0, %v1156
        %v1158 = vpop.f32.mrf.mxu0
        %v1159 = vpop.f32.mrf.mxu0
        %v1160 = vadd.f32 0.0, %v1159
        %v1161 = vpop.f32.mrf.mxu0
        %1162 = vdwg.mxu0
        %1163 = vrot.lane.b32.xlu0 %v955, 32
        %v1164 = vpop.permute.xlu0 %1163
        %1165 = vrot.lane.b32.xlu0 %v956, 32
        %v1166 = vpop.permute.xlu0 %1165
        %1167 = vrot.lane.b32.xlu0 %v957, 32
        %v1168 = vpop.permute.xlu0 %1167
        %1169 = vrot.lane.b32.xlu0 %v958, 32
        %v1170 = vpop.permute.xlu0 %1169
        %v1172 = vsel %vm959, %v1164, 0
        %v1175 = vsel %vm959, %v1166, 0
        %v1178 = vsel %vm959, %v1168, 0
        %v1181 = vsel %vm959, %v1170, 0
        %1183 = vmatprep.subr.bf16.mxu0 0
        %1184 = vmatpush1.bf16.xpose.msra.mxu0 0
        %1185 = vmatprep.subr.bf16.mxu0 0
        %1186 = vmatpush1.bf16.xpose.msra.mxu0 0
        %1187 = vmatprep.subr.bf16.mxu0 0
        %1188 = vmatpush1.bf16.xpose.msra.mxu0 0
        %1189 = vmatprep.subr.bf16.mxu0 0
        %1190 = vmatpush1.bf16.xpose.msra.mxu0 0
        %1191 = vmatprep.subr.bf16.mxu0 0
        %1192 = vmatpush1.bf16.xpose.msra.mxu0 0
        %1193 = vmatprep.subr.bf16.mxu0 0
        %1194 = vmatpush1.bf16.xpose.msra.mxu0 0
        %1195 = vmatprep.subr.bf16.mxu0 0
        %1196 = vmatpush1.bf16.xpose.msra.mxu0 %v1181
        %1197 = vmatprep.subr.bf16.mxu0 0
        %1198 = vmatpush1.bf16.xpose.msra.mxu0 %v1178
        %1199 = vmatprep.subr.bf16.mxu0 0
        %1200 = vmatpush2.bf16.xpose.msra.mxu0 0
        %1201 = vmatprep.subr.bf16.mxu0 0
        %1202 = vmatpush2.bf16.xpose.msra.mxu0 0
        %1203 = vmatprep.subr.bf16.mxu0 0
        %1204 = vmatpush2.bf16.xpose.msra.mxu0 0
        %1205 = vmatprep.subr.bf16.mxu0 0
        %1206 = vmatpush2.bf16.xpose.msra.mxu0 0
        %1207 = vmatprep.subr.bf16.mxu0 0
        %1208 = vmatpush2.bf16.xpose.msra.mxu0 0
        %1209 = vmatprep.subr.bf16.mxu0 0
        %1210 = vmatpush2.bf16.xpose.msra.mxu0 0
        %1211 = vmatprep.subr.bf16.mxu0 0
        %1212 = vmatpush2.bf16.xpose.msra.mxu0 0
        %1213 = vmatprep.subr.bf16.mxu0 0
        %1214 = vmatpush2.bf16.xpose.msra.mxu0 0
        %1215 = vmatprep.mubr.bf16.mxu0 0
        %1216 = vmatmul.mubr.bf16.gmra.mxu0 %v1172
        %v1217 = vpop.f32.mrf.mxu0
        %v1218 = vadd.f32 0.0, %v1217
        %v1219 = vpop.f32.mrf.mxu0
        %v1220 = vpop.f32.mrf.mxu0
        %v1221 = vadd.f32 0.0, %v1220
        %v1222 = vpop.f32.mrf.mxu0
        %1223 = vmatprep.mubr.bf16.mxu0 0
        %1224 = vmatmul.mubr.bf16.gmra.mxu0 %v1175
        %v1225 = vpop.f32.mrf.mxu0
        %v1226 = vadd.f32 0.0, %v1225
        %v1227 = vpop.f32.mrf.mxu0
        %v1228 = vpop.f32.mrf.mxu0
        %v1229 = vadd.f32 0.0, %v1228
        %v1230 = vpop.f32.mrf.mxu0
        %1231 = vdwg.mxu0
        %v1232 = vld [vmem:[%s3] sm:$0xff]
        %v1233 = vld [vmem:[%s3 + $0x8] sm:$0xff]
        %v1234 = vld [vmem:[%s3 + $0x10] sm:$0xff]
        %v1235 = vld [vmem:[%s3 + $0x18] sm:$0xff]
        %v1236 = vld [vmem:[%s3 + $0x20] sm:$0xff]
        %v1237 = vld [vmem:[%s3 + $0x28] sm:$0xff]
        %v1238 = vld [vmem:[%s3 + $0x30] sm:$0xff]
        %v1239 = vld [vmem:[%s3 + $0x38] sm:$0xff]
        %v1240 = vld [vmem:[%s3 + $0x40] sm:$0xff]
        %v1241 = vld [vmem:[%s3 + $0x48] sm:$0xff]
        %v1242 = vld [vmem:[%s3 + $0x50] sm:$0xff]
        %v1243 = vld [vmem:[%s3 + $0x58] sm:$0xff]
        %v1244 = vld [vmem:[%s3 + $0x60] sm:$0xff]
        %v1245 = vld [vmem:[%s3 + $0x68] sm:$0xff]
        %v1246 = vld [vmem:[%s3 + $0x70] sm:$0xff]
        %v1247 = vld [vmem:[%s3 + $0x78] sm:$0xff]
        %v1248 = vadd.f32 %v1007, %v1232
        %v1249 = vadd.f32 %v1010, %v1233
        %v1250 = vadd.f32 %v1015, %v1234
        %v1251 = vadd.f32 %v1018, %v1235
        %v1252 = vadd.f32 %v1080, %v1236
        %v1253 = vadd.f32 %v1083, %v1237
        %v1254 = vadd.f32 %v1088, %v1238
        %v1255 = vadd.f32 %v1091, %v1239
        %v1256 = vadd.f32 %v1149, %v1240
        %v1257 = vadd.f32 %v1152, %v1241
        %v1258 = vadd.f32 %v1157, %v1242
        %v1259 = vadd.f32 %v1160, %v1243
        %v1260 = vadd.f32 %v1218, %v1244
        %v1261 = vadd.f32 %v1221, %v1245
        %v1262 = vadd.f32 %v1226, %v1246
        %v1263 = vadd.f32 %v1229, %v1247
        %v1264 = vsel %vm959, %v1248, -inf
        %1265 = vmax.xlane.f32.xlu0 %v1264
        %v1266 = vpop.xlane.xlu0 %1265
        %v1267 = vsel %vm959, %v1249, -inf
        %1268 = vmax.xlane.f32.xlu0 %v1267
        %v1269 = vpop.xlane.xlu0 %1268
        %v1270 = vsel %vm959, %v1250, -inf
        %1271 = vmax.xlane.f32.xlu0 %v1270
        %v1272 = vpop.xlane.xlu0 %1271
        %v1273 = vsel %vm959, %v1251, -inf
        %1274 = vmax.xlane.f32.xlu0 %v1273
        %v1275 = vpop.xlane.xlu0 %1274
        %v1276 = vsel %vm959, %v1252, -inf
        %1277 = vmax.xlane.f32.xlu0 %v1276
        %v1278 = vpop.xlane.xlu0 %1277
        %v1279 = vsel %vm959, %v1253, -inf
        %1280 = vmax.xlane.f32.xlu0 %v1279
        %v1281 = vpop.xlane.xlu0 %1280
        %v1282 = vsel %vm959, %v1254, -inf
        %1283 = vmax.xlane.f32.xlu0 %v1282
        %v1284 = vpop.xlane.xlu0 %1283
        %v1285 = vsel %vm959, %v1255, -inf
        %1286 = vmax.xlane.f32.xlu0 %v1285
        %v1287 = vpop.xlane.xlu0 %1286
        %v1288 = vsel %vm959, %v1256, -inf
        %1289 = vmax.xlane.f32.xlu0 %v1288
        %v1290 = vpop.xlane.xlu0 %1289
        %v1291 = vsel %vm959, %v1257, -inf
        %1292 = vmax.xlane.f32.xlu0 %v1291
        %v1293 = vpop.xlane.xlu0 %1292
        %v1294 = vsel %vm959, %v1258, -inf
        %1295 = vmax.xlane.f32.xlu0 %v1294
        %v1296 = vpop.xlane.xlu0 %1295
        %v1297 = vsel %vm959, %v1259, -inf
        %1298 = vmax.xlane.f32.xlu0 %v1297
        %v1299 = vpop.xlane.xlu0 %1298
        %v1300 = vsel %vm959, %v1260, -inf
        %1301 = vmax.xlane.f32.xlu0 %v1300
        %v1302 = vpop.xlane.xlu0 %1301
        %v1303 = vsel %vm959, %v1261, -inf
        %1304 = vmax.xlane.f32.xlu0 %v1303
        %v1305 = vpop.xlane.xlu0 %1304
        %v1306 = vsel %vm959, %v1262, -inf
        %1307 = vmax.xlane.f32.xlu0 %v1306
        %v1308 = vpop.xlane.xlu0 %1307
        %v1309 = vsel %vm959, %v1263, -inf
        %1310 = vmax.xlane.f32.xlu0 %v1309
        %v1311 = vpop.xlane.xlu0 %1310
        %v1312 = vsub.f32 %v1248, %v1266
        %v1313 = vsub.f32 %v1249, %v1269
        %v1314 = vsub.f32 %v1250, %v1272
        %v1315 = vsub.f32 %v1251, %v1275
        %v1316 = vsub.f32 %v1252, %v1278
        %v1317 = vsub.f32 %v1253, %v1281
        %v1318 = vsub.f32 %v1254, %v1284
        %v1319 = vsub.f32 %v1255, %v1287
        %v1320 = vsub.f32 %v1256, %v1290
        %v1321 = vsub.f32 %v1257, %v1293
        %v1322 = vsub.f32 %v1258, %v1296
        %v1323 = vsub.f32 %v1259, %v1299
        %v1324 = vsub.f32 %v1260, %v1302
        %v1325 = vsub.f32 %v1261, %v1305
        %v1326 = vsub.f32 %v1262, %v1308
        %v1327 = vsub.f32 %v1263, %v1311
        %v1328 = vmul.f32 %v1312, 1.442695
        %v1329 = vpow.pop %v1328
        %v1330 = vmul.f32 %v1313, 1.442695
        %v1331 = vpow.pop %v1330
        %v1332 = vmul.f32 %v1314, 1.442695
        %v1333 = vpow.pop %v1332
        %v1334 = vmul.f32 %v1315, 1.442695
        %v1335 = vpow.pop %v1334
        %v1336 = vmul.f32 %v1316, 1.442695
        %v1337 = vpow.pop %v1336
        %v1338 = vmul.f32 %v1317, 1.442695
        %v1339 = vpow.pop %v1338
        %v1340 = vmul.f32 %v1318, 1.442695
        %v1341 = vpow.pop %v1340
        %v1342 = vmul.f32 %v1319, 1.442695
        %v1343 = vpow.pop %v1342
        %v1344 = vmul.f32 %v1320, 1.442695
        %v1345 = vpow.pop %v1344
        %v1346 = vmul.f32 %v1321, 1.442695
        %v1347 = vpow.pop %v1346
        %v1348 = vmul.f32 %v1322, 1.442695
        %v1349 = vpow.pop %v1348
        %v1350 = vmul.f32 %v1323, 1.442695
        %v1351 = vpow.pop %v1350
        %v1352 = vmul.f32 %v1324, 1.442695
        %v1353 = vpow.pop %v1352
        %v1354 = vmul.f32 %v1325, 1.442695
        %v1355 = vpow.pop %v1354
        %v1356 = vmul.f32 %v1326, 1.442695
        %v1357 = vpow.pop %v1356
        %v1358 = vmul.f32 %v1327, 1.442695
        %v1359 = vpow.pop %v1358
        %v1360 = vsel %vm959, %v1329, 0.0
        %1361 = vadd.xlane.f32.xlu0 %v1360
        %v1362 = vpop.xlane.xlu0 %1361
        %v1363 = vsel %vm959, %v1331, 0.0
        %1364 = vadd.xlane.f32.xlu0 %v1363
        %v1365 = vpop.xlane.xlu0 %1364
        %v1366 = vsel %vm959, %v1333, 0.0
        %1367 = vadd.xlane.f32.xlu0 %v1366
        %v1368 = vpop.xlane.xlu0 %1367
        %v1369 = vsel %vm959, %v1335, 0.0
        %1370 = vadd.xlane.f32.xlu0 %v1369
        %v1371 = vpop.xlane.xlu0 %1370
        %v1372 = vsel %vm959, %v1337, 0.0
        %1373 = vadd.xlane.f32.xlu0 %v1372
        %v1374 = vpop.xlane.xlu0 %1373
        %v1375 = vsel %vm959, %v1339, 0.0
        %1376 = vadd.xlane.f32.xlu0 %v1375
        %v1377 = vpop.xlane.xlu0 %1376
        %v1378 = vsel %vm959, %v1341, 0.0
        %1379 = vadd.xlane.f32.xlu0 %v1378
        %v1380 = vpop.xlane.xlu0 %1379
        %v1381 = vsel %vm959, %v1343, 0.0
        %1382 = vadd.xlane.f32.xlu0 %v1381
        %v1383 = vpop.xlane.xlu0 %1382
        %v1384 = vsel %vm959, %v1345, 0.0
        %1385 = vadd.xlane.f32.xlu0 %v1384
        %v1386 = vpop.xlane.xlu0 %1385
        %v1387 = vsel %vm959, %v1347, 0.0
        %1388 = vadd.xlane.f32.xlu0 %v1387
        %v1389 = vpop.xlane.xlu0 %1388
        %v1390 = vsel %vm959, %v1349, 0.0
        %1391 = vadd.xlane.f32.xlu0 %v1390
        %v1392 = vpop.xlane.xlu0 %1391
        %v1393 = vsel %vm959, %v1351, 0.0
        %1394 = vadd.xlane.f32.xlu0 %v1393
        %v1395 = vpop.xlane.xlu0 %1394
        %v1396 = vsel %vm959, %v1353, 0.0
        %1397 = vadd.xlane.f32.xlu0 %v1396
        %v1398 = vpop.xlane.xlu0 %1397
        %v1399 = vsel %vm959, %v1355, 0.0
        %1400 = vadd.xlane.f32.xlu0 %v1399
        %v1401 = vpop.xlane.xlu0 %1400
        %v1402 = vsel %vm959, %v1357, 0.0
        %1403 = vadd.xlane.f32.xlu0 %v1402
        %v1404 = vpop.xlane.xlu0 %1403
        %v1405 = vsel %vm959, %v1359, 0.0
        %1406 = vadd.xlane.f32.xlu0 %v1405
        %v1407 = vpop.xlane.xlu0 %1406
        %v1408 = vrcp.pop %v1362
        %v1409 = vrcp.pop %v1365
        %v1410 = vrcp.pop %v1368
        %v1411 = vrcp.pop %v1371
        %v1412 = vrcp.pop %v1374
        %v1413 = vrcp.pop %v1377
        %v1414 = vrcp.pop %v1380
        %v1415 = vrcp.pop %v1383
        %v1416 = vrcp.pop %v1386
        %v1417 = vrcp.pop %v1389
        %v1418 = vrcp.pop %v1392
        %v1419 = vrcp.pop %v1395
        %v1420 = vrcp.pop %v1398
        %v1421 = vrcp.pop %v1401
        %v1422 = vrcp.pop %v1404
        %v1423 = vrcp.pop %v1407
        %v1424 = vmul.f32 %v1329, %v1408
        %v1425 = vmul.f32 %v1331, %v1409
        %v1426 = vmul.f32 %v1333, %v1410
        %v1427 = vmul.f32 %v1335, %v1411
        %v1428 = vmul.f32 %v1337, %v1412
        %v1429 = vmul.f32 %v1339, %v1413
        %v1430 = vmul.f32 %v1341, %v1414
        %v1431 = vmul.f32 %v1343, %v1415
        %v1432 = vmul.f32 %v1345, %v1416
        %v1433 = vmul.f32 %v1347, %v1417
        %v1434 = vmul.f32 %v1349, %v1418
        %v1435 = vmul.f32 %v1351, %v1419
        %v1436 = vmul.f32 %v1353, %v1420
        %v1437 = vmul.f32 %v1355, %v1421
        %v1438 = vmul.f32 %v1357, %v1422
        %v1439 = vmul.f32 %v1359, %v1423
        %v1440 = vld [vmem:[%s447] sm:$0xf]
        %v1441 = vld [vmem:[%s447 + $0x4] sm:$0xf]
        %v1442 = vld [vmem:[%s447 + $0x8] sm:$0xf]
        %v1443 = vld [vmem:[%s447 + $0xc] sm:$0xf]
        %v1444 = vld [vmem:[%s447 + $0x10] sm:$0xf]
        %v1445 = vld [vmem:[%s447 + $0x14] sm:$0xf]
        %v1446 = vld [vmem:[%s447 + $0x18] sm:$0xf]
        %v1447 = vld [vmem:[%s447 + $0x1c] sm:$0xf]
        %v1448 = vld [vmem:[%s447 + $0x20] sm:$0xf]
        %v1449 = vld [vmem:[%s447 + $0x24] sm:$0xf]
        %v1450 = vld [vmem:[%s447 + $0x28] sm:$0xf]
        %v1451 = vld [vmem:[%s447 + $0x2c] sm:$0xf]
        %v1452 = vld [vmem:[%s447 + $0x30] sm:$0xf]
        %v1453 = vld [vmem:[%s447 + $0x34] sm:$0xf]
        %v1454 = vld [vmem:[%s447 + $0x38] sm:$0xf]
        %v1455 = vld [vmem:[%s447 + $0x3c] sm:$0xf]
        %v1456 = vpack.c.bf16 %v1425, %v1424
        %v1457 = vpack.c.bf16 %v1427, %v1426
        %v1458 = vpack.c.bf16 %v860, %v856
        %v1459 = vpack.c.bf16 %v870, %v866
        %v1461 = vsel %vm959, %v1456, 0
        %v1464 = vsel %vm959, %v1457, 0
        %1466 = vmatprep.subr.bf16.mxu0 0
        %1467 = vmatpush1.bf16.msra.mxu0 0
        %1468 = vmatprep.subr.bf16.mxu0 0
        %1469 = vmatpush1.bf16.msra.mxu0 0
        %1470 = vmatprep.subr.bf16.mxu0 0
        %1471 = vmatpush1.bf16.msra.mxu0 0
        %1472 = vmatprep.subr.bf16.mxu0 0
        %1473 = vmatpush1.bf16.msra.mxu0 0
        %1474 = vmatprep.subr.bf16.mxu0 0
        %1475 = vmatpush1.bf16.msra.mxu0 0
        %1476 = vmatprep.subr.bf16.mxu0 0
        %1477 = vmatpush1.bf16.msra.mxu0 0
        %1478 = vmatprep.subr.bf16.mxu0 0
        %1479 = vmatpush1.bf16.msra.mxu0 %v1459
        %1480 = vmatprep.subr.bf16.mxu0 0
        %1481 = vmatpush1.bf16.msra.mxu0 %v1458
        %1482 = vmatprep.subr.bf16.mxu0 0
        %1483 = vmatpush2.bf16.msra.mxu0 0
        %1484 = vmatprep.subr.bf16.mxu0 0
        %1485 = vmatpush2.bf16.msra.mxu0 0
        %1486 = vmatprep.subr.bf16.mxu0 0
        %1487 = vmatpush2.bf16.msra.mxu0 0
        %1488 = vmatprep.subr.bf16.mxu0 0
        %1489 = vmatpush2.bf16.msra.mxu0 0
        %1490 = vmatprep.subr.bf16.mxu0 0
        %1491 = vmatpush2.bf16.msra.mxu0 0
        %1492 = vmatprep.subr.bf16.mxu0 0
        %1493 = vmatpush2.bf16.msra.mxu0 0
        %1494 = vmatprep.subr.bf16.mxu0 0
        %1495 = vmatpush2.bf16.msra.mxu0 0
        %1496 = vmatprep.subr.bf16.mxu0 0
        %1497 = vmatpush2.bf16.msra.mxu0 0
        %1498 = vmatprep.mubr.bf16.mxu0 0
        %1499 = vmatmul.mubr.bf16.gmra.mxu0 %v1461
        %v1500 = vpop.f32.mrf.mxu0
        %v1501 = vadd.f32 0.0, %v1500
        %v1502 = vpop.f32.mrf.mxu0
        %v1503 = vpop.f32.mrf.mxu0
        %v1504 = vadd.f32 0.0, %v1503
        %v1505 = vpop.f32.mrf.mxu0
        %1506 = vmatprep.mubr.bf16.mxu0 0
        %1507 = vmatmul.mubr.bf16.gmra.mxu0 %v1464
        %v1508 = vpop.f32.mrf.mxu0
        %v1509 = vadd.f32 0.0, %v1508
        %v1510 = vpop.f32.mrf.mxu0
        %v1511 = vpop.f32.mrf.mxu0
        %v1512 = vadd.f32 0.0, %v1511
        %v1513 = vpop.f32.mrf.mxu0
        %1514 = vdwg.mxu0
        %v1515 = vpack.c.bf16 %v1504, %v1501
        %v1516 = vpack.c.bf16 %v1512, %v1509
        %v1521 = vunpack.c.l.b16 %v1440
        %v1522 = vunpack.c.l.b16 %v1441
        %v1523 = vunpack.c.l.b16 %v1442
        %v1524 = vunpack.c.l.b16 %v1443
        %v1525 = vpack.c.b16 %v1522, %v1521
        %v1526 = vpack.c.b16 %v1524, %v1523
        %v1530 = vsel %vm959, %v1515, 0
        %v1533 = vsel %vm959, %v1516, 0
        %1535 = vmatprep.subr.bf16.mxu0 0
        %1536 = vmatpush1.bf16.msra.mxu0 0
        %1537 = vmatprep.subr.bf16.mxu0 0
        %1538 = vmatpush1.bf16.msra.mxu0 0
        %1539 = vmatprep.subr.bf16.mxu0 0
        %1540 = vmatpush1.bf16.msra.mxu0 0
        %1541 = vmatprep.subr.bf16.mxu0 0
        %1542 = vmatpush1.bf16.msra.mxu0 0
        %1543 = vmatprep.subr.bf16.mxu0 0
        %1544 = vmatpush1.bf16.msra.mxu0 0
        %1545 = vmatprep.subr.bf16.mxu0 0
        %1546 = vmatpush1.bf16.msra.mxu0 0
        %1547 = vmatprep.subr.bf16.mxu0 0
        %1548 = vmatpush1.bf16.msra.mxu0 %v1526
        %1549 = vmatprep.subr.bf16.mxu0 0
        %1550 = vmatpush1.bf16.msra.mxu0 %v1525
        %1551 = vmatprep.subr.bf16.mxu0 0
        %1552 = vmatpush2.bf16.msra.mxu0 0
        %1553 = vmatprep.subr.bf16.mxu0 0
        %1554 = vmatpush2.bf16.msra.mxu0 0
        %1555 = vmatprep.subr.bf16.mxu0 0
        %1556 = vmatpush2.bf16.msra.mxu0 0
        %1557 = vmatprep.subr.bf16.mxu0 0
        %1558 = vmatpush2.bf16.msra.mxu0 0
        %1559 = vmatprep.subr.bf16.mxu0 0
        %1560 = vmatpush2.bf16.msra.mxu0 0
        %1561 = vmatprep.subr.bf16.mxu0 0
        %1562 = vmatpush2.bf16.msra.mxu0 0
        %1563 = vmatprep.subr.bf16.mxu0 0
        %1564 = vmatpush2.bf16.msra.mxu0 0
        %1565 = vmatprep.subr.bf16.mxu0 0
        %1566 = vmatpush2.bf16.msra.mxu0 0
        %1567 = vmatprep.mubr.bf16.mxu0 0
        %1568 = vmatmul.mubr.bf16.gmra.mxu0 %v1530
        %v1569 = vpop.f32.mrf.mxu0
        %v1570 = vadd.f32 0.0, %v1569
        %v1571 = vpop.f32.mrf.mxu0
        %v1572 = vpop.f32.mrf.mxu0
        %v1573 = vadd.f32 0.0, %v1572
        %v1574 = vpop.f32.mrf.mxu0
        %1575 = vmatprep.mubr.bf16.mxu0 0
        %1576 = vmatmul.mubr.bf16.gmra.mxu0 %v1533
        %v1577 = vpop.f32.mrf.mxu0
        %v1578 = vadd.f32 0.0, %v1577
        %v1579 = vpop.f32.mrf.mxu0
        %v1580 = vpop.f32.mrf.mxu0
        %v1581 = vadd.f32 0.0, %v1580
        %v1582 = vpop.f32.mrf.mxu0
        %1583 = vdwg.mxu0
        %v1584 = vadd.f32 %v466, %v1570
        %v1585 = vadd.f32 %v467, %v1573
        %v1586 = vadd.f32 %v468, %v1578
        %v1587 = vadd.f32 %v469, %v1581
        %v1588 = vpack.c.bf16 %v1429, %v1428
        %v1589 = vpack.c.bf16 %v1431, %v1430
        %1592 = vrot.lane.b32.xlu0 %v1458, 96
        %v1593 = vpop.permute.xlu0 %1592
        %1594 = vrot.lane.b32.xlu0 %v1459, 96
        %v1595 = vpop.permute.xlu0 %1594
        %v1599 = vsel %vm959, %v1588, 0
        %v1602 = vsel %vm959, %v1589, 0
        %1604 = vmatprep.subr.bf16.mxu0 0
        %1605 = vmatpush1.bf16.msra.mxu0 0
        %1606 = vmatprep.subr.bf16.mxu0 0
        %1607 = vmatpush1.bf16.msra.mxu0 0
        %1608 = vmatprep.subr.bf16.mxu0 0
        %1609 = vmatpush1.bf16.msra.mxu0 0
        %1610 = vmatprep.subr.bf16.mxu0 0
        %1611 = vmatpush1.bf16.msra.mxu0 0
        %1612 = vmatprep.subr.bf16.mxu0 0
        %1613 = vmatpush1.bf16.msra.mxu0 0
        %1614 = vmatprep.subr.bf16.mxu0 0
        %1615 = vmatpush1.bf16.msra.mxu0 0
        %1616 = vmatprep.subr.bf16.mxu0 0
        %1617 = vmatpush1.bf16.msra.mxu0 %v1595
        %1618 = vmatprep.subr.bf16.mxu0 0
        %1619 = vmatpush1.bf16.msra.mxu0 %v1593
        %1620 = vmatprep.subr.bf16.mxu0 0
        %1621 = vmatpush2.bf16.msra.mxu0 0
        %1622 = vmatprep.subr.bf16.mxu0 0
        %1623 = vmatpush2.bf16.msra.mxu0 0
        %1624 = vmatprep.subr.bf16.mxu0 0
        %1625 = vmatpush2.bf16.msra.mxu0 0
        %1626 = vmatprep.subr.bf16.mxu0 0
        %1627 = vmatpush2.bf16.msra.mxu0 0
        %1628 = vmatprep.subr.bf16.mxu0 0
        %1629 = vmatpush2.bf16.msra.mxu0 0
        %1630 = vmatprep.subr.bf16.mxu0 0
        %1631 = vmatpush2.bf16.msra.mxu0 0
        %1632 = vmatprep.subr.bf16.mxu0 0
        %1633 = vmatpush2.bf16.msra.mxu0 0
        %1634 = vmatprep.subr.bf16.mxu0 0
        %1635 = vmatpush2.bf16.msra.mxu0 0
        %1636 = vmatprep.mubr.bf16.mxu0 0
        %1637 = vmatmul.mubr.bf16.gmra.mxu0 %v1599
        %v1638 = vpop.f32.mrf.mxu0
        %v1639 = vadd.f32 0.0, %v1638
        %v1640 = vpop.f32.mrf.mxu0
        %v1641 = vpop.f32.mrf.mxu0
        %v1642 = vadd.f32 0.0, %v1641
        %v1643 = vpop.f32.mrf.mxu0
        %1644 = vmatprep.mubr.bf16.mxu0 0
        %1645 = vmatmul.mubr.bf16.gmra.mxu0 %v1602
        %v1646 = vpop.f32.mrf.mxu0
        %v1647 = vadd.f32 0.0, %v1646
        %v1648 = vpop.f32.mrf.mxu0
        %v1649 = vpop.f32.mrf.mxu0
        %v1650 = vadd.f32 0.0, %v1649
        %v1651 = vpop.f32.mrf.mxu0
        %1652 = vdwg.mxu0
        %v1653 = vpack.c.bf16 %v1642, %v1639
        %v1654 = vpack.c.bf16 %v1650, %v1647
        %v1659 = vunpack.c.l.b16 %v1444
        %v1660 = vunpack.c.l.b16 %v1445
        %v1661 = vunpack.c.l.b16 %v1446
        %v1662 = vunpack.c.l.b16 %v1447
        %v1663 = vpack.c.b16 %v1660, %v1659
        %v1664 = vpack.c.b16 %v1662, %v1661
        %v1668 = vsel %vm959, %v1653, 0
        %v1671 = vsel %vm959, %v1654, 0
        %1673 = vmatprep.subr.bf16.mxu0 0
        %1674 = vmatpush1.bf16.msra.mxu0 0
        %1675 = vmatprep.subr.bf16.mxu0 0
        %1676 = vmatpush1.bf16.msra.mxu0 0
        %1677 = vmatprep.subr.bf16.mxu0 0
        %1678 = vmatpush1.bf16.msra.mxu0 0
        %1679 = vmatprep.subr.bf16.mxu0 0
        %1680 = vmatpush1.bf16.msra.mxu0 0
        %1681 = vmatprep.subr.bf16.mxu0 0
        %1682 = vmatpush1.bf16.msra.mxu0 0
        %1683 = vmatprep.subr.bf16.mxu0 0
        %1684 = vmatpush1.bf16.msra.mxu0 0
        %1685 = vmatprep.subr.bf16.mxu0 0
        %1686 = vmatpush1.bf16.msra.mxu0 %v1664
        %1687 = vmatprep.subr.bf16.mxu0 0
        %1688 = vmatpush1.bf16.msra.mxu0 %v1663
        %1689 = vmatprep.subr.bf16.mxu0 0
        %1690 = vmatpush2.bf16.msra.mxu0 0
        %1691 = vmatprep.subr.bf16.mxu0 0
        %1692 = vmatpush2.bf16.msra.mxu0 0
        %1693 = vmatprep.subr.bf16.mxu0 0
        %1694 = vmatpush2.bf16.msra.mxu0 0
        %1695 = vmatprep.subr.bf16.mxu0 0
        %1696 = vmatpush2.bf16.msra.mxu0 0
        %1697 = vmatprep.subr.bf16.mxu0 0
        %1698 = vmatpush2.bf16.msra.mxu0 0
        %1699 = vmatprep.subr.bf16.mxu0 0
        %1700 = vmatpush2.bf16.msra.mxu0 0
        %1701 = vmatprep.subr.bf16.mxu0 0
        %1702 = vmatpush2.bf16.msra.mxu0 0
        %1703 = vmatprep.subr.bf16.mxu0 0
        %1704 = vmatpush2.bf16.msra.mxu0 0
        %1705 = vmatprep.mubr.bf16.mxu0 0
        %1706 = vmatmul.mubr.bf16.gmra.mxu0 %v1668
        %v1707 = vpop.f32.mrf.mxu0
        %v1708 = vadd.f32 0.0, %v1707
        %v1709 = vpop.f32.mrf.mxu0
        %v1710 = vpop.f32.mrf.mxu0
        %v1711 = vadd.f32 0.0, %v1710
        %v1712 = vpop.f32.mrf.mxu0
        %1713 = vmatprep.mubr.bf16.mxu0 0
        %1714 = vmatmul.mubr.bf16.gmra.mxu0 %v1671
        %v1715 = vpop.f32.mrf.mxu0
        %v1716 = vadd.f32 0.0, %v1715
        %v1717 = vpop.f32.mrf.mxu0
        %v1718 = vpop.f32.mrf.mxu0
        %v1719 = vadd.f32 0.0, %v1718
        %v1720 = vpop.f32.mrf.mxu0
        %1721 = vdwg.mxu0
        %v1722 = vadd.f32 %v1584, %v1708
        %v1723 = vadd.f32 %v1585, %v1711
        %v1724 = vadd.f32 %v1586, %v1716
        %v1725 = vadd.f32 %v1587, %v1719
        %v1726 = vpack.c.bf16 %v1433, %v1432
        %v1727 = vpack.c.bf16 %v1435, %v1434
        %1728 = vrot.lane.b32.xlu0 %v1458, 64
        %v1729 = vpop.permute.xlu0 %1728
        %1730 = vrot.lane.b32.xlu0 %v1459, 64
        %v1731 = vpop.permute.xlu0 %1730
        %v1735 = vsel %vm959, %v1726, 0
        %v1738 = vsel %vm959, %v1727, 0
        %1740 = vmatprep.subr.bf16.mxu0 0
        %1741 = vmatpush1.bf16.msra.mxu0 0
        %1742 = vmatprep.subr.bf16.mxu0 0
        %1743 = vmatpush1.bf16.msra.mxu0 0
        %1744 = vmatprep.subr.bf16.mxu0 0
        %1745 = vmatpush1.bf16.msra.mxu0 0
        %1746 = vmatprep.subr.bf16.mxu0 0
        %1747 = vmatpush1.bf16.msra.mxu0 0
        %1748 = vmatprep.subr.bf16.mxu0 0
        %1749 = vmatpush1.bf16.msra.mxu0 0
        %1750 = vmatprep.subr.bf16.mxu0 0
        %1751 = vmatpush1.bf16.msra.mxu0 0
        %1752 = vmatprep.subr.bf16.mxu0 0
        %1753 = vmatpush1.bf16.msra.mxu0 %v1731
        %1754 = vmatprep.subr.bf16.mxu0 0
        %1755 = vmatpush1.bf16.msra.mxu0 %v1729
        %1756 = vmatprep.subr.bf16.mxu0 0
        %1757 = vmatpush2.bf16.msra.mxu0 0
        %1758 = vmatprep.subr.bf16.mxu0 0
        %1759 = vmatpush2.bf16.msra.mxu0 0
        %1760 = vmatprep.subr.bf16.mxu0 0
        %1761 = vmatpush2.bf16.msra.mxu0 0
        %1762 = vmatprep.subr.bf16.mxu0 0
        %1763 = vmatpush2.bf16.msra.mxu0 0
        %1764 = vmatprep.subr.bf16.mxu0 0
        %1765 = vmatpush2.bf16.msra.mxu0 0
        %1766 = vmatprep.subr.bf16.mxu0 0
        %1767 = vmatpush2.bf16.msra.mxu0 0
        %1768 = vmatprep.subr.bf16.mxu0 0
        %1769 = vmatpush2.bf16.msra.mxu0 0
        %1770 = vmatprep.subr.bf16.mxu0 0
        %1771 = vmatpush2.bf16.msra.mxu0 0
        %1772 = vmatprep.mubr.bf16.mxu0 0
        %1773 = vmatmul.mubr.bf16.gmra.mxu0 %v1735
        %v1774 = vpop.f32.mrf.mxu0
        %v1775 = vadd.f32 0.0, %v1774
        %v1776 = vpop.f32.mrf.mxu0
        %v1777 = vpop.f32.mrf.mxu0
        %v1778 = vadd.f32 0.0, %v1777
        %v1779 = vpop.f32.mrf.mxu0
        %1780 = vmatprep.mubr.bf16.mxu0 0
        %1781 = vmatmul.mubr.bf16.gmra.mxu0 %v1738
        %v1782 = vpop.f32.mrf.mxu0
        %v1783 = vadd.f32 0.0, %v1782
        %v1784 = vpop.f32.mrf.mxu0
        %v1785 = vpop.f32.mrf.mxu0
        %v1786 = vadd.f32 0.0, %v1785
        %v1787 = vpop.f32.mrf.mxu0
        %1788 = vdwg.mxu0
        %v1789 = vpack.c.bf16 %v1778, %v1775
        %v1790 = vpack.c.bf16 %v1786, %v1783
        %v1795 = vunpack.c.l.b16 %v1448
        %v1796 = vunpack.c.l.b16 %v1449
        %v1797 = vunpack.c.l.b16 %v1450
        %v1798 = vunpack.c.l.b16 %v1451
        %v1799 = vpack.c.b16 %v1796, %v1795
        %v1800 = vpack.c.b16 %v1798, %v1797
        %v1804 = vsel %vm959, %v1789, 0
        %v1807 = vsel %vm959, %v1790, 0
        %1809 = vmatprep.subr.bf16.mxu0 0
        %1810 = vmatpush1.bf16.msra.mxu0 0
        %1811 = vmatprep.subr.bf16.mxu0 0
        %1812 = vmatpush1.bf16.msra.mxu0 0
        %1813 = vmatprep.subr.bf16.mxu0 0
        %1814 = vmatpush1.bf16.msra.mxu0 0
        %1815 = vmatprep.subr.bf16.mxu0 0
        %1816 = vmatpush1.bf16.msra.mxu0 0
        %1817 = vmatprep.subr.bf16.mxu0 0
        %1818 = vmatpush1.bf16.msra.mxu0 0
        %1819 = vmatprep.subr.bf16.mxu0 0
        %1820 = vmatpush1.bf16.msra.mxu0 0
        %1821 = vmatprep.subr.bf16.mxu0 0
        %1822 = vmatpush1.bf16.msra.mxu0 %v1800
        %1823 = vmatprep.subr.bf16.mxu0 0
        %1824 = vmatpush1.bf16.msra.mxu0 %v1799
        %1825 = vmatprep.subr.bf16.mxu0 0
        %1826 = vmatpush2.bf16.msra.mxu0 0
        %1827 = vmatprep.subr.bf16.mxu0 0
        %1828 = vmatpush2.bf16.msra.mxu0 0
        %1829 = vmatprep.subr.bf16.mxu0 0
        %1830 = vmatpush2.bf16.msra.mxu0 0
        %1831 = vmatprep.subr.bf16.mxu0 0
        %1832 = vmatpush2.bf16.msra.mxu0 0
        %1833 = vmatprep.subr.bf16.mxu0 0
        %1834 = vmatpush2.bf16.msra.mxu0 0
        %1835 = vmatprep.subr.bf16.mxu0 0
        %1836 = vmatpush2.bf16.msra.mxu0 0
        %1837 = vmatprep.subr.bf16.mxu0 0
        %1838 = vmatpush2.bf16.msra.mxu0 0
        %1839 = vmatprep.subr.bf16.mxu0 0
        %1840 = vmatpush2.bf16.msra.mxu0 0
        %1841 = vmatprep.mubr.bf16.mxu0 0
        %1842 = vmatmul.mubr.bf16.gmra.mxu0 %v1804
        %v1843 = vpop.f32.mrf.mxu0
        %v1844 = vadd.f32 0.0, %v1843
        %v1845 = vpop.f32.mrf.mxu0
        %v1846 = vpop.f32.mrf.mxu0
        %v1847 = vadd.f32 0.0, %v1846
        %v1848 = vpop.f32.mrf.mxu0
        %1849 = vmatprep.mubr.bf16.mxu0 0
        %1850 = vmatmul.mubr.bf16.gmra.mxu0 %v1807
        %v1851 = vpop.f32.mrf.mxu0
        %v1852 = vadd.f32 0.0, %v1851
        %v1853 = vpop.f32.mrf.mxu0
        %v1854 = vpop.f32.mrf.mxu0
        %v1855 = vadd.f32 0.0, %v1854
        %v1856 = vpop.f32.mrf.mxu0
        %1857 = vdwg.mxu0
        %v1858 = vadd.f32 %v1722, %v1844
        %v1859 = vadd.f32 %v1723, %v1847
        %v1860 = vadd.f32 %v1724, %v1852
        %v1861 = vadd.f32 %v1725, %v1855
        %v1862 = vpack.c.bf16 %v1437, %v1436
        %v1863 = vpack.c.bf16 %v1439, %v1438
        %1864 = vrot.lane.b32.xlu0 %v1458, 32
        %v1865 = vpop.permute.xlu0 %1864
        %1866 = vrot.lane.b32.xlu0 %v1459, 32
        %v1867 = vpop.permute.xlu0 %1866
        %v1871 = vsel %vm959, %v1862, 0
        %v1874 = vsel %vm959, %v1863, 0
        %1876 = vmatprep.subr.bf16.mxu0 0
        %1877 = vmatpush1.bf16.msra.mxu0 0
        %1878 = vmatprep.subr.bf16.mxu0 0
        %1879 = vmatpush1.bf16.msra.mxu0 0
        %1880 = vmatprep.subr.bf16.mxu0 0
        %1881 = vmatpush1.bf16.msra.mxu0 0
        %1882 = vmatprep.subr.bf16.mxu0 0
        %1883 = vmatpush1.bf16.msra.mxu0 0
        %1884 = vmatprep.subr.bf16.mxu0 0
        %1885 = vmatpush1.bf16.msra.mxu0 0
        %1886 = vmatprep.subr.bf16.mxu0 0
        %1887 = vmatpush1.bf16.msra.mxu0 0
        %1888 = vmatprep.subr.bf16.mxu0 0
        %1889 = vmatpush1.bf16.msra.mxu0 %v1867
        %1890 = vmatprep.subr.bf16.mxu0 0
        %1891 = vmatpush1.bf16.msra.mxu0 %v1865
        %1892 = vmatprep.subr.bf16.mxu0 0
        %1893 = vmatpush2.bf16.msra.mxu0 0
        %1894 = vmatprep.subr.bf16.mxu0 0
        %1895 = vmatpush2.bf16.msra.mxu0 0
        %1896 = vmatprep.subr.bf16.mxu0 0
        %1897 = vmatpush2.bf16.msra.mxu0 0
        %1898 = vmatprep.subr.bf16.mxu0 0
        %1899 = vmatpush2.bf16.msra.mxu0 0
        %1900 = vmatprep.subr.bf16.mxu0 0
        %1901 = vmatpush2.bf16.msra.mxu0 0
        %1902 = vmatprep.subr.bf16.mxu0 0
        %1903 = vmatpush2.bf16.msra.mxu0 0
        %1904 = vmatprep.subr.bf16.mxu0 0
        %1905 = vmatpush2.bf16.msra.mxu0 0
        %1906 = vmatprep.subr.bf16.mxu0 0
        %1907 = vmatpush2.bf16.msra.mxu0 0
        %1908 = vmatprep.mubr.bf16.mxu0 0
        %1909 = vmatmul.mubr.bf16.gmra.mxu0 %v1871
        %v1910 = vpop.f32.mrf.mxu0
        %v1911 = vadd.f32 0.0, %v1910
        %v1912 = vpop.f32.mrf.mxu0
        %v1913 = vpop.f32.mrf.mxu0
        %v1914 = vadd.f32 0.0, %v1913
        %v1915 = vpop.f32.mrf.mxu0
        %1916 = vmatprep.mubr.bf16.mxu0 0
        %1917 = vmatmul.mubr.bf16.gmra.mxu0 %v1874
        %v1918 = vpop.f32.mrf.mxu0
        %v1919 = vadd.f32 0.0, %v1918
        %v1920 = vpop.f32.mrf.mxu0
        %v1921 = vpop.f32.mrf.mxu0
        %v1922 = vadd.f32 0.0, %v1921
        %v1923 = vpop.f32.mrf.mxu0
        %1924 = vdwg.mxu0
        %v1925 = vpack.c.bf16 %v1914, %v1911
        %v1926 = vpack.c.bf16 %v1922, %v1919
        %v1931 = vunpack.c.l.b16 %v1452
        %v1932 = vunpack.c.l.b16 %v1453
        %v1933 = vunpack.c.l.b16 %v1454
        %v1934 = vunpack.c.l.b16 %v1455
        %v1935 = vpack.c.b16 %v1932, %v1931
        %v1936 = vpack.c.b16 %v1934, %v1933
        %v1940 = vsel %vm959, %v1925, 0
        %v1943 = vsel %vm959, %v1926, 0
        %1945 = vmatprep.subr.bf16.mxu0 0
        %1946 = vmatpush1.bf16.msra.mxu0 0
        %1947 = vmatprep.subr.bf16.mxu0 0
        %1948 = vmatpush1.bf16.msra.mxu0 0
        %1949 = vmatprep.subr.bf16.mxu0 0
        %1950 = vmatpush1.bf16.msra.mxu0 0
        %1951 = vmatprep.subr.bf16.mxu0 0
        %1952 = vmatpush1.bf16.msra.mxu0 0
        %1953 = vmatprep.subr.bf16.mxu0 0
        %1954 = vmatpush1.bf16.msra.mxu0 0
        %1955 = vmatprep.subr.bf16.mxu0 0
        %1956 = vmatpush1.bf16.msra.mxu0 0
        %1957 = vmatprep.subr.bf16.mxu0 0
        %1958 = vmatpush1.bf16.msra.mxu0 %v1936
        %1959 = vmatprep.subr.bf16.mxu0 0
        %1960 = vmatpush1.bf16.msra.mxu0 %v1935
        %1961 = vmatprep.subr.bf16.mxu0 0
        %1962 = vmatpush2.bf16.msra.mxu0 0
        %1963 = vmatprep.subr.bf16.mxu0 0
        %1964 = vmatpush2.bf16.msra.mxu0 0
        %1965 = vmatprep.subr.bf16.mxu0 0
        %1966 = vmatpush2.bf16.msra.mxu0 0
        %1967 = vmatprep.subr.bf16.mxu0 0
        %1968 = vmatpush2.bf16.msra.mxu0 0
        %1969 = vmatprep.subr.bf16.mxu0 0
        %1970 = vmatpush2.bf16.msra.mxu0 0
        %1971 = vmatprep.subr.bf16.mxu0 0
        %1972 = vmatpush2.bf16.msra.mxu0 0
        %1973 = vmatprep.subr.bf16.mxu0 0
        %1974 = vmatpush2.bf16.msra.mxu0 0
        %1975 = vmatprep.subr.bf16.mxu0 0
        %1976 = vmatpush2.bf16.msra.mxu0 0
        %1977 = vmatprep.mubr.bf16.mxu0 0
        %1978 = vmatmul.mubr.bf16.gmra.mxu0 %v1940
        %v1979 = vpop.f32.mrf.mxu0
        %v1980 = vadd.f32 0.0, %v1979
        %v1981 = vpop.f32.mrf.mxu0
        %v1982 = vpop.f32.mrf.mxu0
        %v1983 = vadd.f32 0.0, %v1982
        %v1984 = vpop.f32.mrf.mxu0
        %1985 = vmatprep.mubr.bf16.mxu0 0
        %1986 = vmatmul.mubr.bf16.gmra.mxu0 %v1943
        %v1987 = vpop.f32.mrf.mxu0
        %v1988 = vadd.f32 0.0, %v1987
        %v1989 = vpop.f32.mrf.mxu0
        %v1990 = vpop.f32.mrf.mxu0
        %v1991 = vadd.f32 0.0, %v1990
        %v1992 = vpop.f32.mrf.mxu0
        %1993 = vdwg.mxu0
        %v1994 = vadd.f32 %v1858, %v1980
        %v1995 = vadd.f32 %v1859, %v1983
        %v1996 = vadd.f32 %v1860, %v1988
        %v1997 = vadd.f32 %v1861, %v1991
        %v1998 = vmul.f32 %v1994, %v1994
        %v1999 = vmul.f32 %v1995, %v1995
        %v2000 = vmul.f32 %v1996, %v1996
        %v2001 = vmul.f32 %v1997, %v1997
        %2002 = vadd.xlane.f32.xlu0 %v1998
        %v2003 = vpop.xlane.xlu0 %2002
        %2004 = vadd.xlane.f32.xlu0 %v1999
        %v2005 = vpop.xlane.xlu0 %2004
        %2006 = vadd.xlane.f32.xlu0 %v2000
        %v2007 = vpop.xlane.xlu0 %2006
        %2008 = vadd.xlane.f32.xlu0 %v2001
        %v2009 = vpop.xlane.xlu0 %2008
        %v2010 = vmul.f32 %v2003, %v482
        %v2011 = vmul.f32 %v2005, %v482
        %v2012 = vmul.f32 %v2007, %v482
        %v2013 = vmul.f32 %v2009, %v482
        %v2014 = vadd.f32 %v2010, 1e-05
        %v2015 = vadd.f32 %v2011, 1e-05
        %v2016 = vadd.f32 %v2012, 1e-05
        %v2017 = vadd.f32 %v2013, 1e-05
        %v2018 = vrsqrt.pop %v2014
        %v2019 = vrsqrt.pop %v2015
        %v2020 = vrsqrt.pop %v2016
        %v2021 = vrsqrt.pop %v2017
        %v2022 = vmul.f32 %v1994, %v2018
        %v2023 = vmul.f32 %v1995, %v2019
        %v2024 = vmul.f32 %v1996, %v2020
        %v2025 = vmul.f32 %v1997, %v2021
        %v2026 = vld [vmem:[%s437] sm:$0x1]
        %v2028 = vlaneseq
        %v2029 = vshrl.u32 %v2028, 7
        %v2030 = vsub.s32 0, %v2029
        %v2031 = vrot.slane %v2026, %v2030
        %v2033 = vmul.f32 %v2022, %v2031
        %v2034 = vmul.f32 %v2023, %v2031
        %v2035 = vmul.f32 %v2024, %v2031
        %v2036 = vmul.f32 %v2025, %v2031
        %v2037 = vpack.c.bf16 %v2034, %v2033
        %v2038 = vpack.c.bf16 %v2036, %v2035
        %v2039 = vld [vmem:[%s452] sm:$0xff]
        %v2040 = vld [vmem:[%s452 + $0x8] sm:$0xff]
        %v2041 = vld [vmem:[%s452 + $0x10] sm:$0xff]
        %v2042 = vld [vmem:[%s452 + $0x18] sm:$0xff]
        %v2043 = vld [vmem:[%s452 + $0x20] sm:$0xff]
        %v2044 = vld [vmem:[%s452 + $0x28] sm:$0xff]
        %v2045 = vld [vmem:[%s452 + $0x30] sm:$0xff]
        %v2046 = vld [vmem:[%s452 + $0x38] sm:$0xff]
        %v2047 = vld [vmem:[%s452 + $0x40] sm:$0xff]
        %v2048 = vld [vmem:[%s452 + $0x48] sm:$0xff]
        %v2049 = vld [vmem:[%s452 + $0x50] sm:$0xff]
        %v2050 = vld [vmem:[%s452 + $0x58] sm:$0xff]
        %v2051 = vld [vmem:[%s452 + $0x60] sm:$0xff]
        %v2052 = vld [vmem:[%s452 + $0x68] sm:$0xff]
        %v2053 = vld [vmem:[%s452 + $0x70] sm:$0xff]
        %v2054 = vld [vmem:[%s452 + $0x78] sm:$0xff]
        %v2055 = vld [vmem:[%s452 + $0x80] sm:$0xff]
        %v2056 = vld [vmem:[%s452 + $0x88] sm:$0xff]
        %v2057 = vld [vmem:[%s452 + $0x90] sm:$0xff]
        %v2058 = vld [vmem:[%s452 + $0x98] sm:$0xff]
        %v2059 = vld [vmem:[%s452 + $0xa0] sm:$0xff]
        %v2060 = vld [vmem:[%s452 + $0xa8] sm:$0xff]
        %v2061 = vld [vmem:[%s452 + $0xb0] sm:$0xff]
        %v2062 = vld [vmem:[%s452 + $0xb8] sm:$0xff]
        %v2063 = vld [vmem:[%s452 + $0xc0] sm:$0xff]
        %v2064 = vld [vmem:[%s452 + $0xc8] sm:$0xff]
        %v2065 = vld [vmem:[%s452 + $0xd0] sm:$0xff]
        %v2066 = vld [vmem:[%s452 + $0xd8] sm:$0xff]
        %v2067 = vld [vmem:[%s452 + $0xe0] sm:$0xff]
        %v2068 = vld [vmem:[%s452 + $0xe8] sm:$0xff]
        %v2069 = vld [vmem:[%s452 + $0xf0] sm:$0xff]
        %v2070 = vld [vmem:[%s452 + $0xf8] sm:$0xff]
        %v2103 = vunpack.c.l.b16 %v2039
        %v2104 = vunpack.c.h.b16 %v2039
        %v2105 = vunpack.c.l.b16 %v2040
        %v2106 = vunpack.c.h.b16 %v2040
        %v2107 = vunpack.c.l.b16 %v2041
        %v2108 = vunpack.c.h.b16 %v2041
        %v2109 = vunpack.c.l.b16 %v2042
        %v2110 = vunpack.c.h.b16 %v2042
        %v2111 = vunpack.c.l.b16 %v2043
        %v2112 = vunpack.c.h.b16 %v2043
        %v2113 = vunpack.c.l.b16 %v2044
        %v2114 = vunpack.c.h.b16 %v2044
        %v2115 = vunpack.c.l.b16 %v2045
        %v2116 = vunpack.c.h.b16 %v2045
        %v2117 = vunpack.c.l.b16 %v2046
        %v2118 = vunpack.c.h.b16 %v2046
        %v2119 = vunpack.c.l.b16 %v2047
        %v2120 = vunpack.c.h.b16 %v2047
        %v2121 = vunpack.c.l.b16 %v2048
        %v2122 = vunpack.c.h.b16 %v2048
        %v2123 = vunpack.c.l.b16 %v2049
        %v2124 = vunpack.c.h.b16 %v2049
        %v2125 = vunpack.c.l.b16 %v2050
        %v2126 = vunpack.c.h.b16 %v2050
        %v2127 = vunpack.c.l.b16 %v2051
        %v2128 = vunpack.c.h.b16 %v2051
        %v2129 = vunpack.c.l.b16 %v2052
        %v2130 = vunpack.c.h.b16 %v2052
        %v2131 = vunpack.c.l.b16 %v2053
        %v2132 = vunpack.c.h.b16 %v2053
        %v2133 = vunpack.c.l.b16 %v2054
        %v2134 = vunpack.c.h.b16 %v2054
        %v2135 = vunpack.c.l.b16 %v2055
        %v2136 = vunpack.c.h.b16 %v2055
        %v2137 = vunpack.c.l.b16 %v2056
        %v2138 = vunpack.c.h.b16 %v2056
        %v2139 = vunpack.c.l.b16 %v2057
        %v2140 = vunpack.c.h.b16 %v2057
        %v2141 = vunpack.c.l.b16 %v2058
        %v2142 = vunpack.c.h.b16 %v2058
        %v2143 = vunpack.c.l.b16 %v2059
        %v2144 = vunpack.c.h.b16 %v2059
        %v2145 = vunpack.c.l.b16 %v2060
        %v2146 = vunpack.c.h.b16 %v2060
        %v2147 = vunpack.c.l.b16 %v2061
        %v2148 = vunpack.c.h.b16 %v2061
        %v2149 = vunpack.c.l.b16 %v2062
        %v2150 = vunpack.c.h.b16 %v2062
        %v2151 = vunpack.c.l.b16 %v2063
        %v2152 = vunpack.c.h.b16 %v2063
        %v2153 = vunpack.c.l.b16 %v2064
        %v2154 = vunpack.c.h.b16 %v2064
        %v2155 = vunpack.c.l.b16 %v2065
        %v2156 = vunpack.c.h.b16 %v2065
        %v2157 = vunpack.c.l.b16 %v2066
        %v2158 = vunpack.c.h.b16 %v2066
        %v2159 = vunpack.c.l.b16 %v2067
        %v2160 = vunpack.c.h.b16 %v2067
        %v2161 = vunpack.c.l.b16 %v2068
        %v2162 = vunpack.c.h.b16 %v2068
        %v2163 = vunpack.c.l.b16 %v2069
        %v2164 = vunpack.c.h.b16 %v2069
        %v2165 = vunpack.c.l.b16 %v2070
        %v2166 = vunpack.c.h.b16 %v2070
        %v2167 = vpack.c.b16 %v2107, %v2103
        %v2168 = vpack.c.b16 %v2108, %v2104
        %v2169 = vpack.c.b16 %v2109, %v2105
        %v2170 = vpack.c.b16 %v2110, %v2106
        %v2171 = vpack.c.b16 %v2115, %v2111
        %v2172 = vpack.c.b16 %v2116, %v2112
        %v2173 = vpack.c.b16 %v2117, %v2113
        %v2174 = vpack.c.b16 %v2118, %v2114
        %v2175 = vpack.c.b16 %v2123, %v2119
        %v2176 = vpack.c.b16 %v2124, %v2120
        %v2177 = vpack.c.b16 %v2125, %v2121
        %v2178 = vpack.c.b16 %v2126, %v2122
        %v2179 = vpack.c.b16 %v2131, %v2127
        %v2180 = vpack.c.b16 %v2132, %v2128
        %v2181 = vpack.c.b16 %v2133, %v2129
        %v2182 = vpack.c.b16 %v2134, %v2130
        %v2183 = vpack.c.b16 %v2139, %v2135
        %v2184 = vpack.c.b16 %v2140, %v2136
        %v2185 = vpack.c.b16 %v2141, %v2137
        %v2186 = vpack.c.b16 %v2142, %v2138
        %v2187 = vpack.c.b16 %v2147, %v2143
        %v2188 = vpack.c.b16 %v2148, %v2144
        %v2189 = vpack.c.b16 %v2149, %v2145
        %v2190 = vpack.c.b16 %v2150, %v2146
        %v2191 = vpack.c.b16 %v2155, %v2151
        %v2192 = vpack.c.b16 %v2156, %v2152
        %v2193 = vpack.c.b16 %v2157, %v2153
        %v2194 = vpack.c.b16 %v2158, %v2154
        %v2195 = vpack.c.b16 %v2163, %v2159
        %v2196 = vpack.c.b16 %v2164, %v2160
        %v2197 = vpack.c.b16 %v2165, %v2161
        %v2198 = vpack.c.b16 %v2166, %v2162
        %2231 = vmatprep.subr.bf16.mxu0 %v2196
        %2232 = vmatpush1.bf16.msra.mxu0 %v2195
        %2233 = vmatprep.subr.bf16.mxu0 %v2192
        %2234 = vmatpush1.bf16.msra.mxu0 %v2191
        %2235 = vmatprep.subr.bf16.mxu0 %v2188
        %2236 = vmatpush1.bf16.msra.mxu0 %v2187
        %2237 = vmatprep.subr.bf16.mxu0 %v2184
        %2238 = vmatpush1.bf16.msra.mxu0 %v2183
        %2239 = vmatprep.subr.bf16.mxu0 %v2180
        %2240 = vmatpush1.bf16.msra.mxu0 %v2179
        %2241 = vmatprep.subr.bf16.mxu0 %v2176
        %2242 = vmatpush1.bf16.msra.mxu0 %v2175
        %2243 = vmatprep.subr.bf16.mxu0 %v2172
        %2244 = vmatpush1.bf16.msra.mxu0 %v2171
        %2245 = vmatprep.subr.bf16.mxu0 %v2168
        %2246 = vmatpush1.bf16.msra.mxu0 %v2167
        %2247 = vmatprep.subr.bf16.mxu0 0
        %2248 = vmatpush2.bf16.msra.mxu0 0
        %2249 = vmatprep.subr.bf16.mxu0 0
        %2250 = vmatpush2.bf16.msra.mxu0 0
        %2251 = vmatprep.subr.bf16.mxu0 0
        %2252 = vmatpush2.bf16.msra.mxu0 0
        %2253 = vmatprep.subr.bf16.mxu0 0
        %2254 = vmatpush2.bf16.msra.mxu0 0
        %2255 = vmatprep.subr.bf16.mxu0 0
        %2256 = vmatpush2.bf16.msra.mxu0 0
        %2257 = vmatprep.subr.bf16.mxu0 0
        %2258 = vmatpush2.bf16.msra.mxu0 0
        %2259 = vmatprep.subr.bf16.mxu0 0
        %2260 = vmatpush2.bf16.msra.mxu0 0
        %2261 = vmatprep.subr.bf16.mxu0 0
        %2262 = vmatpush2.bf16.msra.mxu0 0
        %2263 = vmatprep.mubr.bf16.mxu0 0
        %2264 = vmatmul.mubr.bf16.gmra.mxu0 %v2037
        %v2265 = vpop.f32.mrf.mxu0
        %v2266 = vadd.f32 0.0, %v2265
        %v2267 = vpop.f32.mrf.mxu0
        %v2268 = vadd.f32 0.0, %v2267
        %v2269 = vpop.f32.mrf.mxu0
        %v2270 = vadd.f32 0.0, %v2269
        %v2271 = vpop.f32.mrf.mxu0
        %v2272 = vadd.f32 0.0, %v2271
        %2273 = vmatprep.mubr.bf16.mxu0 0
        %2274 = vmatmul.mubr.bf16.gmra.mxu0 %v2038
        %v2275 = vpop.f32.mrf.mxu0
        %v2276 = vadd.f32 0.0, %v2275
        %v2277 = vpop.f32.mrf.mxu0
        %v2278 = vadd.f32 0.0, %v2277
        %v2279 = vpop.f32.mrf.mxu0
        %v2280 = vadd.f32 0.0, %v2279
        %v2281 = vpop.f32.mrf.mxu0
        %v2282 = vadd.f32 0.0, %v2281
        %2283 = vdwg.mxu0
        %2284 = vmatprep.subr.bf16.mxu0 %v2198
        %2285 = vmatpush1.bf16.msra.mxu0 %v2197
        %2286 = vmatprep.subr.bf16.mxu0 %v2194
        %2287 = vmatpush1.bf16.msra.mxu0 %v2193
        %2288 = vmatprep.subr.bf16.mxu0 %v2190
        %2289 = vmatpush1.bf16.msra.mxu0 %v2189
        %2290 = vmatprep.subr.bf16.mxu0 %v2186
        %2291 = vmatpush1.bf16.msra.mxu0 %v2185
        %2292 = vmatprep.subr.bf16.mxu0 %v2182
        %2293 = vmatpush1.bf16.msra.mxu0 %v2181
        %2294 = vmatprep.subr.bf16.mxu0 %v2178
        %2295 = vmatpush1.bf16.msra.mxu0 %v2177
        %2296 = vmatprep.subr.bf16.mxu0 %v2174
        %2297 = vmatpush1.bf16.msra.mxu0 %v2173
        %2298 = vmatprep.subr.bf16.mxu0 %v2170
        %2299 = vmatpush1.bf16.msra.mxu0 %v2169
        %2300 = vmatprep.subr.bf16.mxu0 0
        %2301 = vmatpush2.bf16.msra.mxu0 0
        %2302 = vmatprep.subr.bf16.mxu0 0
        %2303 = vmatpush2.bf16.msra.mxu0 0
        %2304 = vmatprep.subr.bf16.mxu0 0
        %2305 = vmatpush2.bf16.msra.mxu0 0
        %2306 = vmatprep.subr.bf16.mxu0 0
        %2307 = vmatpush2.bf16.msra.mxu0 0
        %2308 = vmatprep.subr.bf16.mxu0 0
        %2309 = vmatpush2.bf16.msra.mxu0 0
        %2310 = vmatprep.subr.bf16.mxu0 0
        %2311 = vmatpush2.bf16.msra.mxu0 0
        %2312 = vmatprep.subr.bf16.mxu0 0
        %2313 = vmatpush2.bf16.msra.mxu0 0
        %2314 = vmatprep.subr.bf16.mxu0 0
        %2315 = vmatpush2.bf16.msra.mxu0 0
        %2316 = vmatprep.mubr.bf16.mxu0 0
        %2317 = vmatmul.mubr.bf16.gmra.mxu0 %v2037
        %v2318 = vpop.f32.mrf.mxu0
        %v2319 = vadd.f32 0.0, %v2318
        %v2320 = vpop.f32.mrf.mxu0
        %v2321 = vadd.f32 0.0, %v2320
        %v2322 = vpop.f32.mrf.mxu0
        %v2323 = vadd.f32 0.0, %v2322
        %v2324 = vpop.f32.mrf.mxu0
        %v2325 = vadd.f32 0.0, %v2324
        %2326 = vmatprep.mubr.bf16.mxu0 0
        %2327 = vmatmul.mubr.bf16.gmra.mxu0 %v2038
        %v2328 = vpop.f32.mrf.mxu0
        %v2329 = vadd.f32 0.0, %v2328
        %v2330 = vpop.f32.mrf.mxu0
        %v2331 = vadd.f32 0.0, %v2330
        %v2332 = vpop.f32.mrf.mxu0
        %v2333 = vadd.f32 0.0, %v2332
        %v2334 = vpop.f32.mrf.mxu0
        %v2335 = vadd.f32 0.0, %v2334
        %2336 = vdwg.mxu0
        %v2337 = vxor.u32 %v2266, 2147483648
        %v2338 = vxor.u32 %v2268, 2147483648
        %v2339 = vxor.u32 %v2270, 2147483648
        %v2340 = vxor.u32 %v2272, 2147483648
        %v2341 = vxor.u32 %v2276, 2147483648
        %v2342 = vxor.u32 %v2278, 2147483648
        %v2343 = vxor.u32 %v2280, 2147483648
        %v2344 = vxor.u32 %v2282, 2147483648
        %v2345 = vmul.f32 %v2337, 1.442695
        %v2346 = vpow.pop %v2345
        %v2347 = vmul.f32 %v2338, 1.442695
        %v2348 = vpow.pop %v2347
        %v2349 = vmul.f32 %v2339, 1.442695
        %v2350 = vpow.pop %v2349
        %v2351 = vmul.f32 %v2340, 1.442695
        %v2352 = vpow.pop %v2351
        %v2353 = vmul.f32 %v2341, 1.442695
        %v2354 = vpow.pop %v2353
        %v2355 = vmul.f32 %v2342, 1.442695
        %v2356 = vpow.pop %v2355
        %v2357 = vmul.f32 %v2343, 1.442695
        %v2358 = vpow.pop %v2357
        %v2359 = vmul.f32 %v2344, 1.442695
        %v2360 = vpow.pop %v2359
        %v2361 = vadd.f32 %v2346, 1.0
        %v2362 = vadd.f32 %v2348, 1.0
        %v2363 = vadd.f32 %v2350, 1.0
        %v2364 = vadd.f32 %v2352, 1.0
        %v2365 = vadd.f32 %v2354, 1.0
        %v2366 = vadd.f32 %v2356, 1.0
        %v2367 = vadd.f32 %v2358, 1.0
        %v2368 = vadd.f32 %v2360, 1.0
        %v2369 = vrcp.pop %v2361
        %v2370 = vmul.f32 1.0, %v2369
        %v2371 = vrcp.pop %v2362
        %v2372 = vmul.f32 1.0, %v2371
        %v2373 = vrcp.pop %v2363
        %v2374 = vmul.f32 1.0, %v2373
        %v2375 = vrcp.pop %v2364
        %v2376 = vmul.f32 1.0, %v2375
        %v2377 = vrcp.pop %v2365
        %v2378 = vmul.f32 1.0, %v2377
        %v2379 = vrcp.pop %v2366
        %v2380 = vmul.f32 1.0, %v2379
        %v2381 = vrcp.pop %v2367
        %v2382 = vmul.f32 1.0, %v2381
        %v2383 = vrcp.pop %v2368
        %v2384 = vmul.f32 1.0, %v2383
        %v2385 = vmul.f32 %v2266, %v2370
        %v2386 = vmul.f32 %v2268, %v2372
        %v2387 = vmul.f32 %v2270, %v2374
        %v2388 = vmul.f32 %v2272, %v2376
        %v2389 = vmul.f32 %v2276, %v2378
        %v2390 = vmul.f32 %v2278, %v2380
        %v2391 = vmul.f32 %v2280, %v2382
        %v2392 = vmul.f32 %v2282, %v2384
        %v2393 = vmul.f32 %v2385, %v2319
        %v2394 = vmul.f32 %v2386, %v2321
        %v2395 = vmul.f32 %v2387, %v2323
        %v2396 = vmul.f32 %v2388, %v2325
        %v2397 = vmul.f32 %v2389, %v2329
        %v2398 = vmul.f32 %v2390, %v2331
        %v2399 = vmul.f32 %v2391, %v2333
        %v2400 = vmul.f32 %v2392, %v2335
        %v2401 = vpack.c.bf16 %v2395, %v2393
        %v2402 = vpack.c.bf16 %v2396, %v2394
        %v2403 = vpack.c.bf16 %v2399, %v2397
        %v2404 = vpack.c.bf16 %v2400, %v2398
        %v2405 = vld [vmem:[%s379] sm:$0xf]
        %v2406 = vld [vmem:[%s379 + $0x4] sm:$0xf]
        %v2407 = vld [vmem:[%s379 + $0x8] sm:$0xf]
        %v2408 = vld [vmem:[%s379 + $0xc] sm:$0xf]
        %v2409 = vld [vmem:[%s379 + $0x10] sm:$0xf]
        %v2410 = vld [vmem:[%s379 + $0x14] sm:$0xf]
        %v2411 = vld [vmem:[%s379 + $0x18] sm:$0xf]
        %v2412 = vld [vmem:[%s379 + $0x1c] sm:$0xf]
        %v2413 = vld [vmem:[%s379 + $0x20] sm:$0xf]
        %v2414 = vld [vmem:[%s379 + $0x24] sm:$0xf]
        %v2415 = vld [vmem:[%s379 + $0x28] sm:$0xf]
        %v2416 = vld [vmem:[%s379 + $0x2c] sm:$0xf]
        %v2417 = vld [vmem:[%s379 + $0x30] sm:$0xf]
        %v2418 = vld [vmem:[%s379 + $0x34] sm:$0xf]
        %v2419 = vld [vmem:[%s379 + $0x38] sm:$0xf]
        %v2420 = vld [vmem:[%s379 + $0x3c] sm:$0xf]
        %v2421 = vld [vmem:[%s379 + $0x40] sm:$0xf]
        %v2422 = vld [vmem:[%s379 + $0x44] sm:$0xf]
        %v2423 = vld [vmem:[%s379 + $0x48] sm:$0xf]
        %v2424 = vld [vmem:[%s379 + $0x4c] sm:$0xf]
        %v2425 = vld [vmem:[%s379 + $0x50] sm:$0xf]
        %v2426 = vld [vmem:[%s379 + $0x54] sm:$0xf]
        %v2427 = vld [vmem:[%s379 + $0x58] sm:$0xf]
        %v2428 = vld [vmem:[%s379 + $0x5c] sm:$0xf]
        %v2429 = vld [vmem:[%s379 + $0x60] sm:$0xf]
        %v2430 = vld [vmem:[%s379 + $0x64] sm:$0xf]
        %v2431 = vld [vmem:[%s379 + $0x68] sm:$0xf]
        %v2432 = vld [vmem:[%s379 + $0x6c] sm:$0xf]
        %v2433 = vld [vmem:[%s379 + $0x70] sm:$0xf]
        %v2434 = vld [vmem:[%s379 + $0x74] sm:$0xf]
        %v2435 = vld [vmem:[%s379 + $0x78] sm:$0xf]
        %v2436 = vld [vmem:[%s379 + $0x7c] sm:$0xf]
        %v2469 = vunpack.c.l.b16 %v2405
        %v2470 = vunpack.c.l.b16 %v2406
        %v2471 = vunpack.c.l.b16 %v2407
        %v2472 = vunpack.c.l.b16 %v2408
        %v2473 = vunpack.c.l.b16 %v2409
        %v2474 = vunpack.c.l.b16 %v2410
        %v2475 = vunpack.c.l.b16 %v2411
        %v2476 = vunpack.c.l.b16 %v2412
        %v2477 = vunpack.c.l.b16 %v2413
        %v2478 = vunpack.c.l.b16 %v2414
        %v2479 = vunpack.c.l.b16 %v2415
        %v2480 = vunpack.c.l.b16 %v2416
        %v2481 = vunpack.c.l.b16 %v2417
        %v2482 = vunpack.c.l.b16 %v2418
        %v2483 = vunpack.c.l.b16 %v2419
        %v2484 = vunpack.c.l.b16 %v2420
        %v2485 = vunpack.c.l.b16 %v2421
        %v2486 = vunpack.c.l.b16 %v2422
        %v2487 = vunpack.c.l.b16 %v2423
        %v2488 = vunpack.c.l.b16 %v2424
        %v2489 = vunpack.c.l.b16 %v2425
        %v2490 = vunpack.c.l.b16 %v2426
        %v2491 = vunpack.c.l.b16 %v2427
        %v2492 = vunpack.c.l.b16 %v2428
        %v2493 = vunpack.c.l.b16 %v2429
        %v2494 = vunpack.c.l.b16 %v2430
        %v2495 = vunpack.c.l.b16 %v2431
        %v2496 = vunpack.c.l.b16 %v2432
        %v2497 = vunpack.c.l.b16 %v2433
        %v2498 = vunpack.c.l.b16 %v2434
        %v2499 = vunpack.c.l.b16 %v2435
        %v2500 = vunpack.c.l.b16 %v2436
        %v2501 = vpack.c.b16 %v2470, %v2469
        %v2502 = vpack.c.b16 %v2472, %v2471
        %v2503 = vpack.c.b16 %v2474, %v2473
        %v2504 = vpack.c.b16 %v2476, %v2475
        %v2505 = vpack.c.b16 %v2478, %v2477
        %v2506 = vpack.c.b16 %v2480, %v2479
        %v2507 = vpack.c.b16 %v2482, %v2481
        %v2508 = vpack.c.b16 %v2484, %v2483
        %v2509 = vpack.c.b16 %v2486, %v2485
        %v2510 = vpack.c.b16 %v2488, %v2487
        %v2511 = vpack.c.b16 %v2490, %v2489
        %v2512 = vpack.c.b16 %v2492, %v2491
        %v2513 = vpack.c.b16 %v2494, %v2493
        %v2514 = vpack.c.b16 %v2496, %v2495
        %v2515 = vpack.c.b16 %v2498, %v2497
        %v2516 = vpack.c.b16 %v2500, %v2499
        %2533 = vmatprep.subr.bf16.mxu0 0
        %2534 = vmatpush1.bf16.msra.mxu0 %v2508
        %2535 = vmatprep.subr.bf16.mxu0 0
        %2536 = vmatpush1.bf16.msra.mxu0 %v2507
        %2537 = vmatprep.subr.bf16.mxu0 0
        %2538 = vmatpush1.bf16.msra.mxu0 %v2506
        %2539 = vmatprep.subr.bf16.mxu0 0
        %2540 = vmatpush1.bf16.msra.mxu0 %v2505
        %2541 = vmatprep.subr.bf16.mxu0 0
        %2542 = vmatpush1.bf16.msra.mxu0 %v2504
        %2543 = vmatprep.subr.bf16.mxu0 0
        %2544 = vmatpush1.bf16.msra.mxu0 %v2503
        %2545 = vmatprep.subr.bf16.mxu0 0
        %2546 = vmatpush1.bf16.msra.mxu0 %v2502
        %2547 = vmatprep.subr.bf16.mxu0 0
        %2548 = vmatpush1.bf16.msra.mxu0 %v2501
        %2549 = vmatprep.subr.bf16.mxu0 0
        %2550 = vmatpush2.bf16.msra.mxu0 %v2516
        %2551 = vmatprep.subr.bf16.mxu0 0
        %2552 = vmatpush2.bf16.msra.mxu0 %v2515
        %2553 = vmatprep.subr.bf16.mxu0 0
        %2554 = vmatpush2.bf16.msra.mxu0 %v2514
        %2555 = vmatprep.subr.bf16.mxu0 0
        %2556 = vmatpush2.bf16.msra.mxu0 %v2513
        %2557 = vmatprep.subr.bf16.mxu0 0
        %2558 = vmatpush2.bf16.msra.mxu0 %v2512
        %2559 = vmatprep.subr.bf16.mxu0 0
        %2560 = vmatpush2.bf16.msra.mxu0 %v2511
        %2561 = vmatprep.subr.bf16.mxu0 0
        %2562 = vmatpush2.bf16.msra.mxu0 %v2510
        %2563 = vmatprep.subr.bf16.mxu0 0
        %2564 = vmatpush2.bf16.msra.mxu0 %v2509
        %2565 = vmatprep.mubr.bf16.mxu0 %v2402
        %2566 = vmatmul.mubr.bf16.gmra.mxu0 %v2401
        %v2567 = vpop.f32.mrf.mxu0
        %v2568 = vadd.f32 0.0, %v2567
        %v2569 = vpop.f32.mrf.mxu0
        %v2570 = vpop.f32.mrf.mxu0
        %v2571 = vadd.f32 0.0, %v2570
        %v2572 = vpop.f32.mrf.mxu0
        %2573 = vmatprep.mubr.bf16.mxu0 %v2404
        %2574 = vmatmul.mubr.bf16.gmra.mxu0 %v2403
        %v2575 = vpop.f32.mrf.mxu0
        %v2576 = vadd.f32 0.0, %v2575
        %v2577 = vpop.f32.mrf.mxu0
        %v2578 = vpop.f32.mrf.mxu0
        %v2579 = vadd.f32 0.0, %v2578
        %v2580 = vpop.f32.mrf.mxu0
        %2581 = vdwg.mxu0
        %v2582 = vadd.f32 %v1994, %v2568
        %v2583 = vadd.f32 %v1995, %v2571
        %v2584 = vadd.f32 %v1996, %v2576
        %v2585 = vadd.f32 %v1997, %v2579
        %2586 = vst [vmem:[%s10] sm:$0xff] %v2582
        %2587 = vst [vmem:[%s10 + $0x8] sm:$0xff] %v2583
        %2588 = vst [vmem:[%s10 + $0x10] sm:$0xff] %v2584
        %2589 = vst [vmem:[%s10 + $0x18] sm:$0xff] %v2585
        // Predicated region
        $region69: #{_forward_jit.1} parent=59 // pred_check
          %p2590 = pneg %p277
        $region70: #{_forward_jit.1} parent=59 // pred_check_branch
          %2592 = sbr.rel (%p2590) target = $region72
        $region71: #{_forward_jit.1} parent=59 // pred_region
          _
        $region72: #{_forward_jit.1} parent=59 // pred_fallthru
          _
        // Predicated region
        $region73: #{_forward_jit.1} parent=59 // pred_check
          %p2593 = pneg %p277
        $region74: #{_forward_jit.1} parent=59 // pred_check_branch
          %2595 = sbr.rel (%p2593) target = $region76
        $region75: #{_forward_jit.1} parent=59 // pred_region
          _
        $region76: #{_forward_jit.1} parent=59 // pred_fallthru
          _
      $region60: #{_forward_jit.1} parent=5 // pred_fallthru
        _
      %p2596 = scmp.le.s32.totalorder 2, %s19
      // Predicated region
      $region77: #{_forward_jit.1} parent=5 // pred_check
        %p2597 = pneg %p2596
      $region78: #{_forward_jit.1} parent=5 // pred_check_branch
        %2599 = sbr.rel (%p2597) target = $region80
      $region79: #{_forward_jit.1} parent=5 // pred_region
        %s2600 = ssub.s32 %s19, 2
      $region80: #{_forward_jit.1} parent=5 // pred_fallthru
        _
    $region6: #{_forward_jit.1} parent=1 // loop_footer
      %s23 = sadd.s32 1, %s19
    $region7: #{_forward_jit.1} parent=1 // loop_footer_branch
      %18 = sbr.rel target = $region3
    $region8: #{_forward_jit.1} parent=1 // loop_exit
      _
    %2601 = vsyncpa [#allocation3], 1
    %s2602 = scalar_lea.sflag [#allocation3], 1
    %2603 = vsyncpa %s2602, 1

</llo_original>
